<compile_context>
chip_gen: v6e
topology: v6e:2x2x1
jax: 0.10.0
libtpu: 0.0.40
codegen_flags: <defaults>
</compile_context>

<pallas_src>
import numpy as np

import jax
import jax.numpy as jnp
from jax.experimental import pallas as pl
from jax.experimental.pallas import tpu as pltpu


NB = 8  # images per grid step (sublane tile => free row stacking)


# ----------------------------------------------------------------------------
# Fused whole-network kernel (NB images per grid step)
# ----------------------------------------------------------------------------
def _net_kernel(x_ref, t1_ref, b1_ref, t2_ref, b2_ref,
                wf1_ref, bf1_ref, wf2_ref, bf2_ref, wf3_ref, bf3_ref,
                o_ref, s1_ref):
    f32 = jnp.float32

    # ---- conv1 (3->6, 5x5) + bias + 2x2 maxpool + ReLU --------------------
    # x_ref: (32, NB, 96) = (H, image, W*C).  For each (kernel-row ki,
    # out-row parity pr) the LHS stacks, for every pooled output row r and
    # every image n, input row (2r + pr + ki):  row index = r*NB + n.
    # t1_ref[ki]: (96, 256) with even output columns in lanes [0,84) and odd
    # output columns in lanes [128,212) -> pooling = max over aligned slices.
    for pr in range(2):                              # output-row parity
        acc = jnp.zeros((14 * NB, 256), f32)
        for ki in range(5):                          # kernel row
            rows = jnp.concatenate(
                [x_ref[ki + pr + 2 * r] for r in range(14)], axis=0)  # (112,96)
            acc = acc + jnp.dot(rows, t1_ref[ki], preferred_element_type=f32)
        m = jnp.maximum(acc[:, :84], acc[:, 128:212])       # column-parity max
        if pr == 0:
            s1_ref[...] = m                                   # stage in VMEM
        else:
            # row-parity max, per-channel bias (commutes with max), ReLU
            s1_ref[...] = jnp.maximum(
                jnp.maximum(s1_ref[...], m) + b1_ref[...], 0.0)   # (112, 84)

    # ---- conv2 (6->16, 5x5) + bias + 2x2 maxpool + ReLU -------------------
    # s1_ref rows are ordered (pooled-row r, image n) -> row r*NB + n, so the
    # rows needed for (ki, pr) are 5 contiguous, tile-aligned 8-row slabs.
    pooled2 = None
    for pr in range(2):
        acc = jnp.zeros((5 * NB, 256), f32)
        for ki in range(5):
            rows = jnp.concatenate(
                [s1_ref[(ki + pr + 2 * r) * NB:(ki + pr + 2 * r + 1) * NB, :]
                 for r in range(5)], axis=0)                  # (40, 84)
            acc = acc + jnp.dot(rows, t2_ref[ki], preferred_element_type=f32)
        m = jnp.maximum(acc[:, :80], acc[:, 128:208])
        pooled2 = m if pooled2 is None else jnp.maximum(pooled2, m)
    p2 = jnp.maximum(pooled2 + b2_ref[...], 0.0)              # (40, 80)

    # ---- fc1 (PyTorch NCHW flatten folded into wf1) + fc2 + fc3 -----------
    # p2 row h*NB + n = image n, pooled row h -> fc1 is 5 batched (8,80) dots.
    acc = jnp.zeros((NB, 120), f32)
    for h in range(5):
        acc = acc + jnp.dot(p2[h * NB:(h + 1) * NB, :], wf1_ref[h],
                            preferred_element_type=f32)
    h1 = jnp.maximum(acc + bf1_ref[...], 0.0)                 # (8, 120)
    h2 = jnp.maximum(jnp.dot(h1, wf2_ref[...], preferred_element_type=f32)
                     + bf2_ref[...], 0.0)                     # (8, 84)
    o_ref[...] = (jnp.dot(h2, wf3_ref[...], preferred_element_type=f32)
                  + bf3_ref[...])                             # (8, 10)


# ----------------------------------------------------------------------------
# Host-side weight packing (done once, outside jit)
# ----------------------------------------------------------------------------
def _conv_toeplitz_folded(w, in_w, out_w_half):
    """Pack torch-layout conv weight (OC, IC, 5, 5) into banded matmul weights.

    Returns T of shape (5, in_w*IC, 256):
      T[ki, w_in*IC + ic, pc*128 + owh*OC + oc] = w[oc, ic, ki, w_in - (2*owh + pc)]
    (zero where the kernel-column index falls outside [0, 5)), so that
      rows(H-shift ki, row-parity pr) @ T[ki]
    accumulates the conv output for both column parities (even in lanes
    [0, out_w_half*OC), odd in lanes [128, 128+out_w_half*OC)) ready for the
    2x2 max-pool via vreg-aligned lane slices.
    """
    w = np.asarray(w, np.float32)
    oc_n, ic_n, k, _ = w.shape
    li = np.arange(in_w * ic_n)
    w_in, ic = li // ic_n, li % ic_n
    lo = np.arange(out_w_half * oc_n)
    owh, oc = lo // oc_n, lo % oc_n
    T = np.zeros((k, in_w * ic_n, 256), np.float32)
    for pc in range(2):
        kj = w_in[:, None] - (2 * owh + pc)[None, :]
        valid = (kj >= 0) & (kj < k)
        kj_c = np.clip(kj, 0, k - 1)
        for ki in range(k):
            vals = w[oc[None, :], ic[:, None], ki, kj_c]
            T[ki, :, pc * 128:pc * 128 + out_w_half * oc_n] = \
                np.where(valid, vals, 0.0)
    return T


def prepare_params(params):
    """Pack PyTorch-layout params into kernel-friendly, VMEM-resident blocks."""
    f1w = np.asarray(params["fc1_w"], np.float32)     # (400, 120), f = oc*25+h*5+w
    wf1 = np.zeros((5, 80, 120), np.float32)
    l = np.arange(80)
    wcol, oc = l // 16, l % 16
    for h in range(5):
        wf1[h] = f1w[oc * 25 + h * 5 + wcol, :]

    return {
        "t1": jnp.asarray(_conv_toeplitz_folded(params["conv1_w"], in_w=32,
                                                out_w_half=14)),   # (5,96,256)
        "b1": jnp.asarray(np.tile(np.asarray(params["conv1_b"], np.float32),
                                  14).reshape(1, 84)),
        "t2": jnp.asarray(_conv_toeplitz_folded(params["conv2_w"], in_w=14,
                                                out_w_half=5)),    # (5,84,256)
        "b2": jnp.asarray(np.tile(np.asarray(params["conv2_b"], np.float32),
                                  5).reshape(1, 80)),
        "wf1": jnp.asarray(wf1),                                    # (5,80,120)
        "bf1": jnp.asarray(params["fc1_b"]).reshape(1, 120),
        "wf2": jnp.asarray(params["fc2_w"]),                        # (120,84)
        "bf2": jnp.asarray(params["fc2_b"]).reshape(1, 84),
        "wf3": jnp.asarray(params["fc3_w"]),                        # (84,10)
        "bf3": jnp.asarray(params["fc3_b"]).reshape(1, 10),
    }


# ----------------------------------------------------------------------------
# Forward pass (single pallas_call for the whole network)
# ----------------------------------------------------------------------------
@jax.jit
def net_forward(packed, x):
    # x: (B, 3, 32, 32) NCHW f32 -> (B_tiles, H, NB, W*C) lane-dense layout,
    # one contiguous (32, NB, 96) slab per grid step.
    B = x.shape[0]
    B_pad = ((B + NB - 1) // NB) * NB
    xp = jnp.transpose(x, (0, 2, 3, 1)).astype(jnp.float32)      # (B, H, W, C)
    xp = jnp.pad(xp, ((0, B_pad - B), (0, 0), (0, 0), (0, 0)))
    x4 = xp.reshape(B_pad // NB, NB, 32, 96).transpose(0, 2, 1, 3)  # (Bt,32,NB,96)

    const2 = lambda b: (0, 0)
    const3 = lambda b: (0, 0, 0)

    out = pl.pallas_call(
        _net_kernel,
        out_shape=jax.ShapeDtypeStruct((B_pad, 10), jnp.float32),
        grid=(B_pad // NB,),
        in_specs=[
            pl.BlockSpec((None, 32, NB, 96), lambda b: (b, 0, 0, 0)),  # images
            pl.BlockSpec((5, 96, 256), const3),                        # t1
            pl.BlockSpec((1, 84), const2),                             # b1
            pl.BlockSpec((5, 84, 256), const3),                        # t2
            pl.BlockSpec((1, 80), const2),                             # b2
            pl.BlockSpec((5, 80, 120), const3),                        # wf1
            pl.BlockSpec((1, 120), const2),                            # bf1
            pl.BlockSpec((120, 84), const2),                           # wf2
            pl.BlockSpec((1, 84), const2),                             # bf2
            pl.BlockSpec((84, 10), const2),                            # wf3
            pl.BlockSpec((1, 10), const2),                             # bf3
        ],
        out_specs=pl.BlockSpec((NB, 10), lambda b: (b, 0)),
        scratch_shapes=[pltpu.VMEM((14 * NB, 84), jnp.float32)],       # pooled conv1
        compiler_params=pltpu.CompilerParams(
            dimension_semantics=("parallel",)),                        # megacore
    )(x4, packed["t1"], packed["b1"], packed["t2"], packed["b2"],
      packed["wf1"], packed["bf1"], packed["wf2"], packed["bf2"],
      packed["wf3"], packed["bf3"])
    return out[:B]


# ----------------------------------------------------------------------------
# Pure-JAX reference (mirrors PyTorch Net.forward) for a correctness check
# ----------------------------------------------------------------------------
def net_reference(params, x):
    hp = jax.lax.Precision.HIGHEST
    y = jax.lax.conv_general_dilated(
        x, params["conv1_w"], (1, 1), "VALID",
        dimension_numbers=("NCHW", "OIHW", "NCHW"), precision=hp)
    y = jax.nn.relu(y + params["conv1_b"][None, :, None, None])
    B, C, H, W = y.shape
    y = y.reshape(B, C, H // 2, 2, W // 2, 2).max(axis=(3, 5))
    y = jax.lax.conv_general_dilated(
        y, params["conv2_w"], (1, 1), "VALID",
        dimension_numbers=("NCHW", "OIHW", "NCHW"), precision=hp)
    y = jax.nn.relu(y + params["conv2_b"][None, :, None, None])
    B, C, H, W = y.shape
    y = y.reshape(B, C, H // 2, 2, W // 2, 2).max(axis=(3, 5))
    y = y.reshape(B, 400)
    y = jax.nn.relu(jnp.dot(y, params["fc1_w"], precision=hp) + params["fc1_b"])
    y = jax.nn.relu(jnp.dot(y, params["fc2_w"], precision=hp) + params["fc2_b"])
    return jnp.dot(y, params["fc3_w"], precision=hp) + params["fc3_b"]


# ----------------------------------------------------------------------------
# Parameter init (deterministic, synthetic, PyTorch layouts)
# ----------------------------------------------------------------------------
def init_params(key):
    ks = jax.random.split(key, 10)

    def w(k, shape, fan_in):
        return jax.random.normal(k, shape, jnp.float32) / jnp.sqrt(fan_in)

    return {
        "conv1_w": w(ks[0], (6, 3, 5, 5), 3 * 5 * 5),
        "conv1_b": w(ks[1], (6,), 3 * 5 * 5),
        "conv2_w": w(ks[2], (16, 6, 5, 5), 6 * 5 * 5),
        "conv2_b": w(ks[3], (16,), 6 * 5 * 5),
        "fc1_w": w(ks[4], (400, 120), 400),
        "fc1_b": w(ks[5], (120,), 400),
        "fc2_w": w(ks[6], (120, 84), 120),
        "fc2_b": w(ks[7], (84,), 120),
        "fc3_w": w(ks[8], (84, 10), 84),
        "fc3_b": w(ks[9], (10,), 84),
    }


if __name__ == "__main__":
    key = jax.random.PRNGKey(0)
    k_params, k_x = jax.random.split(key)
    params = init_params(k_params)
    packed = prepare_params(params)

    # Conv arithmetic (32 -> 28 -> 14 -> 10 -> 5) requires 32x32 spatial input.
    x = jax.random.normal(k_x, (2, 3, 32, 32), jnp.float32)

    out = net_forward(packed, x)
    jax.block_until_ready(out)
    assert out.shape == (2, 10), out.shape

    ref = net_reference(params, x)
    err = float(jnp.max(jnp.abs(out - ref)))
    assert err < 3e-2, f"mismatch vs reference: max abs err = {err}"

    print("KERNEL_OK")
</pallas_src>

<mosaic_0001>
module attributes {stable_mosaic.version = 11 : i64} {
  func.func @_net_kernel(%arg0: i32, %arg1: memref<1x32x8x96xf32, #tpu.memory_space<vmem>>, %arg2: memref<5x96x256xf32, #tpu.memory_space<vmem>>, %arg3: memref<1x84xf32, #tpu.memory_space<vmem>>, %arg4: memref<5x84x256xf32, #tpu.memory_space<vmem>>, %arg5: memref<1x80xf32, #tpu.memory_space<vmem>>, %arg6: memref<5x80x120xf32, #tpu.memory_space<vmem>>, %arg7: memref<1x120xf32, #tpu.memory_space<vmem>>, %arg8: memref<120x84xf32, #tpu.memory_space<vmem>>, %arg9: memref<1x84xf32, #tpu.memory_space<vmem>>, %arg10: memref<84x10xf32, #tpu.memory_space<vmem>>, %arg11: memref<1x10xf32, #tpu.memory_space<vmem>>, %arg12: memref<8x10xf32, #tpu.memory_space<vmem>>, %arg13: memref<112x84xf32, #tpu.memory_space<vmem>>) attributes {dimension_semantics = [#tpu.dimension_semantics<parallel>], iteration_bounds = array<i64: 1>, scalar_prefetch = 0 : i64, scratch_operands = 1 : i64, tpu.core_type = #tpu.core_type<tc>, window_params = [{transform_indices = @transform_0, window_bounds = array<i64: 1, 32, 8, 96>}, {pipeline_mode = #tpu.pipeline_mode<synchronous>, transform_indices = @transform_1, window_bounds = array<i64: 5, 96, 256>}, {pipeline_mode = #tpu.pipeline_mode<synchronous>, transform_indices = @transform_2, window_bounds = array<i64: 1, 84>}, {pipeline_mode = #tpu.pipeline_mode<synchronous>, transform_indices = @transform_3, window_bounds = array<i64: 5, 84, 256>}, {pipeline_mode = #tpu.pipeline_mode<synchronous>, transform_indices = @transform_4, window_bounds = array<i64: 1, 80>}, {pipeline_mode = #tpu.pipeline_mode<synchronous>, transform_indices = @transform_5, window_bounds = array<i64: 5, 80, 120>}, {pipeline_mode = #tpu.pipeline_mode<synchronous>, transform_indices = @transform_6, window_bounds = array<i64: 1, 120>}, {pipeline_mode = #tpu.pipeline_mode<synchronous>, transform_indices = @transform_7, window_bounds = array<i64: 120, 84>}, {pipeline_mode = #tpu.pipeline_mode<synchronous>, transform_indices = @transform_8, window_bounds = array<i64: 1, 84>}, {pipeline_mode = #tpu.pipeline_mode<synchronous>, transform_indices = @transform_9, window_bounds = array<i64: 84, 10>}, {pipeline_mode = #tpu.pipeline_mode<synchronous>, transform_indices = @transform_10, window_bounds = array<i64: 1, 10>}, {transform_indices = @transform_11, window_bounds = array<i64: 8, 10>}]} {
    %cst = arith.constant 0.000000e+00 : f32
    %0 = vector.broadcast %cst : f32 to vector<112x256xf32>
    %c0 = arith.constant 0 : index
    %c0_0 = arith.constant 0 : index
    %c0_1 = arith.constant 0 : index
    %c0_2 = arith.constant 0 : index
    %1 = vector.load %arg1[%c0, %c0_0, %c0_1, %c0_2] : memref<1x32x8x96xf32, #tpu.memory_space<vmem>>, vector<1x1x8x96xf32>
    %2 = vector.shape_cast %1 : vector<1x1x8x96xf32> to vector<8x96xf32>
    %c0_3 = arith.constant 0 : index
    %c2 = arith.constant 2 : index
    %c0_4 = arith.constant 0 : index
    %c0_5 = arith.constant 0 : index
    %3 = vector.load %arg1[%c0_3, %c2, %c0_4, %c0_5] : memref<1x32x8x96xf32, #tpu.memory_space<vmem>>, vector<1x1x8x96xf32>
    %4 = vector.shape_cast %3 : vector<1x1x8x96xf32> to vector<8x96xf32>
    %c0_6 = arith.constant 0 : index
    %c4 = arith.constant 4 : index
    %c0_7 = arith.constant 0 : index
    %c0_8 = arith.constant 0 : index
    %5 = vector.load %arg1[%c0_6, %c4, %c0_7, %c0_8] : memref<1x32x8x96xf32, #tpu.memory_space<vmem>>, vector<1x1x8x96xf32>
    %6 = vector.shape_cast %5 : vector<1x1x8x96xf32> to vector<8x96xf32>
    %c0_9 = arith.constant 0 : index
    %c6 = arith.constant 6 : index
    %c0_10 = arith.constant 0 : index
    %c0_11 = arith.constant 0 : index
    %7 = vector.load %arg1[%c0_9, %c6, %c0_10, %c0_11] : memref<1x32x8x96xf32, #tpu.memory_space<vmem>>, vector<1x1x8x96xf32>
    %8 = vector.shape_cast %7 : vector<1x1x8x96xf32> to vector<8x96xf32>
    %c0_12 = arith.constant 0 : index
    %c8 = arith.constant 8 : index
    %c0_13 = arith.constant 0 : index
    %c0_14 = arith.constant 0 : index
    %9 = vector.load %arg1[%c0_12, %c8, %c0_13, %c0_14] : memref<1x32x8x96xf32, #tpu.memory_space<vmem>>, vector<1x1x8x96xf32>
    %10 = vector.shape_cast %9 : vector<1x1x8x96xf32> to vector<8x96xf32>
    %c0_15 = arith.constant 0 : index
    %c10 = arith.constant 10 : index
    %c0_16 = arith.constant 0 : index
    %c0_17 = arith.constant 0 : index
    %11 = vector.load %arg1[%c0_15, %c10, %c0_16, %c0_17] : memref<1x32x8x96xf32, #tpu.memory_space<vmem>>, vector<1x1x8x96xf32>
    %12 = vector.shape_cast %11 : vector<1x1x8x96xf32> to vector<8x96xf32>
    %c0_18 = arith.constant 0 : index
    %c12 = arith.constant 12 : index
    %c0_19 = arith.constant 0 : index
    %c0_20 = arith.constant 0 : index
    %13 = vector.load %arg1[%c0_18, %c12, %c0_19, %c0_20] : memref<1x32x8x96xf32, #tpu.memory_space<vmem>>, vector<1x1x8x96xf32>
    %14 = vector.shape_cast %13 : vector<1x1x8x96xf32> to vector<8x96xf32>
    %c0_21 = arith.constant 0 : index
    %c14 = arith.constant 14 : index
    %c0_22 = arith.constant 0 : index
    %c0_23 = arith.constant 0 : index
    %15 = vector.load %arg1[%c0_21, %c14, %c0_22, %c0_23] : memref<1x32x8x96xf32, #tpu.memory_space<vmem>>, vector<1x1x8x96xf32>
    %16 = vector.shape_cast %15 : vector<1x1x8x96xf32> to vector<8x96xf32>
    %c0_24 = arith.constant 0 : index
    %c16 = arith.constant 16 : index
    %c0_25 = arith.constant 0 : index
    %c0_26 = arith.constant 0 : index
    %17 = vector.load %arg1[%c0_24, %c16, %c0_25, %c0_26] : memref<1x32x8x96xf32, #tpu.memory_space<vmem>>, vector<1x1x8x96xf32>
    %18 = vector.shape_cast %17 : vector<1x1x8x96xf32> to vector<8x96xf32>
    %c0_27 = arith.constant 0 : index
    %c18 = arith.constant 18 : index
    %c0_28 = arith.constant 0 : index
    %c0_29 = arith.constant 0 : index
    %19 = vector.load %arg1[%c0_27, %c18, %c0_28, %c0_29] : memref<1x32x8x96xf32, #tpu.memory_space<vmem>>, vector<1x1x8x96xf32>
    %20 = vector.shape_cast %19 : vector<1x1x8x96xf32> to vector<8x96xf32>
    %c0_30 = arith.constant 0 : index
    %c20 = arith.constant 20 : index
    %c0_31 = arith.constant 0 : index
    %c0_32 = arith.constant 0 : index
    %21 = vector.load %arg1[%c0_30, %c20, %c0_31, %c0_32] : memref<1x32x8x96xf32, #tpu.memory_space<vmem>>, vector<1x1x8x96xf32>
    %22 = vector.shape_cast %21 : vector<1x1x8x96xf32> to vector<8x96xf32>
    %c0_33 = arith.constant 0 : index
    %c22 = arith.constant 22 : index
    %c0_34 = arith.constant 0 : index
    %c0_35 = arith.constant 0 : index
    %23 = vector.load %arg1[%c0_33, %c22, %c0_34, %c0_35] : memref<1x32x8x96xf32, #tpu.memory_space<vmem>>, vector<1x1x8x96xf32>
    %24 = vector.shape_cast %23 : vector<1x1x8x96xf32> to vector<8x96xf32>
    %c0_36 = arith.constant 0 : index
    %c24 = arith.constant 24 : index
    %c0_37 = arith.constant 0 : index
    %c0_38 = arith.constant 0 : index
    %25 = vector.load %arg1[%c0_36, %c24, %c0_37, %c0_38] : memref<1x32x8x96xf32, #tpu.memory_space<vmem>>, vector<1x1x8x96xf32>
    %26 = vector.shape_cast %25 : vector<1x1x8x96xf32> to vector<8x96xf32>
    %c0_39 = arith.constant 0 : index
    %c26 = arith.constant 26 : index
    %c0_40 = arith.constant 0 : index
    %c0_41 = arith.constant 0 : index
    %27 = vector.load %arg1[%c0_39, %c26, %c0_40, %c0_41] : memref<1x32x8x96xf32, #tpu.memory_space<vmem>>, vector<1x1x8x96xf32>
    %28 = vector.shape_cast %27 : vector<1x1x8x96xf32> to vector<8x96xf32>
    %29 = tpu.concatenate %2, %4, %6, %8, %10, %12, %14, %16, %18, %20, %22, %24, %26, %28 in 0 : vector<8x96xf32>, vector<8x96xf32>, vector<8x96xf32>, vector<8x96xf32>, vector<8x96xf32>, vector<8x96xf32>, vector<8x96xf32>, vector<8x96xf32>, vector<8x96xf32>, vector<8x96xf32>, vector<8x96xf32>, vector<8x96xf32>, vector<8x96xf32>, vector<8x96xf32> -> vector<112x96xf32>
    %c0_42 = arith.constant 0 : index
    %c0_43 = arith.constant 0 : index
    %c0_44 = arith.constant 0 : index
    %30 = vector.load %arg2[%c0_42, %c0_43, %c0_44] : memref<5x96x256xf32, #tpu.memory_space<vmem>>, vector<1x96x256xf32>
    %31 = vector.shape_cast %30 : vector<1x96x256xf32> to vector<96x256xf32>
    %cst_45 = arith.constant dense<0.000000e+00> : vector<112x256xf32>
    %32 = tpu.matmul %29, %31, %cst_45 {dimension_numbers = #tpu.dot_dimension_numbers<[1], [0], [0], [1], [0, 0, 1, 1], [], []>} : vector<112x96xf32>, vector<96x256xf32>, vector<112x256xf32> -> vector<112x256xf32>
    %33 = arith.addf %0, %32 : vector<112x256xf32>
    %c0_46 = arith.constant 0 : index
    %c1 = arith.constant 1 : index
    %c0_47 = arith.constant 0 : index
    %c0_48 = arith.constant 0 : index
    %34 = vector.load %arg1[%c0_46, %c1, %c0_47, %c0_48] : memref<1x32x8x96xf32, #tpu.memory_space<vmem>>, vector<1x1x8x96xf32>
    %35 = vector.shape_cast %34 : vector<1x1x8x96xf32> to vector<8x96xf32>
    %c0_49 = arith.constant 0 : index
    %c3 = arith.constant 3 : index
    %c0_50 = arith.constant 0 : index
    %c0_51 = arith.constant 0 : index
    %36 = vector.load %arg1[%c0_49, %c3, %c0_50, %c0_51] : memref<1x32x8x96xf32, #tpu.memory_space<vmem>>, vector<1x1x8x96xf32>
    %37 = vector.shape_cast %36 : vector<1x1x8x96xf32> to vector<8x96xf32>
    %c0_52 = arith.constant 0 : index
    %c5 = arith.constant 5 : index
    %c0_53 = arith.constant 0 : index
    %c0_54 = arith.constant 0 : index
    %38 = vector.load %arg1[%c0_52, %c5, %c0_53, %c0_54] : memref<1x32x8x96xf32, #tpu.memory_space<vmem>>, vector<1x1x8x96xf32>
    %39 = vector.shape_cast %38 : vector<1x1x8x96xf32> to vector<8x96xf32>
    %c0_55 = arith.constant 0 : index
    %c7 = arith.constant 7 : index
    %c0_56 = arith.constant 0 : index
    %c0_57 = arith.constant 0 : index
    %40 = vector.load %arg1[%c0_55, %c7, %c0_56, %c0_57] : memref<1x32x8x96xf32, #tpu.memory_space<vmem>>, vector<1x1x8x96xf32>
    %41 = vector.shape_cast %40 : vector<1x1x8x96xf32> to vector<8x96xf32>
    %c0_58 = arith.constant 0 : index
    %c9 = arith.constant 9 : index
    %c0_59 = arith.constant 0 : index
    %c0_60 = arith.constant 0 : index
    %42 = vector.load %arg1[%c0_58, %c9, %c0_59, %c0_60] : memref<1x32x8x96xf32, #tpu.memory_space<vmem>>, vector<1x1x8x96xf32>
    %43 = vector.shape_cast %42 : vector<1x1x8x96xf32> to vector<8x96xf32>
    %c0_61 = arith.constant 0 : index
    %c11 = arith.constant 11 : index
    %c0_62 = arith.constant 0 : index
    %c0_63 = arith.constant 0 : index
    %44 = vector.load %arg1[%c0_61, %c11, %c0_62, %c0_63] : memref<1x32x8x96xf32, #tpu.memory_space<vmem>>, vector<1x1x8x96xf32>
    %45 = vector.shape_cast %44 : vector<1x1x8x96xf32> to vector<8x96xf32>
    %c0_64 = arith.constant 0 : index
    %c13 = arith.constant 13 : index
    %c0_65 = arith.constant 0 : index
    %c0_66 = arith.constant 0 : index
    %46 = vector.load %arg1[%c0_64, %c13, %c0_65, %c0_66] : memref<1x32x8x96xf32, #tpu.memory_space<vmem>>, vector<1x1x8x96xf32>
    %47 = vector.shape_cast %46 : vector<1x1x8x96xf32> to vector<8x96xf32>
    %c0_67 = arith.constant 0 : index
    %c15 = arith.constant 15 : index
    %c0_68 = arith.constant 0 : index
    %c0_69 = arith.constant 0 : index
    %48 = vector.load %arg1[%c0_67, %c15, %c0_68, %c0_69] : memref<1x32x8x96xf32, #tpu.memory_space<vmem>>, vector<1x1x8x96xf32>
    %49 = vector.shape_cast %48 : vector<1x1x8x96xf32> to vector<8x96xf32>
    %c0_70 = arith.constant 0 : index
    %c17 = arith.constant 17 : index
    %c0_71 = arith.constant 0 : index
    %c0_72 = arith.constant 0 : index
    %50 = vector.load %arg1[%c0_70, %c17, %c0_71, %c0_72] : memref<1x32x8x96xf32, #tpu.memory_space<vmem>>, vector<1x1x8x96xf32>
    %51 = vector.shape_cast %50 : vector<1x1x8x96xf32> to vector<8x96xf32>
    %c0_73 = arith.constant 0 : index
    %c19 = arith.constant 19 : index
    %c0_74 = arith.constant 0 : index
    %c0_75 = arith.constant 0 : index
    %52 = vector.load %arg1[%c0_73, %c19, %c0_74, %c0_75] : memref<1x32x8x96xf32, #tpu.memory_space<vmem>>, vector<1x1x8x96xf32>
    %53 = vector.shape_cast %52 : vector<1x1x8x96xf32> to vector<8x96xf32>
    %c0_76 = arith.constant 0 : index
    %c21 = arith.constant 21 : index
    %c0_77 = arith.constant 0 : index
    %c0_78 = arith.constant 0 : index
    %54 = vector.load %arg1[%c0_76, %c21, %c0_77, %c0_78] : memref<1x32x8x96xf32, #tpu.memory_space<vmem>>, vector<1x1x8x96xf32>
    %55 = vector.shape_cast %54 : vector<1x1x8x96xf32> to vector<8x96xf32>
    %c0_79 = arith.constant 0 : index
    %c23 = arith.constant 23 : index
    %c0_80 = arith.constant 0 : index
    %c0_81 = arith.constant 0 : index
    %56 = vector.load %arg1[%c0_79, %c23, %c0_80, %c0_81] : memref<1x32x8x96xf32, #tpu.memory_space<vmem>>, vector<1x1x8x96xf32>
    %57 = vector.shape_cast %56 : vector<1x1x8x96xf32> to vector<8x96xf32>
    %c0_82 = arith.constant 0 : index
    %c25 = arith.constant 25 : index
    %c0_83 = arith.constant 0 : index
    %c0_84 = arith.constant 0 : index
    %58 = vector.load %arg1[%c0_82, %c25, %c0_83, %c0_84] : memref<1x32x8x96xf32, #tpu.memory_space<vmem>>, vector<1x1x8x96xf32>
    %59 = vector.shape_cast %58 : vector<1x1x8x96xf32> to vector<8x96xf32>
    %c0_85 = arith.constant 0 : index
    %c27 = arith.constant 27 : index
    %c0_86 = arith.constant 0 : index
    %c0_87 = arith.constant 0 : index
    %60 = vector.load %arg1[%c0_85, %c27, %c0_86, %c0_87] : memref<1x32x8x96xf32, #tpu.memory_space<vmem>>, vector<1x1x8x96xf32>
    %61 = vector.shape_cast %60 : vector<1x1x8x96xf32> to vector<8x96xf32>
    %62 = tpu.concatenate %35, %37, %39, %41, %43, %45, %47, %49, %51, %53, %55, %57, %59, %61 in 0 : vector<8x96xf32>, vector<8x96xf32>, vector<8x96xf32>, vector<8x96xf32>, vector<8x96xf32>, vector<8x96xf32>, vector<8x96xf32>, vector<8x96xf32>, vector<8x96xf32>, vector<8x96xf32>, vector<8x96xf32>, vector<8x96xf32>, vector<8x96xf32>, vector<8x96xf32> -> vector<112x96xf32>
    %c1_88 = arith.constant 1 : index
    %c0_89 = arith.constant 0 : index
    %c0_90 = arith.constant 0 : index
    %63 = vector.load %arg2[%c1_88, %c0_89, %c0_90] : memref<5x96x256xf32, #tpu.memory_space<vmem>>, vector<1x96x256xf32>
    %64 = vector.shape_cast %63 : vector<1x96x256xf32> to vector<96x256xf32>
    %cst_91 = arith.constant dense<0.000000e+00> : vector<112x256xf32>
    %65 = tpu.matmul %62, %64, %cst_91 {dimension_numbers = #tpu.dot_dimension_numbers<[1], [0], [0], [1], [0, 0, 1, 1], [], []>} : vector<112x96xf32>, vector<96x256xf32>, vector<112x256xf32> -> vector<112x256xf32>
    %66 = arith.addf %33, %65 : vector<112x256xf32>
    %c0_92 = arith.constant 0 : index
    %c2_93 = arith.constant 2 : index
    %c0_94 = arith.constant 0 : index
    %c0_95 = arith.constant 0 : index
    %67 = vector.load %arg1[%c0_92, %c2_93, %c0_94, %c0_95] : memref<1x32x8x96xf32, #tpu.memory_space<vmem>>, vector<1x1x8x96xf32>
    %68 = vector.shape_cast %67 : vector<1x1x8x96xf32> to vector<8x96xf32>
    %c0_96 = arith.constant 0 : index
    %c4_97 = arith.constant 4 : index
    %c0_98 = arith.constant 0 : index
    %c0_99 = arith.constant 0 : index
    %69 = vector.load %arg1[%c0_96, %c4_97, %c0_98, %c0_99] : memref<1x32x8x96xf32, #tpu.memory_space<vmem>>, vector<1x1x8x96xf32>
    %70 = vector.shape_cast %69 : vector<1x1x8x96xf32> to vector<8x96xf32>
    %c0_100 = arith.constant 0 : index
    %c6_101 = arith.constant 6 : index
    %c0_102 = arith.constant 0 : index
    %c0_103 = arith.constant 0 : index
    %71 = vector.load %arg1[%c0_100, %c6_101, %c0_102, %c0_103] : memref<1x32x8x96xf32, #tpu.memory_space<vmem>>, vector<1x1x8x96xf32>
    %72 = vector.shape_cast %71 : vector<1x1x8x96xf32> to vector<8x96xf32>
    %c0_104 = arith.constant 0 : index
    %c8_105 = arith.constant 8 : index
    %c0_106 = arith.constant 0 : index
    %c0_107 = arith.constant 0 : index
    %73 = vector.load %arg1[%c0_104, %c8_105, %c0_106, %c0_107] : memref<1x32x8x96xf32, #tpu.memory_space<vmem>>, vector<1x1x8x96xf32>
    %74 = vector.shape_cast %73 : vector<1x1x8x96xf32> to vector<8x96xf32>
    %c0_108 = arith.constant 0 : index
    %c10_109 = arith.constant 10 : index
    %c0_110 = arith.constant 0 : index
    %c0_111 = arith.constant 0 : index
    %75 = vector.load %arg1[%c0_108, %c10_109, %c0_110, %c0_111] : memref<1x32x8x96xf32, #tpu.memory_space<vmem>>, vector<1x1x8x96xf32>
    %76 = vector.shape_cast %75 : vector<1x1x8x96xf32> to vector<8x96xf32>
    %c0_112 = arith.constant 0 : index
    %c12_113 = arith.constant 12 : index
    %c0_114 = arith.constant 0 : index
    %c0_115 = arith.constant 0 : index
    %77 = vector.load %arg1[%c0_112, %c12_113, %c0_114, %c0_115] : memref<1x32x8x96xf32, #tpu.memory_space<vmem>>, vector<1x1x8x96xf32>
    %78 = vector.shape_cast %77 : vector<1x1x8x96xf32> to vector<8x96xf32>
    %c0_116 = arith.constant 0 : index
    %c14_117 = arith.constant 14 : index
    %c0_118 = arith.constant 0 : index
    %c0_119 = arith.constant 0 : index
    %79 = vector.load %arg1[%c0_116, %c14_117, %c0_118, %c0_119] : memref<1x32x8x96xf32, #tpu.memory_space<vmem>>, vector<1x1x8x96xf32>
    %80 = vector.shape_cast %79 : vector<1x1x8x96xf32> to vector<8x96xf32>
    %c0_120 = arith.constant 0 : index
    %c16_121 = arith.constant 16 : index
    %c0_122 = arith.constant 0 : index
    %c0_123 = arith.constant 0 : index
    %81 = vector.load %arg1[%c0_120, %c16_121, %c0_122, %c0_123] : memref<1x32x8x96xf32, #tpu.memory_space<vmem>>, vector<1x1x8x96xf32>
    %82 = vector.shape_cast %81 : vector<1x1x8x96xf32> to vector<8x96xf32>
    %c0_124 = arith.constant 0 : index
    %c18_125 = arith.constant 18 : index
    %c0_126 = arith.constant 0 : index
    %c0_127 = arith.constant 0 : index
    %83 = vector.load %arg1[%c0_124, %c18_125, %c0_126, %c0_127] : memref<1x32x8x96xf32, #tpu.memory_space<vmem>>, vector<1x1x8x96xf32>
    %84 = vector.shape_cast %83 : vector<1x1x8x96xf32> to vector<8x96xf32>
    %c0_128 = arith.constant 0 : index
    %c20_129 = arith.constant 20 : index
    %c0_130 = arith.constant 0 : index
    %c0_131 = arith.constant 0 : index
    %85 = vector.load %arg1[%c0_128, %c20_129, %c0_130, %c0_131] : memref<1x32x8x96xf32, #tpu.memory_space<vmem>>, vector<1x1x8x96xf32>
    %86 = vector.shape_cast %85 : vector<1x1x8x96xf32> to vector<8x96xf32>
    %c0_132 = arith.constant 0 : index
    %c22_133 = arith.constant 22 : index
    %c0_134 = arith.constant 0 : index
    %c0_135 = arith.constant 0 : index
    %87 = vector.load %arg1[%c0_132, %c22_133, %c0_134, %c0_135] : memref<1x32x8x96xf32, #tpu.memory_space<vmem>>, vector<1x1x8x96xf32>
    %88 = vector.shape_cast %87 : vector<1x1x8x96xf32> to vector<8x96xf32>
    %c0_136 = arith.constant 0 : index
    %c24_137 = arith.constant 24 : index
    %c0_138 = arith.constant 0 : index
    %c0_139 = arith.constant 0 : index
    %89 = vector.load %arg1[%c0_136, %c24_137, %c0_138, %c0_139] : memref<1x32x8x96xf32, #tpu.memory_space<vmem>>, vector<1x1x8x96xf32>
    %90 = vector.shape_cast %89 : vector<1x1x8x96xf32> to vector<8x96xf32>
    %c0_140 = arith.constant 0 : index
    %c26_141 = arith.constant 26 : index
    %c0_142 = arith.constant 0 : index
    %c0_143 = arith.constant 0 : index
    %91 = vector.load %arg1[%c0_140, %c26_141, %c0_142, %c0_143] : memref<1x32x8x96xf32, #tpu.memory_space<vmem>>, vector<1x1x8x96xf32>
    %92 = vector.shape_cast %91 : vector<1x1x8x96xf32> to vector<8x96xf32>
    %c0_144 = arith.constant 0 : index
    %c28 = arith.constant 28 : index
    %c0_145 = arith.constant 0 : index
    %c0_146 = arith.constant 0 : index
    %93 = vector.load %arg1[%c0_144, %c28, %c0_145, %c0_146] : memref<1x32x8x96xf32, #tpu.memory_space<vmem>>, vector<1x1x8x96xf32>
    %94 = vector.shape_cast %93 : vector<1x1x8x96xf32> to vector<8x96xf32>
    %95 = tpu.concatenate %68, %70, %72, %74, %76, %78, %80, %82, %84, %86, %88, %90, %92, %94 in 0 : vector<8x96xf32>, vector<8x96xf32>, vector<8x96xf32>, vector<8x96xf32>, vector<8x96xf32>, vector<8x96xf32>, vector<8x96xf32>, vector<8x96xf32>, vector<8x96xf32>, vector<8x96xf32>, vector<8x96xf32>, vector<8x96xf32>, vector<8x96xf32>, vector<8x96xf32> -> vector<112x96xf32>
    %c2_147 = arith.constant 2 : index
    %c0_148 = arith.constant 0 : index
    %c0_149 = arith.constant 0 : index
    %96 = vector.load %arg2[%c2_147, %c0_148, %c0_149] : memref<5x96x256xf32, #tpu.memory_space<vmem>>, vector<1x96x256xf32>
    %97 = vector.shape_cast %96 : vector<1x96x256xf32> to vector<96x256xf32>
    %cst_150 = arith.constant dense<0.000000e+00> : vector<112x256xf32>
    %98 = tpu.matmul %95, %97, %cst_150 {dimension_numbers = #tpu.dot_dimension_numbers<[1], [0], [0], [1], [0, 0, 1, 1], [], []>} : vector<112x96xf32>, vector<96x256xf32>, vector<112x256xf32> -> vector<112x256xf32>
    %99 = arith.addf %66, %98 : vector<112x256xf32>
    %c0_151 = arith.constant 0 : index
    %c3_152 = arith.constant 3 : index
    %c0_153 = arith.constant 0 : index
    %c0_154 = arith.constant 0 : index
    %100 = vector.load %arg1[%c0_151, %c3_152, %c0_153, %c0_154] : memref<1x32x8x96xf32, #tpu.memory_space<vmem>>, vector<1x1x8x96xf32>
    %101 = vector.shape_cast %100 : vector<1x1x8x96xf32> to vector<8x96xf32>
    %c0_155 = arith.constant 0 : index
    %c5_156 = arith.constant 5 : index
    %c0_157 = arith.constant 0 : index
    %c0_158 = arith.constant 0 : index
    %102 = vector.load %arg1[%c0_155, %c5_156, %c0_157, %c0_158] : memref<1x32x8x96xf32, #tpu.memory_space<vmem>>, vector<1x1x8x96xf32>
    %103 = vector.shape_cast %102 : vector<1x1x8x96xf32> to vector<8x96xf32>
    %c0_159 = arith.constant 0 : index
    %c7_160 = arith.constant 7 : index
    %c0_161 = arith.constant 0 : index
    %c0_162 = arith.constant 0 : index
    %104 = vector.load %arg1[%c0_159, %c7_160, %c0_161, %c0_162] : memref<1x32x8x96xf32, #tpu.memory_space<vmem>>, vector<1x1x8x96xf32>
    %105 = vector.shape_cast %104 : vector<1x1x8x96xf32> to vector<8x96xf32>
    %c0_163 = arith.constant 0 : index
    %c9_164 = arith.constant 9 : index
    %c0_165 = arith.constant 0 : index
    %c0_166 = arith.constant 0 : index
    %106 = vector.load %arg1[%c0_163, %c9_164, %c0_165, %c0_166] : memref<1x32x8x96xf32, #tpu.memory_space<vmem>>, vector<1x1x8x96xf32>
    %107 = vector.shape_cast %106 : vector<1x1x8x96xf32> to vector<8x96xf32>
    %c0_167 = arith.constant 0 : index
    %c11_168 = arith.constant 11 : index
    %c0_169 = arith.constant 0 : index
    %c0_170 = arith.constant 0 : index
    %108 = vector.load %arg1[%c0_167, %c11_168, %c0_169, %c0_170] : memref<1x32x8x96xf32, #tpu.memory_space<vmem>>, vector<1x1x8x96xf32>
    %109 = vector.shape_cast %108 : vector<1x1x8x96xf32> to vector<8x96xf32>
    %c0_171 = arith.constant 0 : index
    %c13_172 = arith.constant 13 : index
    %c0_173 = arith.constant 0 : index
    %c0_174 = arith.constant 0 : index
    %110 = vector.load %arg1[%c0_171, %c13_172, %c0_173, %c0_174] : memref<1x32x8x96xf32, #tpu.memory_space<vmem>>, vector<1x1x8x96xf32>
    %111 = vector.shape_cast %110 : vector<1x1x8x96xf32> to vector<8x96xf32>
    %c0_175 = arith.constant 0 : index
    %c15_176 = arith.constant 15 : index
    %c0_177 = arith.constant 0 : index
    %c0_178 = arith.constant 0 : index
    %112 = vector.load %arg1[%c0_175, %c15_176, %c0_177, %c0_178] : memref<1x32x8x96xf32, #tpu.memory_space<vmem>>, vector<1x1x8x96xf32>
    %113 = vector.shape_cast %112 : vector<1x1x8x96xf32> to vector<8x96xf32>
    %c0_179 = arith.constant 0 : index
    %c17_180 = arith.constant 17 : index
    %c0_181 = arith.constant 0 : index
    %c0_182 = arith.constant 0 : index
    %114 = vector.load %arg1[%c0_179, %c17_180, %c0_181, %c0_182] : memref<1x32x8x96xf32, #tpu.memory_space<vmem>>, vector<1x1x8x96xf32>
    %115 = vector.shape_cast %114 : vector<1x1x8x96xf32> to vector<8x96xf32>
    %c0_183 = arith.constant 0 : index
    %c19_184 = arith.constant 19 : index
    %c0_185 = arith.constant 0 : index
    %c0_186 = arith.constant 0 : index
    %116 = vector.load %arg1[%c0_183, %c19_184, %c0_185, %c0_186] : memref<1x32x8x96xf32, #tpu.memory_space<vmem>>, vector<1x1x8x96xf32>
    %117 = vector.shape_cast %116 : vector<1x1x8x96xf32> to vector<8x96xf32>
    %c0_187 = arith.constant 0 : index
    %c21_188 = arith.constant 21 : index
    %c0_189 = arith.constant 0 : index
    %c0_190 = arith.constant 0 : index
    %118 = vector.load %arg1[%c0_187, %c21_188, %c0_189, %c0_190] : memref<1x32x8x96xf32, #tpu.memory_space<vmem>>, vector<1x1x8x96xf32>
    %119 = vector.shape_cast %118 : vector<1x1x8x96xf32> to vector<8x96xf32>
    %c0_191 = arith.constant 0 : index
    %c23_192 = arith.constant 23 : index
    %c0_193 = arith.constant 0 : index
    %c0_194 = arith.constant 0 : index
    %120 = vector.load %arg1[%c0_191, %c23_192, %c0_193, %c0_194] : memref<1x32x8x96xf32, #tpu.memory_space<vmem>>, vector<1x1x8x96xf32>
    %121 = vector.shape_cast %120 : vector<1x1x8x96xf32> to vector<8x96xf32>
    %c0_195 = arith.constant 0 : index
    %c25_196 = arith.constant 25 : index
    %c0_197 = arith.constant 0 : index
    %c0_198 = arith.constant 0 : index
    %122 = vector.load %arg1[%c0_195, %c25_196, %c0_197, %c0_198] : memref<1x32x8x96xf32, #tpu.memory_space<vmem>>, vector<1x1x8x96xf32>
    %123 = vector.shape_cast %122 : vector<1x1x8x96xf32> to vector<8x96xf32>
    %c0_199 = arith.constant 0 : index
    %c27_200 = arith.constant 27 : index
    %c0_201 = arith.constant 0 : index
    %c0_202 = arith.constant 0 : index
    %124 = vector.load %arg1[%c0_199, %c27_200, %c0_201, %c0_202] : memref<1x32x8x96xf32, #tpu.memory_space<vmem>>, vector<1x1x8x96xf32>
    %125 = vector.shape_cast %124 : vector<1x1x8x96xf32> to vector<8x96xf32>
    %c0_203 = arith.constant 0 : index
    %c29 = arith.constant 29 : index
    %c0_204 = arith.constant 0 : index
    %c0_205 = arith.constant 0 : index
    %126 = vector.load %arg1[%c0_203, %c29, %c0_204, %c0_205] : memref<1x32x8x96xf32, #tpu.memory_space<vmem>>, vector<1x1x8x96xf32>
    %127 = vector.shape_cast %126 : vector<1x1x8x96xf32> to vector<8x96xf32>
    %128 = tpu.concatenate %101, %103, %105, %107, %109, %111, %113, %115, %117, %119, %121, %123, %125, %127 in 0 : vector<8x96xf32>, vector<8x96xf32>, vector<8x96xf32>, vector<8x96xf32>, vector<8x96xf32>, vector<8x96xf32>, vector<8x96xf32>, vector<8x96xf32>, vector<8x96xf32>, vector<8x96xf32>, vector<8x96xf32>, vector<8x96xf32>, vector<8x96xf32>, vector<8x96xf32> -> vector<112x96xf32>
    %c3_206 = arith.constant 3 : index
    %c0_207 = arith.constant 0 : index
    %c0_208 = arith.constant 0 : index
    %129 = vector.load %arg2[%c3_206, %c0_207, %c0_208] : memref<5x96x256xf32, #tpu.memory_space<vmem>>, vector<1x96x256xf32>
    %130 = vector.shape_cast %129 : vector<1x96x256xf32> to vector<96x256xf32>
    %cst_209 = arith.constant dense<0.000000e+00> : vector<112x256xf32>
    %131 = tpu.matmul %128, %130, %cst_209 {dimension_numbers = #tpu.dot_dimension_numbers<[1], [0], [0], [1], [0, 0, 1, 1], [], []>} : vector<112x96xf32>, vector<96x256xf32>, vector<112x256xf32> -> vector<112x256xf32>
    %132 = arith.addf %99, %131 : vector<112x256xf32>
    %c0_210 = arith.constant 0 : index
    %c4_211 = arith.constant 4 : index
    %c0_212 = arith.constant 0 : index
    %c0_213 = arith.constant 0 : index
    %133 = vector.load %arg1[%c0_210, %c4_211, %c0_212, %c0_213] : memref<1x32x8x96xf32, #tpu.memory_space<vmem>>, vector<1x1x8x96xf32>
    %134 = vector.shape_cast %133 : vector<1x1x8x96xf32> to vector<8x96xf32>
    %c0_214 = arith.constant 0 : index
    %c6_215 = arith.constant 6 : index
    %c0_216 = arith.constant 0 : index
    %c0_217 = arith.constant 0 : index
    %135 = vector.load %arg1[%c0_214, %c6_215, %c0_216, %c0_217] : memref<1x32x8x96xf32, #tpu.memory_space<vmem>>, vector<1x1x8x96xf32>
    %136 = vector.shape_cast %135 : vector<1x1x8x96xf32> to vector<8x96xf32>
    %c0_218 = arith.constant 0 : index
    %c8_219 = arith.constant 8 : index
    %c0_220 = arith.constant 0 : index
    %c0_221 = arith.constant 0 : index
    %137 = vector.load %arg1[%c0_218, %c8_219, %c0_220, %c0_221] : memref<1x32x8x96xf32, #tpu.memory_space<vmem>>, vector<1x1x8x96xf32>
    %138 = vector.shape_cast %137 : vector<1x1x8x96xf32> to vector<8x96xf32>
    %c0_222 = arith.constant 0 : index
    %c10_223 = arith.constant 10 : index
    %c0_224 = arith.constant 0 : index
    %c0_225 = arith.constant 0 : index
    %139 = vector.load %arg1[%c0_222, %c10_223, %c0_224, %c0_225] : memref<1x32x8x96xf32, #tpu.memory_space<vmem>>, vector<1x1x8x96xf32>
    %140 = vector.shape_cast %139 : vector<1x1x8x96xf32> to vector<8x96xf32>
    %c0_226 = arith.constant 0 : index
    %c12_227 = arith.constant 12 : index
    %c0_228 = arith.constant 0 : index
    %c0_229 = arith.constant 0 : index
    %141 = vector.load %arg1[%c0_226, %c12_227, %c0_228, %c0_229] : memref<1x32x8x96xf32, #tpu.memory_space<vmem>>, vector<1x1x8x96xf32>
    %142 = vector.shape_cast %141 : vector<1x1x8x96xf32> to vector<8x96xf32>
    %c0_230 = arith.constant 0 : index
    %c14_231 = arith.constant 14 : index
    %c0_232 = arith.constant 0 : index
    %c0_233 = arith.constant 0 : index
    %143 = vector.load %arg1[%c0_230, %c14_231, %c0_232, %c0_233] : memref<1x32x8x96xf32, #tpu.memory_space<vmem>>, vector<1x1x8x96xf32>
    %144 = vector.shape_cast %143 : vector<1x1x8x96xf32> to vector<8x96xf32>
    %c0_234 = arith.constant 0 : index
    %c16_235 = arith.constant 16 : index
    %c0_236 = arith.constant 0 : index
    %c0_237 = arith.constant 0 : index
    %145 = vector.load %arg1[%c0_234, %c16_235, %c0_236, %c0_237] : memref<1x32x8x96xf32, #tpu.memory_space<vmem>>, vector<1x1x8x96xf32>
    %146 = vector.shape_cast %145 : vector<1x1x8x96xf32> to vector<8x96xf32>
    %c0_238 = arith.constant 0 : index
    %c18_239 = arith.constant 18 : index
    %c0_240 = arith.constant 0 : index
    %c0_241 = arith.constant 0 : index
    %147 = vector.load %arg1[%c0_238, %c18_239, %c0_240, %c0_241] : memref<1x32x8x96xf32, #tpu.memory_space<vmem>>, vector<1x1x8x96xf32>
    %148 = vector.shape_cast %147 : vector<1x1x8x96xf32> to vector<8x96xf32>
    %c0_242 = arith.constant 0 : index
    %c20_243 = arith.constant 20 : index
    %c0_244 = arith.constant 0 : index
    %c0_245 = arith.constant 0 : index
    %149 = vector.load %arg1[%c0_242, %c20_243, %c0_244, %c0_245] : memref<1x32x8x96xf32, #tpu.memory_space<vmem>>, vector<1x1x8x96xf32>
    %150 = vector.shape_cast %149 : vector<1x1x8x96xf32> to vector<8x96xf32>
    %c0_246 = arith.constant 0 : index
    %c22_247 = arith.constant 22 : index
    %c0_248 = arith.constant 0 : index
    %c0_249 = arith.constant 0 : index
    %151 = vector.load %arg1[%c0_246, %c22_247, %c0_248, %c0_249] : memref<1x32x8x96xf32, #tpu.memory_space<vmem>>, vector<1x1x8x96xf32>
    %152 = vector.shape_cast %151 : vector<1x1x8x96xf32> to vector<8x96xf32>
    %c0_250 = arith.constant 0 : index
    %c24_251 = arith.constant 24 : index
    %c0_252 = arith.constant 0 : index
    %c0_253 = arith.constant 0 : index
    %153 = vector.load %arg1[%c0_250, %c24_251, %c0_252, %c0_253] : memref<1x32x8x96xf32, #tpu.memory_space<vmem>>, vector<1x1x8x96xf32>
    %154 = vector.shape_cast %153 : vector<1x1x8x96xf32> to vector<8x96xf32>
    %c0_254 = arith.constant 0 : index
    %c26_255 = arith.constant 26 : index
    %c0_256 = arith.constant 0 : index
    %c0_257 = arith.constant 0 : index
    %155 = vector.load %arg1[%c0_254, %c26_255, %c0_256, %c0_257] : memref<1x32x8x96xf32, #tpu.memory_space<vmem>>, vector<1x1x8x96xf32>
    %156 = vector.shape_cast %155 : vector<1x1x8x96xf32> to vector<8x96xf32>
    %c0_258 = arith.constant 0 : index
    %c28_259 = arith.constant 28 : index
    %c0_260 = arith.constant 0 : index
    %c0_261 = arith.constant 0 : index
    %157 = vector.load %arg1[%c0_258, %c28_259, %c0_260, %c0_261] : memref<1x32x8x96xf32, #tpu.memory_space<vmem>>, vector<1x1x8x96xf32>
    %158 = vector.shape_cast %157 : vector<1x1x8x96xf32> to vector<8x96xf32>
    %c0_262 = arith.constant 0 : index
    %c30 = arith.constant 30 : index
    %c0_263 = arith.constant 0 : index
    %c0_264 = arith.constant 0 : index
    %159 = vector.load %arg1[%c0_262, %c30, %c0_263, %c0_264] : memref<1x32x8x96xf32, #tpu.memory_space<vmem>>, vector<1x1x8x96xf32>
    %160 = vector.shape_cast %159 : vector<1x1x8x96xf32> to vector<8x96xf32>
    %161 = tpu.concatenate %134, %136, %138, %140, %142, %144, %146, %148, %150, %152, %154, %156, %158, %160 in 0 : vector<8x96xf32>, vector<8x96xf32>, vector<8x96xf32>, vector<8x96xf32>, vector<8x96xf32>, vector<8x96xf32>, vector<8x96xf32>, vector<8x96xf32>, vector<8x96xf32>, vector<8x96xf32>, vector<8x96xf32>, vector<8x96xf32>, vector<8x96xf32>, vector<8x96xf32> -> vector<112x96xf32>
    %c4_265 = arith.constant 4 : index
    %c0_266 = arith.constant 0 : index
    %c0_267 = arith.constant 0 : index
    %162 = vector.load %arg2[%c4_265, %c0_266, %c0_267] : memref<5x96x256xf32, #tpu.memory_space<vmem>>, vector<1x96x256xf32>
    %163 = vector.shape_cast %162 : vector<1x96x256xf32> to vector<96x256xf32>
    %cst_268 = arith.constant dense<0.000000e+00> : vector<112x256xf32>
    %164 = tpu.matmul %161, %163, %cst_268 {dimension_numbers = #tpu.dot_dimension_numbers<[1], [0], [0], [1], [0, 0, 1, 1], [], []>} : vector<112x96xf32>, vector<96x256xf32>, vector<112x256xf32> -> vector<112x256xf32>
    %165 = arith.addf %132, %164 : vector<112x256xf32>
    %166 = vector.extract_strided_slice %165 {offsets = [0, 0], sizes = [112, 84], strides = [1, 1]} : vector<112x256xf32> to vector<112x84xf32>
    %167 = vector.extract_strided_slice %165 {offsets = [0, 128], sizes = [112, 84], strides = [1, 1]} : vector<112x256xf32> to vector<112x84xf32>
    %168 = arith.maximumf %166, %167 : vector<112x84xf32>
    %c0_269 = arith.constant 0 : index
    %c0_270 = arith.constant 0 : index
    %169 = vector.load %arg13[%c0_269, %c0_270] : memref<112x84xf32, #tpu.memory_space<vmem>>, vector<112x84xf32>
    tpu.vector_store %arg13[%c0_269, %c0_270], %168 {strides = array<i32>} : memref<112x84xf32, #tpu.memory_space<vmem>>, vector<112x84xf32>,
    %cst_271 = arith.constant 0.000000e+00 : f32
    %170 = vector.broadcast %cst_271 : f32 to vector<112x256xf32>
    %c0_272 = arith.constant 0 : index
    %c1_273 = arith.constant 1 : index
    %c0_274 = arith.constant 0 : index
    %c0_275 = arith.constant 0 : index
    %171 = vector.load %arg1[%c0_272, %c1_273, %c0_274, %c0_275] : memref<1x32x8x96xf32, #tpu.memory_space<vmem>>, vector<1x1x8x96xf32>
    %172 = vector.shape_cast %171 : vector<1x1x8x96xf32> to vector<8x96xf32>
    %c0_276 = arith.constant 0 : index
    %c3_277 = arith.constant 3 : index
    %c0_278 = arith.constant 0 : index
    %c0_279 = arith.constant 0 : index
    %173 = vector.load %arg1[%c0_276, %c3_277, %c0_278, %c0_279] : memref<1x32x8x96xf32, #tpu.memory_space<vmem>>, vector<1x1x8x96xf32>
    %174 = vector.shape_cast %173 : vector<1x1x8x96xf32> to vector<8x96xf32>
    %c0_280 = arith.constant 0 : index
    %c5_281 = arith.constant 5 : index
    %c0_282 = arith.constant 0 : index
    %c0_283 = arith.constant 0 : index
    %175 = vector.load %arg1[%c0_280, %c5_281, %c0_282, %c0_283] : memref<1x32x8x96xf32, #tpu.memory_space<vmem>>, vector<1x1x8x96xf32>
    %176 = vector.shape_cast %175 : vector<1x1x8x96xf32> to vector<8x96xf32>
    %c0_284 = arith.constant 0 : index
    %c7_285 = arith.constant 7 : index
    %c0_286 = arith.constant 0 : index
    %c0_287 = arith.constant 0 : index
    %177 = vector.load %arg1[%c0_284, %c7_285, %c0_286, %c0_287] : memref<1x32x8x96xf32, #tpu.memory_space<vmem>>, vector<1x1x8x96xf32>
    %178 = vector.shape_cast %177 : vector<1x1x8x96xf32> to vector<8x96xf32>
    %c0_288 = arith.constant 0 : index
    %c9_289 = arith.constant 9 : index
    %c0_290 = arith.constant 0 : index
    %c0_291 = arith.constant 0 : index
    %179 = vector.load %arg1[%c0_288, %c9_289, %c0_290, %c0_291] : memref<1x32x8x96xf32, #tpu.memory_space<vmem>>, vector<1x1x8x96xf32>
    %180 = vector.shape_cast %179 : vector<1x1x8x96xf32> to vector<8x96xf32>
    %c0_292 = arith.constant 0 : index
    %c11_293 = arith.constant 11 : index
    %c0_294 = arith.constant 0 : index
    %c0_295 = arith.constant 0 : index
    %181 = vector.load %arg1[%c0_292, %c11_293, %c0_294, %c0_295] : memref<1x32x8x96xf32, #tpu.memory_space<vmem>>, vector<1x1x8x96xf32>
    %182 = vector.shape_cast %181 : vector<1x1x8x96xf32> to vector<8x96xf32>
    %c0_296 = arith.constant 0 : index
    %c13_297 = arith.constant 13 : index
    %c0_298 = arith.constant 0 : index
    %c0_299 = arith.constant 0 : index
    %183 = vector.load %arg1[%c0_296, %c13_297, %c0_298, %c0_299] : memref<1x32x8x96xf32, #tpu.memory_space<vmem>>, vector<1x1x8x96xf32>
    %184 = vector.shape_cast %183 : vector<1x1x8x96xf32> to vector<8x96xf32>
    %c0_300 = arith.constant 0 : index
    %c15_301 = arith.constant 15 : index
    %c0_302 = arith.constant 0 : index
    %c0_303 = arith.constant 0 : index
    %185 = vector.load %arg1[%c0_300, %c15_301, %c0_302, %c0_303] : memref<1x32x8x96xf32, #tpu.memory_space<vmem>>, vector<1x1x8x96xf32>
    %186 = vector.shape_cast %185 : vector<1x1x8x96xf32> to vector<8x96xf32>
    %c0_304 = arith.constant 0 : index
    %c17_305 = arith.constant 17 : index
    %c0_306 = arith.constant 0 : index
    %c0_307 = arith.constant 0 : index
    %187 = vector.load %arg1[%c0_304, %c17_305, %c0_306, %c0_307] : memref<1x32x8x96xf32, #tpu.memory_space<vmem>>, vector<1x1x8x96xf32>
    %188 = vector.shape_cast %187 : vector<1x1x8x96xf32> to vector<8x96xf32>
    %c0_308 = arith.constant 0 : index
    %c19_309 = arith.constant 19 : index
    %c0_310 = arith.constant 0 : index
    %c0_311 = arith.constant 0 : index
    %189 = vector.load %arg1[%c0_308, %c19_309, %c0_310, %c0_311] : memref<1x32x8x96xf32, #tpu.memory_space<vmem>>, vector<1x1x8x96xf32>
    %190 = vector.shape_cast %189 : vector<1x1x8x96xf32> to vector<8x96xf32>
    %c0_312 = arith.constant 0 : index
    %c21_313 = arith.constant 21 : index
    %c0_314 = arith.constant 0 : index
    %c0_315 = arith.constant 0 : index
    %191 = vector.load %arg1[%c0_312, %c21_313, %c0_314, %c0_315] : memref<1x32x8x96xf32, #tpu.memory_space<vmem>>, vector<1x1x8x96xf32>
    %192 = vector.shape_cast %191 : vector<1x1x8x96xf32> to vector<8x96xf32>
    %c0_316 = arith.constant 0 : index
    %c23_317 = arith.constant 23 : index
    %c0_318 = arith.constant 0 : index
    %c0_319 = arith.constant 0 : index
    %193 = vector.load %arg1[%c0_316, %c23_317, %c0_318, %c0_319] : memref<1x32x8x96xf32, #tpu.memory_space<vmem>>, vector<1x1x8x96xf32>
    %194 = vector.shape_cast %193 : vector<1x1x8x96xf32> to vector<8x96xf32>
    %c0_320 = arith.constant 0 : index
    %c25_321 = arith.constant 25 : index
    %c0_322 = arith.constant 0 : index
    %c0_323 = arith.constant 0 : index
    %195 = vector.load %arg1[%c0_320, %c25_321, %c0_322, %c0_323] : memref<1x32x8x96xf32, #tpu.memory_space<vmem>>, vector<1x1x8x96xf32>
    %196 = vector.shape_cast %195 : vector<1x1x8x96xf32> to vector<8x96xf32>
    %c0_324 = arith.constant 0 : index
    %c27_325 = arith.constant 27 : index
    %c0_326 = arith.constant 0 : index
    %c0_327 = arith.constant 0 : index
    %197 = vector.load %arg1[%c0_324, %c27_325, %c0_326, %c0_327] : memref<1x32x8x96xf32, #tpu.memory_space<vmem>>, vector<1x1x8x96xf32>
    %198 = vector.shape_cast %197 : vector<1x1x8x96xf32> to vector<8x96xf32>
    %199 = tpu.concatenate %172, %174, %176, %178, %180, %182, %184, %186, %188, %190, %192, %194, %196, %198 in 0 : vector<8x96xf32>, vector<8x96xf32>, vector<8x96xf32>, vector<8x96xf32>, vector<8x96xf32>, vector<8x96xf32>, vector<8x96xf32>, vector<8x96xf32>, vector<8x96xf32>, vector<8x96xf32>, vector<8x96xf32>, vector<8x96xf32>, vector<8x96xf32>, vector<8x96xf32> -> vector<112x96xf32>
    %c0_328 = arith.constant 0 : index
    %c0_329 = arith.constant 0 : index
    %c0_330 = arith.constant 0 : index
    %200 = vector.load %arg2[%c0_328, %c0_329, %c0_330] : memref<5x96x256xf32, #tpu.memory_space<vmem>>, vector<1x96x256xf32>
    %201 = vector.shape_cast %200 : vector<1x96x256xf32> to vector<96x256xf32>
    %cst_331 = arith.constant dense<0.000000e+00> : vector<112x256xf32>
    %202 = tpu.matmul %199, %201, %cst_331 {dimension_numbers = #tpu.dot_dimension_numbers<[1], [0], [0], [1], [0, 0, 1, 1], [], []>} : vector<112x96xf32>, vector<96x256xf32>, vector<112x256xf32> -> vector<112x256xf32>
    %203 = arith.addf %170, %202 : vector<112x256xf32>
    %c0_332 = arith.constant 0 : index
    %c2_333 = arith.constant 2 : index
    %c0_334 = arith.constant 0 : index
    %c0_335 = arith.constant 0 : index
    %204 = vector.load %arg1[%c0_332, %c2_333, %c0_334, %c0_335] : memref<1x32x8x96xf32, #tpu.memory_space<vmem>>, vector<1x1x8x96xf32>
    %205 = vector.shape_cast %204 : vector<1x1x8x96xf32> to vector<8x96xf32>
    %c0_336 = arith.constant 0 : index
    %c4_337 = arith.constant 4 : index
    %c0_338 = arith.constant 0 : index
    %c0_339 = arith.constant 0 : index
    %206 = vector.load %arg1[%c0_336, %c4_337, %c0_338, %c0_339] : memref<1x32x8x96xf32, #tpu.memory_space<vmem>>, vector<1x1x8x96xf32>
    %207 = vector.shape_cast %206 : vector<1x1x8x96xf32> to vector<8x96xf32>
    %c0_340 = arith.constant 0 : index
    %c6_341 = arith.constant 6 : index
    %c0_342 = arith.constant 0 : index
    %c0_343 = arith.constant 0 : index
    %208 = vector.load %arg1[%c0_340, %c6_341, %c0_342, %c0_343] : memref<1x32x8x96xf32, #tpu.memory_space<vmem>>, vector<1x1x8x96xf32>
    %209 = vector.shape_cast %208 : vector<1x1x8x96xf32> to vector<8x96xf32>
    %c0_344 = arith.constant 0 : index
    %c8_345 = arith.constant 8 : index
    %c0_346 = arith.constant 0 : index
    %c0_347 = arith.constant 0 : index
    %210 = vector.load %arg1[%c0_344, %c8_345, %c0_346, %c0_347] : memref<1x32x8x96xf32, #tpu.memory_space<vmem>>, vector<1x1x8x96xf32>
    %211 = vector.shape_cast %210 : vector<1x1x8x96xf32> to vector<8x96xf32>
    %c0_348 = arith.constant 0 : index
    %c10_349 = arith.constant 10 : index
    %c0_350 = arith.constant 0 : index
    %c0_351 = arith.constant 0 : index
    %212 = vector.load %arg1[%c0_348, %c10_349, %c0_350, %c0_351] : memref<1x32x8x96xf32, #tpu.memory_space<vmem>>, vector<1x1x8x96xf32>
    %213 = vector.shape_cast %212 : vector<1x1x8x96xf32> to vector<8x96xf32>
    %c0_352 = arith.constant 0 : index
    %c12_353 = arith.constant 12 : index
    %c0_354 = arith.constant 0 : index
    %c0_355 = arith.constant 0 : index
    %214 = vector.load %arg1[%c0_352, %c12_353, %c0_354, %c0_355] : memref<1x32x8x96xf32, #tpu.memory_space<vmem>>, vector<1x1x8x96xf32>
    %215 = vector.shape_cast %214 : vector<1x1x8x96xf32> to vector<8x96xf32>
    %c0_356 = arith.constant 0 : index
    %c14_357 = arith.constant 14 : index
    %c0_358 = arith.constant 0 : index
    %c0_359 = arith.constant 0 : index
    %216 = vector.load %arg1[%c0_356, %c14_357, %c0_358, %c0_359] : memref<1x32x8x96xf32, #tpu.memory_space<vmem>>, vector<1x1x8x96xf32>
    %217 = vector.shape_cast %216 : vector<1x1x8x96xf32> to vector<8x96xf32>
    %c0_360 = arith.constant 0 : index
    %c16_361 = arith.constant 16 : index
    %c0_362 = arith.constant 0 : index
    %c0_363 = arith.constant 0 : index
    %218 = vector.load %arg1[%c0_360, %c16_361, %c0_362, %c0_363] : memref<1x32x8x96xf32, #tpu.memory_space<vmem>>, vector<1x1x8x96xf32>
    %219 = vector.shape_cast %218 : vector<1x1x8x96xf32> to vector<8x96xf32>
    %c0_364 = arith.constant 0 : index
    %c18_365 = arith.constant 18 : index
    %c0_366 = arith.constant 0 : index
    %c0_367 = arith.constant 0 : index
    %220 = vector.load %arg1[%c0_364, %c18_365, %c0_366, %c0_367] : memref<1x32x8x96xf32, #tpu.memory_space<vmem>>, vector<1x1x8x96xf32>
    %221 = vector.shape_cast %220 : vector<1x1x8x96xf32> to vector<8x96xf32>
    %c0_368 = arith.constant 0 : index
    %c20_369 = arith.constant 20 : index
    %c0_370 = arith.constant 0 : index
    %c0_371 = arith.constant 0 : index
    %222 = vector.load %arg1[%c0_368, %c20_369, %c0_370, %c0_371] : memref<1x32x8x96xf32, #tpu.memory_space<vmem>>, vector<1x1x8x96xf32>
    %223 = vector.shape_cast %222 : vector<1x1x8x96xf32> to vector<8x96xf32>
    %c0_372 = arith.constant 0 : index
    %c22_373 = arith.constant 22 : index
    %c0_374 = arith.constant 0 : index
    %c0_375 = arith.constant 0 : index
    %224 = vector.load %arg1[%c0_372, %c22_373, %c0_374, %c0_375] : memref<1x32x8x96xf32, #tpu.memory_space<vmem>>, vector<1x1x8x96xf32>
    %225 = vector.shape_cast %224 : vector<1x1x8x96xf32> to vector<8x96xf32>
    %c0_376 = arith.constant 0 : index
    %c24_377 = arith.constant 24 : index
    %c0_378 = arith.constant 0 : index
    %c0_379 = arith.constant 0 : index
    %226 = vector.load %arg1[%c0_376, %c24_377, %c0_378, %c0_379] : memref<1x32x8x96xf32, #tpu.memory_space<vmem>>, vector<1x1x8x96xf32>
    %227 = vector.shape_cast %226 : vector<1x1x8x96xf32> to vector<8x96xf32>
    %c0_380 = arith.constant 0 : index
    %c26_381 = arith.constant 26 : index
    %c0_382 = arith.constant 0 : index
    %c0_383 = arith.constant 0 : index
    %228 = vector.load %arg1[%c0_380, %c26_381, %c0_382, %c0_383] : memref<1x32x8x96xf32, #tpu.memory_space<vmem>>, vector<1x1x8x96xf32>
    %229 = vector.shape_cast %228 : vector<1x1x8x96xf32> to vector<8x96xf32>
    %c0_384 = arith.constant 0 : index
    %c28_385 = arith.constant 28 : index
    %c0_386 = arith.constant 0 : index
    %c0_387 = arith.constant 0 : index
    %230 = vector.load %arg1[%c0_384, %c28_385, %c0_386, %c0_387] : memref<1x32x8x96xf32, #tpu.memory_space<vmem>>, vector<1x1x8x96xf32>
    %231 = vector.shape_cast %230 : vector<1x1x8x96xf32> to vector<8x96xf32>
    %232 = tpu.concatenate %205, %207, %209, %211, %213, %215, %217, %219, %221, %223, %225, %227, %229, %231 in 0 : vector<8x96xf32>, vector<8x96xf32>, vector<8x96xf32>, vector<8x96xf32>, vector<8x96xf32>, vector<8x96xf32>, vector<8x96xf32>, vector<8x96xf32>, vector<8x96xf32>, vector<8x96xf32>, vector<8x96xf32>, vector<8x96xf32>, vector<8x96xf32>, vector<8x96xf32> -> vector<112x96xf32>
    %c1_388 = arith.constant 1 : index
    %c0_389 = arith.constant 0 : index
    %c0_390 = arith.constant 0 : index
    %233 = vector.load %arg2[%c1_388, %c0_389, %c0_390] : memref<5x96x256xf32, #tpu.memory_space<vmem>>, vector<1x96x256xf32>
    %234 = vector.shape_cast %233 : vector<1x96x256xf32> to vector<96x256xf32>
    %cst_391 = arith.constant dense<0.000000e+00> : vector<112x256xf32>
    %235 = tpu.matmul %232, %234, %cst_391 {dimension_numbers = #tpu.dot_dimension_numbers<[1], [0], [0], [1], [0, 0, 1, 1], [], []>} : vector<112x96xf32>, vector<96x256xf32>, vector<112x256xf32> -> vector<112x256xf32>
    %236 = arith.addf %203, %235 : vector<112x256xf32>
    %c0_392 = arith.constant 0 : index
    %c3_393 = arith.constant 3 : index
    %c0_394 = arith.constant 0 : index
    %c0_395 = arith.constant 0 : index
    %237 = vector.load %arg1[%c0_392, %c3_393, %c0_394, %c0_395] : memref<1x32x8x96xf32, #tpu.memory_space<vmem>>, vector<1x1x8x96xf32>
    %238 = vector.shape_cast %237 : vector<1x1x8x96xf32> to vector<8x96xf32>
    %c0_396 = arith.constant 0 : index
    %c5_397 = arith.constant 5 : index
    %c0_398 = arith.constant 0 : index
    %c0_399 = arith.constant 0 : index
    %239 = vector.load %arg1[%c0_396, %c5_397, %c0_398, %c0_399] : memref<1x32x8x96xf32, #tpu.memory_space<vmem>>, vector<1x1x8x96xf32>
    %240 = vector.shape_cast %239 : vector<1x1x8x96xf32> to vector<8x96xf32>
    %c0_400 = arith.constant 0 : index
    %c7_401 = arith.constant 7 : index
    %c0_402 = arith.constant 0 : index
    %c0_403 = arith.constant 0 : index
    %241 = vector.load %arg1[%c0_400, %c7_401, %c0_402, %c0_403] : memref<1x32x8x96xf32, #tpu.memory_space<vmem>>, vector<1x1x8x96xf32>
    %242 = vector.shape_cast %241 : vector<1x1x8x96xf32> to vector<8x96xf32>
    %c0_404 = arith.constant 0 : index
    %c9_405 = arith.constant 9 : index
    %c0_406 = arith.constant 0 : index
    %c0_407 = arith.constant 0 : index
    %243 = vector.load %arg1[%c0_404, %c9_405, %c0_406, %c0_407] : memref<1x32x8x96xf32, #tpu.memory_space<vmem>>, vector<1x1x8x96xf32>
    %244 = vector.shape_cast %243 : vector<1x1x8x96xf32> to vector<8x96xf32>
    %c0_408 = arith.constant 0 : index
    %c11_409 = arith.constant 11 : index
    %c0_410 = arith.constant 0 : index
    %c0_411 = arith.constant 0 : index
    %245 = vector.load %arg1[%c0_408, %c11_409, %c0_410, %c0_411] : memref<1x32x8x96xf32, #tpu.memory_space<vmem>>, vector<1x1x8x96xf32>
    %246 = vector.shape_cast %245 : vector<1x1x8x96xf32> to vector<8x96xf32>
    %c0_412 = arith.constant 0 : index
    %c13_413 = arith.constant 13 : index
    %c0_414 = arith.constant 0 : index
    %c0_415 = arith.constant 0 : index
    %247 = vector.load %arg1[%c0_412, %c13_413, %c0_414, %c0_415] : memref<1x32x8x96xf32, #tpu.memory_space<vmem>>, vector<1x1x8x96xf32>
    %248 = vector.shape_cast %247 : vector<1x1x8x96xf32> to vector<8x96xf32>
    %c0_416 = arith.constant 0 : index
    %c15_417 = arith.constant 15 : index
    %c0_418 = arith.constant 0 : index
    %c0_419 = arith.constant 0 : index
    %249 = vector.load %arg1[%c0_416, %c15_417, %c0_418, %c0_419] : memref<1x32x8x96xf32, #tpu.memory_space<vmem>>, vector<1x1x8x96xf32>
    %250 = vector.shape_cast %249 : vector<1x1x8x96xf32> to vector<8x96xf32>
    %c0_420 = arith.constant 0 : index
    %c17_421 = arith.constant 17 : index
    %c0_422 = arith.constant 0 : index
    %c0_423 = arith.constant 0 : index
    %251 = vector.load %arg1[%c0_420, %c17_421, %c0_422, %c0_423] : memref<1x32x8x96xf32, #tpu.memory_space<vmem>>, vector<1x1x8x96xf32>
    %252 = vector.shape_cast %251 : vector<1x1x8x96xf32> to vector<8x96xf32>
    %c0_424 = arith.constant 0 : index
    %c19_425 = arith.constant 19 : index
    %c0_426 = arith.constant 0 : index
    %c0_427 = arith.constant 0 : index
    %253 = vector.load %arg1[%c0_424, %c19_425, %c0_426, %c0_427] : memref<1x32x8x96xf32, #tpu.memory_space<vmem>>, vector<1x1x8x96xf32>
    %254 = vector.shape_cast %253 : vector<1x1x8x96xf32> to vector<8x96xf32>
    %c0_428 = arith.constant 0 : index
    %c21_429 = arith.constant 21 : index
    %c0_430 = arith.constant 0 : index
    %c0_431 = arith.constant 0 : index
    %255 = vector.load %arg1[%c0_428, %c21_429, %c0_430, %c0_431] : memref<1x32x8x96xf32, #tpu.memory_space<vmem>>, vector<1x1x8x96xf32>
    %256 = vector.shape_cast %255 : vector<1x1x8x96xf32> to vector<8x96xf32>
    %c0_432 = arith.constant 0 : index
    %c23_433 = arith.constant 23 : index
    %c0_434 = arith.constant 0 : index
    %c0_435 = arith.constant 0 : index
    %257 = vector.load %arg1[%c0_432, %c23_433, %c0_434, %c0_435] : memref<1x32x8x96xf32, #tpu.memory_space<vmem>>, vector<1x1x8x96xf32>
    %258 = vector.shape_cast %257 : vector<1x1x8x96xf32> to vector<8x96xf32>
    %c0_436 = arith.constant 0 : index
    %c25_437 = arith.constant 25 : index
    %c0_438 = arith.constant 0 : index
    %c0_439 = arith.constant 0 : index
    %259 = vector.load %arg1[%c0_436, %c25_437, %c0_438, %c0_439] : memref<1x32x8x96xf32, #tpu.memory_space<vmem>>, vector<1x1x8x96xf32>
    %260 = vector.shape_cast %259 : vector<1x1x8x96xf32> to vector<8x96xf32>
    %c0_440 = arith.constant 0 : index
    %c27_441 = arith.constant 27 : index
    %c0_442 = arith.constant 0 : index
    %c0_443 = arith.constant 0 : index
    %261 = vector.load %arg1[%c0_440, %c27_441, %c0_442, %c0_443] : memref<1x32x8x96xf32, #tpu.memory_space<vmem>>, vector<1x1x8x96xf32>
    %262 = vector.shape_cast %261 : vector<1x1x8x96xf32> to vector<8x96xf32>
    %c0_444 = arith.constant 0 : index
    %c29_445 = arith.constant 29 : index
    %c0_446 = arith.constant 0 : index
    %c0_447 = arith.constant 0 : index
    %263 = vector.load %arg1[%c0_444, %c29_445, %c0_446, %c0_447] : memref<1x32x8x96xf32, #tpu.memory_space<vmem>>, vector<1x1x8x96xf32>
    %264 = vector.shape_cast %263 : vector<1x1x8x96xf32> to vector<8x96xf32>
    %265 = tpu.concatenate %238, %240, %242, %244, %246, %248, %250, %252, %254, %256, %258, %260, %262, %264 in 0 : vector<8x96xf32>, vector<8x96xf32>, vector<8x96xf32>, vector<8x96xf32>, vector<8x96xf32>, vector<8x96xf32>, vector<8x96xf32>, vector<8x96xf32>, vector<8x96xf32>, vector<8x96xf32>, vector<8x96xf32>, vector<8x96xf32>, vector<8x96xf32>, vector<8x96xf32> -> vector<112x96xf32>
    %c2_448 = arith.constant 2 : index
    %c0_449 = arith.constant 0 : index
    %c0_450 = arith.constant 0 : index
    %266 = vector.load %arg2[%c2_448, %c0_449, %c0_450] : memref<5x96x256xf32, #tpu.memory_space<vmem>>, vector<1x96x256xf32>
    %267 = vector.shape_cast %266 : vector<1x96x256xf32> to vector<96x256xf32>
    %cst_451 = arith.constant dense<0.000000e+00> : vector<112x256xf32>
    %268 = tpu.matmul %265, %267, %cst_451 {dimension_numbers = #tpu.dot_dimension_numbers<[1], [0], [0], [1], [0, 0, 1, 1], [], []>} : vector<112x96xf32>, vector<96x256xf32>, vector<112x256xf32> -> vector<112x256xf32>
    %269 = arith.addf %236, %268 : vector<112x256xf32>
    %c0_452 = arith.constant 0 : index
    %c4_453 = arith.constant 4 : index
    %c0_454 = arith.constant 0 : index
    %c0_455 = arith.constant 0 : index
    %270 = vector.load %arg1[%c0_452, %c4_453, %c0_454, %c0_455] : memref<1x32x8x96xf32, #tpu.memory_space<vmem>>, vector<1x1x8x96xf32>
    %271 = vector.shape_cast %270 : vector<1x1x8x96xf32> to vector<8x96xf32>
    %c0_456 = arith.constant 0 : index
    %c6_457 = arith.constant 6 : index
    %c0_458 = arith.constant 0 : index
    %c0_459 = arith.constant 0 : index
    %272 = vector.load %arg1[%c0_456, %c6_457, %c0_458, %c0_459] : memref<1x32x8x96xf32, #tpu.memory_space<vmem>>, vector<1x1x8x96xf32>
    %273 = vector.shape_cast %272 : vector<1x1x8x96xf32> to vector<8x96xf32>
    %c0_460 = arith.constant 0 : index
    %c8_461 = arith.constant 8 : index
    %c0_462 = arith.constant 0 : index
    %c0_463 = arith.constant 0 : index
    %274 = vector.load %arg1[%c0_460, %c8_461, %c0_462, %c0_463] : memref<1x32x8x96xf32, #tpu.memory_space<vmem>>, vector<1x1x8x96xf32>
    %275 = vector.shape_cast %274 : vector<1x1x8x96xf32> to vector<8x96xf32>
    %c0_464 = arith.constant 0 : index
    %c10_465 = arith.constant 10 : index
    %c0_466 = arith.constant 0 : index
    %c0_467 = arith.constant 0 : index
    %276 = vector.load %arg1[%c0_464, %c10_465, %c0_466, %c0_467] : memref<1x32x8x96xf32, #tpu.memory_space<vmem>>, vector<1x1x8x96xf32>
    %277 = vector.shape_cast %276 : vector<1x1x8x96xf32> to vector<8x96xf32>
    %c0_468 = arith.constant 0 : index
    %c12_469 = arith.constant 12 : index
    %c0_470 = arith.constant 0 : index
    %c0_471 = arith.constant 0 : index
    %278 = vector.load %arg1[%c0_468, %c12_469, %c0_470, %c0_471] : memref<1x32x8x96xf32, #tpu.memory_space<vmem>>, vector<1x1x8x96xf32>
    %279 = vector.shape_cast %278 : vector<1x1x8x96xf32> to vector<8x96xf32>
    %c0_472 = arith.constant 0 : index
    %c14_473 = arith.constant 14 : index
    %c0_474 = arith.constant 0 : index
    %c0_475 = arith.constant 0 : index
    %280 = vector.load %arg1[%c0_472, %c14_473, %c0_474, %c0_475] : memref<1x32x8x96xf32, #tpu.memory_space<vmem>>, vector<1x1x8x96xf32>
    %281 = vector.shape_cast %280 : vector<1x1x8x96xf32> to vector<8x96xf32>
    %c0_476 = arith.constant 0 : index
    %c16_477 = arith.constant 16 : index
    %c0_478 = arith.constant 0 : index
    %c0_479 = arith.constant 0 : index
    %282 = vector.load %arg1[%c0_476, %c16_477, %c0_478, %c0_479] : memref<1x32x8x96xf32, #tpu.memory_space<vmem>>, vector<1x1x8x96xf32>
    %283 = vector.shape_cast %282 : vector<1x1x8x96xf32> to vector<8x96xf32>
    %c0_480 = arith.constant 0 : index
    %c18_481 = arith.constant 18 : index
    %c0_482 = arith.constant 0 : index
    %c0_483 = arith.constant 0 : index
    %284 = vector.load %arg1[%c0_480, %c18_481, %c0_482, %c0_483] : memref<1x32x8x96xf32, #tpu.memory_space<vmem>>, vector<1x1x8x96xf32>
    %285 = vector.shape_cast %284 : vector<1x1x8x96xf32> to vector<8x96xf32>
    %c0_484 = arith.constant 0 : index
    %c20_485 = arith.constant 20 : index
    %c0_486 = arith.constant 0 : index
    %c0_487 = arith.constant 0 : index
    %286 = vector.load %arg1[%c0_484, %c20_485, %c0_486, %c0_487] : memref<1x32x8x96xf32, #tpu.memory_space<vmem>>, vector<1x1x8x96xf32>
    %287 = vector.shape_cast %286 : vector<1x1x8x96xf32> to vector<8x96xf32>
    %c0_488 = arith.constant 0 : index
    %c22_489 = arith.constant 22 : index
    %c0_490 = arith.constant 0 : index
    %c0_491 = arith.constant 0 : index
    %288 = vector.load %arg1[%c0_488, %c22_489, %c0_490, %c0_491] : memref<1x32x8x96xf32, #tpu.memory_space<vmem>>, vector<1x1x8x96xf32>
    %289 = vector.shape_cast %288 : vector<1x1x8x96xf32> to vector<8x96xf32>
    %c0_492 = arith.constant 0 : index
    %c24_493 = arith.constant 24 : index
    %c0_494 = arith.constant 0 : index
    %c0_495 = arith.constant 0 : index
    %290 = vector.load %arg1[%c0_492, %c24_493, %c0_494, %c0_495] : memref<1x32x8x96xf32, #tpu.memory_space<vmem>>, vector<1x1x8x96xf32>
    %291 = vector.shape_cast %290 : vector<1x1x8x96xf32> to vector<8x96xf32>
    %c0_496 = arith.constant 0 : index
    %c26_497 = arith.constant 26 : index
    %c0_498 = arith.constant 0 : index
    %c0_499 = arith.constant 0 : index
    %292 = vector.load %arg1[%c0_496, %c26_497, %c0_498, %c0_499] : memref<1x32x8x96xf32, #tpu.memory_space<vmem>>, vector<1x1x8x96xf32>
    %293 = vector.shape_cast %292 : vector<1x1x8x96xf32> to vector<8x96xf32>
    %c0_500 = arith.constant 0 : index
    %c28_501 = arith.constant 28 : index
    %c0_502 = arith.constant 0 : index
    %c0_503 = arith.constant 0 : index
    %294 = vector.load %arg1[%c0_500, %c28_501, %c0_502, %c0_503] : memref<1x32x8x96xf32, #tpu.memory_space<vmem>>, vector<1x1x8x96xf32>
    %295 = vector.shape_cast %294 : vector<1x1x8x96xf32> to vector<8x96xf32>
    %c0_504 = arith.constant 0 : index
    %c30_505 = arith.constant 30 : index
    %c0_506 = arith.constant 0 : index
    %c0_507 = arith.constant 0 : index
    %296 = vector.load %arg1[%c0_504, %c30_505, %c0_506, %c0_507] : memref<1x32x8x96xf32, #tpu.memory_space<vmem>>, vector<1x1x8x96xf32>
    %297 = vector.shape_cast %296 : vector<1x1x8x96xf32> to vector<8x96xf32>
    %298 = tpu.concatenate %271, %273, %275, %277, %279, %281, %283, %285, %287, %289, %291, %293, %295, %297 in 0 : vector<8x96xf32>, vector<8x96xf32>, vector<8x96xf32>, vector<8x96xf32>, vector<8x96xf32>, vector<8x96xf32>, vector<8x96xf32>, vector<8x96xf32>, vector<8x96xf32>, vector<8x96xf32>, vector<8x96xf32>, vector<8x96xf32>, vector<8x96xf32>, vector<8x96xf32> -> vector<112x96xf32>
    %c3_508 = arith.constant 3 : index
    %c0_509 = arith.constant 0 : index
    %c0_510 = arith.constant 0 : index
    %299 = vector.load %arg2[%c3_508, %c0_509, %c0_510] : memref<5x96x256xf32, #tpu.memory_space<vmem>>, vector<1x96x256xf32>
    %300 = vector.shape_cast %299 : vector<1x96x256xf32> to vector<96x256xf32>
    %cst_511 = arith.constant dense<0.000000e+00> : vector<112x256xf32>
    %301 = tpu.matmul %298, %300, %cst_511 {dimension_numbers = #tpu.dot_dimension_numbers<[1], [0], [0], [1], [0, 0, 1, 1], [], []>} : vector<112x96xf32>, vector<96x256xf32>, vector<112x256xf32> -> vector<112x256xf32>
    %302 = arith.addf %269, %301 : vector<112x256xf32>
    %c0_512 = arith.constant 0 : index
    %c5_513 = arith.constant 5 : index
    %c0_514 = arith.constant 0 : index
    %c0_515 = arith.constant 0 : index
    %303 = vector.load %arg1[%c0_512, %c5_513, %c0_514, %c0_515] : memref<1x32x8x96xf32, #tpu.memory_space<vmem>>, vector<1x1x8x96xf32>
    %304 = vector.shape_cast %303 : vector<1x1x8x96xf32> to vector<8x96xf32>
    %c0_516 = arith.constant 0 : index
    %c7_517 = arith.constant 7 : index
    %c0_518 = arith.constant 0 : index
    %c0_519 = arith.constant 0 : index
    %305 = vector.load %arg1[%c0_516, %c7_517, %c0_518, %c0_519] : memref<1x32x8x96xf32, #tpu.memory_space<vmem>>, vector<1x1x8x96xf32>
    %306 = vector.shape_cast %305 : vector<1x1x8x96xf32> to vector<8x96xf32>
    %c0_520 = arith.constant 0 : index
    %c9_521 = arith.constant 9 : index
    %c0_522 = arith.constant 0 : index
    %c0_523 = arith.constant 0 : index
    %307 = vector.load %arg1[%c0_520, %c9_521, %c0_522, %c0_523] : memref<1x32x8x96xf32, #tpu.memory_space<vmem>>, vector<1x1x8x96xf32>
    %308 = vector.shape_cast %307 : vector<1x1x8x96xf32> to vector<8x96xf32>
    %c0_524 = arith.constant 0 : index
    %c11_525 = arith.constant 11 : index
    %c0_526 = arith.constant 0 : index
    %c0_527 = arith.constant 0 : index
    %309 = vector.load %arg1[%c0_524, %c11_525, %c0_526, %c0_527] : memref<1x32x8x96xf32, #tpu.memory_space<vmem>>, vector<1x1x8x96xf32>
    %310 = vector.shape_cast %309 : vector<1x1x8x96xf32> to vector<8x96xf32>
    %c0_528 = arith.constant 0 : index
    %c13_529 = arith.constant 13 : index
    %c0_530 = arith.constant 0 : index
    %c0_531 = arith.constant 0 : index
    %311 = vector.load %arg1[%c0_528, %c13_529, %c0_530, %c0_531] : memref<1x32x8x96xf32, #tpu.memory_space<vmem>>, vector<1x1x8x96xf32>
    %312 = vector.shape_cast %311 : vector<1x1x8x96xf32> to vector<8x96xf32>
    %c0_532 = arith.constant 0 : index
    %c15_533 = arith.constant 15 : index
    %c0_534 = arith.constant 0 : index
    %c0_535 = arith.constant 0 : index
    %313 = vector.load %arg1[%c0_532, %c15_533, %c0_534, %c0_535] : memref<1x32x8x96xf32, #tpu.memory_space<vmem>>, vector<1x1x8x96xf32>
    %314 = vector.shape_cast %313 : vector<1x1x8x96xf32> to vector<8x96xf32>
    %c0_536 = arith.constant 0 : index
    %c17_537 = arith.constant 17 : index
    %c0_538 = arith.constant 0 : index
    %c0_539 = arith.constant 0 : index
    %315 = vector.load %arg1[%c0_536, %c17_537, %c0_538, %c0_539] : memref<1x32x8x96xf32, #tpu.memory_space<vmem>>, vector<1x1x8x96xf32>
    %316 = vector.shape_cast %315 : vector<1x1x8x96xf32> to vector<8x96xf32>
    %c0_540 = arith.constant 0 : index
    %c19_541 = arith.constant 19 : index
    %c0_542 = arith.constant 0 : index
    %c0_543 = arith.constant 0 : index
    %317 = vector.load %arg1[%c0_540, %c19_541, %c0_542, %c0_543] : memref<1x32x8x96xf32, #tpu.memory_space<vmem>>, vector<1x1x8x96xf32>
    %318 = vector.shape_cast %317 : vector<1x1x8x96xf32> to vector<8x96xf32>
    %c0_544 = arith.constant 0 : index
    %c21_545 = arith.constant 21 : index
    %c0_546 = arith.constant 0 : index
    %c0_547 = arith.constant 0 : index
    %319 = vector.load %arg1[%c0_544, %c21_545, %c0_546, %c0_547] : memref<1x32x8x96xf32, #tpu.memory_space<vmem>>, vector<1x1x8x96xf32>
    %320 = vector.shape_cast %319 : vector<1x1x8x96xf32> to vector<8x96xf32>
    %c0_548 = arith.constant 0 : index
    %c23_549 = arith.constant 23 : index
    %c0_550 = arith.constant 0 : index
    %c0_551 = arith.constant 0 : index
    %321 = vector.load %arg1[%c0_548, %c23_549, %c0_550, %c0_551] : memref<1x32x8x96xf32, #tpu.memory_space<vmem>>, vector<1x1x8x96xf32>
    %322 = vector.shape_cast %321 : vector<1x1x8x96xf32> to vector<8x96xf32>
    %c0_552 = arith.constant 0 : index
    %c25_553 = arith.constant 25 : index
    %c0_554 = arith.constant 0 : index
    %c0_555 = arith.constant 0 : index
    %323 = vector.load %arg1[%c0_552, %c25_553, %c0_554, %c0_555] : memref<1x32x8x96xf32, #tpu.memory_space<vmem>>, vector<1x1x8x96xf32>
    %324 = vector.shape_cast %323 : vector<1x1x8x96xf32> to vector<8x96xf32>
    %c0_556 = arith.constant 0 : index
    %c27_557 = arith.constant 27 : index
    %c0_558 = arith.constant 0 : index
    %c0_559 = arith.constant 0 : index
    %325 = vector.load %arg1[%c0_556, %c27_557, %c0_558, %c0_559] : memref<1x32x8x96xf32, #tpu.memory_space<vmem>>, vector<1x1x8x96xf32>
    %326 = vector.shape_cast %325 : vector<1x1x8x96xf32> to vector<8x96xf32>
    %c0_560 = arith.constant 0 : index
    %c29_561 = arith.constant 29 : index
    %c0_562 = arith.constant 0 : index
    %c0_563 = arith.constant 0 : index
    %327 = vector.load %arg1[%c0_560, %c29_561, %c0_562, %c0_563] : memref<1x32x8x96xf32, #tpu.memory_space<vmem>>, vector<1x1x8x96xf32>
    %328 = vector.shape_cast %327 : vector<1x1x8x96xf32> to vector<8x96xf32>
    %c0_564 = arith.constant 0 : index
    %c31 = arith.constant 31 : index
    %c0_565 = arith.constant 0 : index
    %c0_566 = arith.constant 0 : index
    %329 = vector.load %arg1[%c0_564, %c31, %c0_565, %c0_566] : memref<1x32x8x96xf32, #tpu.memory_space<vmem>>, vector<1x1x8x96xf32>
    %330 = vector.shape_cast %329 : vector<1x1x8x96xf32> to vector<8x96xf32>
    %331 = tpu.concatenate %304, %306, %308, %310, %312, %314, %316, %318, %320, %322, %324, %326, %328, %330 in 0 : vector<8x96xf32>, vector<8x96xf32>, vector<8x96xf32>, vector<8x96xf32>, vector<8x96xf32>, vector<8x96xf32>, vector<8x96xf32>, vector<8x96xf32>, vector<8x96xf32>, vector<8x96xf32>, vector<8x96xf32>, vector<8x96xf32>, vector<8x96xf32>, vector<8x96xf32> -> vector<112x96xf32>
    %c4_567 = arith.constant 4 : index
    %c0_568 = arith.constant 0 : index
    %c0_569 = arith.constant 0 : index
    %332 = vector.load %arg2[%c4_567, %c0_568, %c0_569] : memref<5x96x256xf32, #tpu.memory_space<vmem>>, vector<1x96x256xf32>
    %333 = vector.shape_cast %332 : vector<1x96x256xf32> to vector<96x256xf32>
    %cst_570 = arith.constant dense<0.000000e+00> : vector<112x256xf32>
    %334 = tpu.matmul %331, %333, %cst_570 {dimension_numbers = #tpu.dot_dimension_numbers<[1], [0], [0], [1], [0, 0, 1, 1], [], []>} : vector<112x96xf32>, vector<96x256xf32>, vector<112x256xf32> -> vector<112x256xf32>
    %335 = arith.addf %302, %334 : vector<112x256xf32>
    %336 = vector.extract_strided_slice %335 {offsets = [0, 0], sizes = [112, 84], strides = [1, 1]} : vector<112x256xf32> to vector<112x84xf32>
    %337 = vector.extract_strided_slice %335 {offsets = [0, 128], sizes = [112, 84], strides = [1, 1]} : vector<112x256xf32> to vector<112x84xf32>
    %338 = arith.maximumf %336, %337 : vector<112x84xf32>
    %c0_571 = arith.constant 0 : index
    %c0_572 = arith.constant 0 : index
    %339 = vector.load %arg13[%c0_571, %c0_572] : memref<112x84xf32, #tpu.memory_space<vmem>>, vector<112x84xf32>
    %340 = arith.maximumf %339, %338 : vector<112x84xf32>
    %c0_573 = arith.constant 0 : index
    %c0_574 = arith.constant 0 : index
    %341 = vector.load %arg3[%c0_573, %c0_574] : memref<1x84xf32, #tpu.memory_space<vmem>>, vector<1x84xf32>
    %342 = vector.broadcast %341 : vector<1x84xf32> to vector<112x84xf32>
    %343 = arith.addf %340, %342 : vector<112x84xf32>
    %cst_575 = arith.constant 0.000000e+00 : f32
    %344 = vector.broadcast %cst_575 : f32 to vector<112x84xf32>
    %345 = arith.maximumf %343, %344 : vector<112x84xf32>
    %c0_576 = arith.constant 0 : index
    %c0_577 = arith.constant 0 : index
    %346 = vector.load %arg13[%c0_576, %c0_577] : memref<112x84xf32, #tpu.memory_space<vmem>>, vector<112x84xf32>
    tpu.vector_store %arg13[%c0_576, %c0_577], %345 {strides = array<i32>} : memref<112x84xf32, #tpu.memory_space<vmem>>, vector<112x84xf32>,
    %cst_578 = arith.constant 0.000000e+00 : f32
    %347 = vector.broadcast %cst_578 : f32 to vector<40x256xf32>
    %c0_579 = arith.constant 0 : index
    %c0_580 = arith.constant 0 : index
    %348 = vector.load %arg13[%c0_579, %c0_580] : memref<112x84xf32, #tpu.memory_space<vmem>>, vector<8x84xf32>
    %c16_581 = arith.constant 16 : index
    %c0_582 = arith.constant 0 : index
    %349 = vector.load %arg13[%c16_581, %c0_582] : memref<112x84xf32, #tpu.memory_space<vmem>>, vector<8x84xf32>
    %c32 = arith.constant 32 : index
    %c0_583 = arith.constant 0 : index
    %350 = vector.load %arg13[%c32, %c0_583] : memref<112x84xf32, #tpu.memory_space<vmem>>, vector<8x84xf32>
    %c48 = arith.constant 48 : index
    %c0_584 = arith.constant 0 : index
    %351 = vector.load %arg13[%c48, %c0_584] : memref<112x84xf32, #tpu.memory_space<vmem>>, vector<8x84xf32>
    %c64 = arith.constant 64 : index
    %c0_585 = arith.constant 0 : index
    %352 = vector.load %arg13[%c64, %c0_585] : memref<112x84xf32, #tpu.memory_space<vmem>>, vector<8x84xf32>
    %353 = tpu.concatenate %348, %349, %350, %351, %352 in 0 : vector<8x84xf32>, vector<8x84xf32>, vector<8x84xf32>, vector<8x84xf32>, vector<8x84xf32> -> vector<40x84xf32>
    %c0_586 = arith.constant 0 : index
    %c0_587 = arith.constant 0 : index
    %c0_588 = arith.constant 0 : index
    %354 = vector.load %arg4[%c0_586, %c0_587, %c0_588] : memref<5x84x256xf32, #tpu.memory_space<vmem>>, vector<1x84x256xf32>
    %355 = vector.shape_cast %354 : vector<1x84x256xf32> to vector<84x256xf32>
    %cst_589 = arith.constant dense<0.000000e+00> : vector<40x256xf32>
    %356 = tpu.matmul %353, %355, %cst_589 {dimension_numbers = #tpu.dot_dimension_numbers<[1], [0], [0], [1], [0, 0, 1, 1], [], []>} : vector<40x84xf32>, vector<84x256xf32>, vector<40x256xf32> -> vector<40x256xf32>
    %357 = arith.addf %347, %356 : vector<40x256xf32>
    %c8_590 = arith.constant 8 : index
    %c0_591 = arith.constant 0 : index
    %358 = vector.load %arg13[%c8_590, %c0_591] : memref<112x84xf32, #tpu.memory_space<vmem>>, vector<8x84xf32>
    %c24_592 = arith.constant 24 : index
    %c0_593 = arith.constant 0 : index
    %359 = vector.load %arg13[%c24_592, %c0_593] : memref<112x84xf32, #tpu.memory_space<vmem>>, vector<8x84xf32>
    %c40 = arith.constant 40 : index
    %c0_594 = arith.constant 0 : index
    %360 = vector.load %arg13[%c40, %c0_594] : memref<112x84xf32, #tpu.memory_space<vmem>>, vector<8x84xf32>
    %c56 = arith.constant 56 : index
    %c0_595 = arith.constant 0 : index
    %361 = vector.load %arg13[%c56, %c0_595] : memref<112x84xf32, #tpu.memory_space<vmem>>, vector<8x84xf32>
    %c72 = arith.constant 72 : index
    %c0_596 = arith.constant 0 : index
    %362 = vector.load %arg13[%c72, %c0_596] : memref<112x84xf32, #tpu.memory_space<vmem>>, vector<8x84xf32>
    %363 = tpu.concatenate %358, %359, %360, %361, %362 in 0 : vector<8x84xf32>, vector<8x84xf32>, vector<8x84xf32>, vector<8x84xf32>, vector<8x84xf32> -> vector<40x84xf32>
    %c1_597 = arith.constant 1 : index
    %c0_598 = arith.constant 0 : index
    %c0_599 = arith.constant 0 : index
    %364 = vector.load %arg4[%c1_597, %c0_598, %c0_599] : memref<5x84x256xf32, #tpu.memory_space<vmem>>, vector<1x84x256xf32>
    %365 = vector.shape_cast %364 : vector<1x84x256xf32> to vector<84x256xf32>
    %cst_600 = arith.constant dense<0.000000e+00> : vector<40x256xf32>
    %366 = tpu.matmul %363, %365, %cst_600 {dimension_numbers = #tpu.dot_dimension_numbers<[1], [0], [0], [1], [0, 0, 1, 1], [], []>} : vector<40x84xf32>, vector<84x256xf32>, vector<40x256xf32> -> vector<40x256xf32>
    %367 = arith.addf %357, %366 : vector<40x256xf32>
    %c16_601 = arith.constant 16 : index
    %c0_602 = arith.constant 0 : index
    %368 = vector.load %arg13[%c16_601, %c0_602] : memref<112x84xf32, #tpu.memory_space<vmem>>, vector<8x84xf32>
    %c32_603 = arith.constant 32 : index
    %c0_604 = arith.constant 0 : index
    %369 = vector.load %arg13[%c32_603, %c0_604] : memref<112x84xf32, #tpu.memory_space<vmem>>, vector<8x84xf32>
    %c48_605 = arith.constant 48 : index
    %c0_606 = arith.constant 0 : index
    %370 = vector.load %arg13[%c48_605, %c0_606] : memref<112x84xf32, #tpu.memory_space<vmem>>, vector<8x84xf32>
    %c64_607 = arith.constant 64 : index
    %c0_608 = arith.constant 0 : index
    %371 = vector.load %arg13[%c64_607, %c0_608] : memref<112x84xf32, #tpu.memory_space<vmem>>, vector<8x84xf32>
    %c80 = arith.constant 80 : index
    %c0_609 = arith.constant 0 : index
    %372 = vector.load %arg13[%c80, %c0_609] : memref<112x84xf32, #tpu.memory_space<vmem>>, vector<8x84xf32>
    %373 = tpu.concatenate %368, %369, %370, %371, %372 in 0 : vector<8x84xf32>, vector<8x84xf32>, vector<8x84xf32>, vector<8x84xf32>, vector<8x84xf32> -> vector<40x84xf32>
    %c2_610 = arith.constant 2 : index
    %c0_611 = arith.constant 0 : index
    %c0_612 = arith.constant 0 : index
    %374 = vector.load %arg4[%c2_610, %c0_611, %c0_612] : memref<5x84x256xf32, #tpu.memory_space<vmem>>, vector<1x84x256xf32>
    %375 = vector.shape_cast %374 : vector<1x84x256xf32> to vector<84x256xf32>
    %cst_613 = arith.constant dense<0.000000e+00> : vector<40x256xf32>
    %376 = tpu.matmul %373, %375, %cst_613 {dimension_numbers = #tpu.dot_dimension_numbers<[1], [0], [0], [1], [0, 0, 1, 1], [], []>} : vector<40x84xf32>, vector<84x256xf32>, vector<40x256xf32> -> vector<40x256xf32>
    %377 = arith.addf %367, %376 : vector<40x256xf32>
    %c24_614 = arith.constant 24 : index
    %c0_615 = arith.constant 0 : index
    %378 = vector.load %arg13[%c24_614, %c0_615] : memref<112x84xf32, #tpu.memory_space<vmem>>, vector<8x84xf32>
    %c40_616 = arith.constant 40 : index
    %c0_617 = arith.constant 0 : index
    %379 = vector.load %arg13[%c40_616, %c0_617] : memref<112x84xf32, #tpu.memory_space<vmem>>, vector<8x84xf32>
    %c56_618 = arith.constant 56 : index
    %c0_619 = arith.constant 0 : index
    %380 = vector.load %arg13[%c56_618, %c0_619] : memref<112x84xf32, #tpu.memory_space<vmem>>, vector<8x84xf32>
    %c72_620 = arith.constant 72 : index
    %c0_621 = arith.constant 0 : index
    %381 = vector.load %arg13[%c72_620, %c0_621] : memref<112x84xf32, #tpu.memory_space<vmem>>, vector<8x84xf32>
    %c88 = arith.constant 88 : index
    %c0_622 = arith.constant 0 : index
    %382 = vector.load %arg13[%c88, %c0_622] : memref<112x84xf32, #tpu.memory_space<vmem>>, vector<8x84xf32>
    %383 = tpu.concatenate %378, %379, %380, %381, %382 in 0 : vector<8x84xf32>, vector<8x84xf32>, vector<8x84xf32>, vector<8x84xf32>, vector<8x84xf32> -> vector<40x84xf32>
    %c3_623 = arith.constant 3 : index
    %c0_624 = arith.constant 0 : index
    %c0_625 = arith.constant 0 : index
    %384 = vector.load %arg4[%c3_623, %c0_624, %c0_625] : memref<5x84x256xf32, #tpu.memory_space<vmem>>, vector<1x84x256xf32>
    %385 = vector.shape_cast %384 : vector<1x84x256xf32> to vector<84x256xf32>
    %cst_626 = arith.constant dense<0.000000e+00> : vector<40x256xf32>
    %386 = tpu.matmul %383, %385, %cst_626 {dimension_numbers = #tpu.dot_dimension_numbers<[1], [0], [0], [1], [0, 0, 1, 1], [], []>} : vector<40x84xf32>, vector<84x256xf32>, vector<40x256xf32> -> vector<40x256xf32>
    %387 = arith.addf %377, %386 : vector<40x256xf32>
    %c32_627 = arith.constant 32 : index
    %c0_628 = arith.constant 0 : index
    %388 = vector.load %arg13[%c32_627, %c0_628] : memref<112x84xf32, #tpu.memory_space<vmem>>, vector<8x84xf32>
    %c48_629 = arith.constant 48 : index
    %c0_630 = arith.constant 0 : index
    %389 = vector.load %arg13[%c48_629, %c0_630] : memref<112x84xf32, #tpu.memory_space<vmem>>, vector<8x84xf32>
    %c64_631 = arith.constant 64 : index
    %c0_632 = arith.constant 0 : index
    %390 = vector.load %arg13[%c64_631, %c0_632] : memref<112x84xf32, #tpu.memory_space<vmem>>, vector<8x84xf32>
    %c80_633 = arith.constant 80 : index
    %c0_634 = arith.constant 0 : index
    %391 = vector.load %arg13[%c80_633, %c0_634] : memref<112x84xf32, #tpu.memory_space<vmem>>, vector<8x84xf32>
    %c96 = arith.constant 96 : index
    %c0_635 = arith.constant 0 : index
    %392 = vector.load %arg13[%c96, %c0_635] : memref<112x84xf32, #tpu.memory_space<vmem>>, vector<8x84xf32>
    %393 = tpu.concatenate %388, %389, %390, %391, %392 in 0 : vector<8x84xf32>, vector<8x84xf32>, vector<8x84xf32>, vector<8x84xf32>, vector<8x84xf32> -> vector<40x84xf32>
    %c4_636 = arith.constant 4 : index
    %c0_637 = arith.constant 0 : index
    %c0_638 = arith.constant 0 : index
    %394 = vector.load %arg4[%c4_636, %c0_637, %c0_638] : memref<5x84x256xf32, #tpu.memory_space<vmem>>, vector<1x84x256xf32>
    %395 = vector.shape_cast %394 : vector<1x84x256xf32> to vector<84x256xf32>
    %cst_639 = arith.constant dense<0.000000e+00> : vector<40x256xf32>
    %396 = tpu.matmul %393, %395, %cst_639 {dimension_numbers = #tpu.dot_dimension_numbers<[1], [0], [0], [1], [0, 0, 1, 1], [], []>} : vector<40x84xf32>, vector<84x256xf32>, vector<40x256xf32> -> vector<40x256xf32>
    %397 = arith.addf %387, %396 : vector<40x256xf32>
    %398 = vector.extract_strided_slice %397 {offsets = [0, 0], sizes = [40, 80], strides = [1, 1]} : vector<40x256xf32> to vector<40x80xf32>
    %399 = vector.extract_strided_slice %397 {offsets = [0, 128], sizes = [40, 80], strides = [1, 1]} : vector<40x256xf32> to vector<40x80xf32>
    %400 = arith.maximumf %398, %399 : vector<40x80xf32>
    %cst_640 = arith.constant 0.000000e+00 : f32
    %401 = vector.broadcast %cst_640 : f32 to vector<40x256xf32>
    %c8_641 = arith.constant 8 : index
    %c0_642 = arith.constant 0 : index
    %402 = vector.load %arg13[%c8_641, %c0_642] : memref<112x84xf32, #tpu.memory_space<vmem>>, vector<8x84xf32>
    %c24_643 = arith.constant 24 : index
    %c0_644 = arith.constant 0 : index
    %403 = vector.load %arg13[%c24_643, %c0_644] : memref<112x84xf32, #tpu.memory_space<vmem>>, vector<8x84xf32>
    %c40_645 = arith.constant 40 : index
    %c0_646 = arith.constant 0 : index
    %404 = vector.load %arg13[%c40_645, %c0_646] : memref<112x84xf32, #tpu.memory_space<vmem>>, vector<8x84xf32>
    %c56_647 = arith.constant 56 : index
    %c0_648 = arith.constant 0 : index
    %405 = vector.load %arg13[%c56_647, %c0_648] : memref<112x84xf32, #tpu.memory_space<vmem>>, vector<8x84xf32>
    %c72_649 = arith.constant 72 : index
    %c0_650 = arith.constant 0 : index
    %406 = vector.load %arg13[%c72_649, %c0_650] : memref<112x84xf32, #tpu.memory_space<vmem>>, vector<8x84xf32>
    %407 = tpu.concatenate %402, %403, %404, %405, %406 in 0 : vector<8x84xf32>, vector<8x84xf32>, vector<8x84xf32>, vector<8x84xf32>, vector<8x84xf32> -> vector<40x84xf32>
    %c0_651 = arith.constant 0 : index
    %c0_652 = arith.constant 0 : index
    %c0_653 = arith.constant 0 : index
    %408 = vector.load %arg4[%c0_651, %c0_652, %c0_653] : memref<5x84x256xf32, #tpu.memory_space<vmem>>, vector<1x84x256xf32>
    %409 = vector.shape_cast %408 : vector<1x84x256xf32> to vector<84x256xf32>
    %cst_654 = arith.constant dense<0.000000e+00> : vector<40x256xf32>
    %410 = tpu.matmul %407, %409, %cst_654 {dimension_numbers = #tpu.dot_dimension_numbers<[1], [0], [0], [1], [0, 0, 1, 1], [], []>} : vector<40x84xf32>, vector<84x256xf32>, vector<40x256xf32> -> vector<40x256xf32>
    %411 = arith.addf %401, %410 : vector<40x256xf32>
    %c16_655 = arith.constant 16 : index
    %c0_656 = arith.constant 0 : index
    %412 = vector.load %arg13[%c16_655, %c0_656] : memref<112x84xf32, #tpu.memory_space<vmem>>, vector<8x84xf32>
    %c32_657 = arith.constant 32 : index
    %c0_658 = arith.constant 0 : index
    %413 = vector.load %arg13[%c32_657, %c0_658] : memref<112x84xf32, #tpu.memory_space<vmem>>, vector<8x84xf32>
    %c48_659 = arith.constant 48 : index
    %c0_660 = arith.constant 0 : index
    %414 = vector.load %arg13[%c48_659, %c0_660] : memref<112x84xf32, #tpu.memory_space<vmem>>, vector<8x84xf32>
    %c64_661 = arith.constant 64 : index
    %c0_662 = arith.constant 0 : index
    %415 = vector.load %arg13[%c64_661, %c0_662] : memref<112x84xf32, #tpu.memory_space<vmem>>, vector<8x84xf32>
    %c80_663 = arith.constant 80 : index
    %c0_664 = arith.constant 0 : index
    %416 = vector.load %arg13[%c80_663, %c0_664] : memref<112x84xf32, #tpu.memory_space<vmem>>, vector<8x84xf32>
    %417 = tpu.concatenate %412, %413, %414, %415, %416 in 0 : vector<8x84xf32>, vector<8x84xf32>, vector<8x84xf32>, vector<8x84xf32>, vector<8x84xf32> -> vector<40x84xf32>
    %c1_665 = arith.constant 1 : index
    %c0_666 = arith.constant 0 : index
    %c0_667 = arith.constant 0 : index
    %418 = vector.load %arg4[%c1_665, %c0_666, %c0_667] : memref<5x84x256xf32, #tpu.memory_space<vmem>>, vector<1x84x256xf32>
    %419 = vector.shape_cast %418 : vector<1x84x256xf32> to vector<84x256xf32>
    %cst_668 = arith.constant dense<0.000000e+00> : vector<40x256xf32>
    %420 = tpu.matmul %417, %419, %cst_668 {dimension_numbers = #tpu.dot_dimension_numbers<[1], [0], [0], [1], [0, 0, 1, 1], [], []>} : vector<40x84xf32>, vector<84x256xf32>, vector<40x256xf32> -> vector<40x256xf32>
    %421 = arith.addf %411, %420 : vector<40x256xf32>
    %c24_669 = arith.constant 24 : index
    %c0_670 = arith.constant 0 : index
    %422 = vector.load %arg13[%c24_669, %c0_670] : memref<112x84xf32, #tpu.memory_space<vmem>>, vector<8x84xf32>
    %c40_671 = arith.constant 40 : index
    %c0_672 = arith.constant 0 : index
    %423 = vector.load %arg13[%c40_671, %c0_672] : memref<112x84xf32, #tpu.memory_space<vmem>>, vector<8x84xf32>
    %c56_673 = arith.constant 56 : index
    %c0_674 = arith.constant 0 : index
    %424 = vector.load %arg13[%c56_673, %c0_674] : memref<112x84xf32, #tpu.memory_space<vmem>>, vector<8x84xf32>
    %c72_675 = arith.constant 72 : index
    %c0_676 = arith.constant 0 : index
    %425 = vector.load %arg13[%c72_675, %c0_676] : memref<112x84xf32, #tpu.memory_space<vmem>>, vector<8x84xf32>
    %c88_677 = arith.constant 88 : index
    %c0_678 = arith.constant 0 : index
    %426 = vector.load %arg13[%c88_677, %c0_678] : memref<112x84xf32, #tpu.memory_space<vmem>>, vector<8x84xf32>
    %427 = tpu.concatenate %422, %423, %424, %425, %426 in 0 : vector<8x84xf32>, vector<8x84xf32>, vector<8x84xf32>, vector<8x84xf32>, vector<8x84xf32> -> vector<40x84xf32>
    %c2_679 = arith.constant 2 : index
    %c0_680 = arith.constant 0 : index
    %c0_681 = arith.constant 0 : index
    %428 = vector.load %arg4[%c2_679, %c0_680, %c0_681] : memref<5x84x256xf32, #tpu.memory_space<vmem>>, vector<1x84x256xf32>
    %429 = vector.shape_cast %428 : vector<1x84x256xf32> to vector<84x256xf32>
    %cst_682 = arith.constant dense<0.000000e+00> : vector<40x256xf32>
    %430 = tpu.matmul %427, %429, %cst_682 {dimension_numbers = #tpu.dot_dimension_numbers<[1], [0], [0], [1], [0, 0, 1, 1], [], []>} : vector<40x84xf32>, vector<84x256xf32>, vector<40x256xf32> -> vector<40x256xf32>
    %431 = arith.addf %421, %430 : vector<40x256xf32>
    %c32_683 = arith.constant 32 : index
    %c0_684 = arith.constant 0 : index
    %432 = vector.load %arg13[%c32_683, %c0_684] : memref<112x84xf32, #tpu.memory_space<vmem>>, vector<8x84xf32>
    %c48_685 = arith.constant 48 : index
    %c0_686 = arith.constant 0 : index
    %433 = vector.load %arg13[%c48_685, %c0_686] : memref<112x84xf32, #tpu.memory_space<vmem>>, vector<8x84xf32>
    %c64_687 = arith.constant 64 : index
    %c0_688 = arith.constant 0 : index
    %434 = vector.load %arg13[%c64_687, %c0_688] : memref<112x84xf32, #tpu.memory_space<vmem>>, vector<8x84xf32>
    %c80_689 = arith.constant 80 : index
    %c0_690 = arith.constant 0 : index
    %435 = vector.load %arg13[%c80_689, %c0_690] : memref<112x84xf32, #tpu.memory_space<vmem>>, vector<8x84xf32>
    %c96_691 = arith.constant 96 : index
    %c0_692 = arith.constant 0 : index
    %436 = vector.load %arg13[%c96_691, %c0_692] : memref<112x84xf32, #tpu.memory_space<vmem>>, vector<8x84xf32>
    %437 = tpu.concatenate %432, %433, %434, %435, %436 in 0 : vector<8x84xf32>, vector<8x84xf32>, vector<8x84xf32>, vector<8x84xf32>, vector<8x84xf32> -> vector<40x84xf32>
    %c3_693 = arith.constant 3 : index
    %c0_694 = arith.constant 0 : index
    %c0_695 = arith.constant 0 : index
    %438 = vector.load %arg4[%c3_693, %c0_694, %c0_695] : memref<5x84x256xf32, #tpu.memory_space<vmem>>, vector<1x84x256xf32>
    %439 = vector.shape_cast %438 : vector<1x84x256xf32> to vector<84x256xf32>
    %cst_696 = arith.constant dense<0.000000e+00> : vector<40x256xf32>
    %440 = tpu.matmul %437, %439, %cst_696 {dimension_numbers = #tpu.dot_dimension_numbers<[1], [0], [0], [1], [0, 0, 1, 1], [], []>} : vector<40x84xf32>, vector<84x256xf32>, vector<40x256xf32> -> vector<40x256xf32>
    %441 = arith.addf %431, %440 : vector<40x256xf32>
    %c40_697 = arith.constant 40 : index
    %c0_698 = arith.constant 0 : index
    %442 = vector.load %arg13[%c40_697, %c0_698] : memref<112x84xf32, #tpu.memory_space<vmem>>, vector<8x84xf32>
    %c56_699 = arith.constant 56 : index
    %c0_700 = arith.constant 0 : index
    %443 = vector.load %arg13[%c56_699, %c0_700] : memref<112x84xf32, #tpu.memory_space<vmem>>, vector<8x84xf32>
    %c72_701 = arith.constant 72 : index
    %c0_702 = arith.constant 0 : index
    %444 = vector.load %arg13[%c72_701, %c0_702] : memref<112x84xf32, #tpu.memory_space<vmem>>, vector<8x84xf32>
    %c88_703 = arith.constant 88 : index
    %c0_704 = arith.constant 0 : index
    %445 = vector.load %arg13[%c88_703, %c0_704] : memref<112x84xf32, #tpu.memory_space<vmem>>, vector<8x84xf32>
    %c104 = arith.constant 104 : index
    %c0_705 = arith.constant 0 : index
    %446 = vector.load %arg13[%c104, %c0_705] : memref<112x84xf32, #tpu.memory_space<vmem>>, vector<8x84xf32>
    %447 = tpu.concatenate %442, %443, %444, %445, %446 in 0 : vector<8x84xf32>, vector<8x84xf32>, vector<8x84xf32>, vector<8x84xf32>, vector<8x84xf32> -> vector<40x84xf32>
    %c4_706 = arith.constant 4 : index
    %c0_707 = arith.constant 0 : index
    %c0_708 = arith.constant 0 : index
    %448 = vector.load %arg4[%c4_706, %c0_707, %c0_708] : memref<5x84x256xf32, #tpu.memory_space<vmem>>, vector<1x84x256xf32>
    %449 = vector.shape_cast %448 : vector<1x84x256xf32> to vector<84x256xf32>
    %cst_709 = arith.constant dense<0.000000e+00> : vector<40x256xf32>
    %450 = tpu.matmul %447, %449, %cst_709 {dimension_numbers = #tpu.dot_dimension_numbers<[1], [0], [0], [1], [0, 0, 1, 1], [], []>} : vector<40x84xf32>, vector<84x256xf32>, vector<40x256xf32> -> vector<40x256xf32>
    %451 = arith.addf %441, %450 : vector<40x256xf32>
    %452 = vector.extract_strided_slice %451 {offsets = [0, 0], sizes = [40, 80], strides = [1, 1]} : vector<40x256xf32> to vector<40x80xf32>
    %453 = vector.extract_strided_slice %451 {offsets = [0, 128], sizes = [40, 80], strides = [1, 1]} : vector<40x256xf32> to vector<40x80xf32>
    %454 = arith.maximumf %452, %453 : vector<40x80xf32>
    %455 = arith.maximumf %400, %454 : vector<40x80xf32>
    %c0_710 = arith.constant 0 : index
    %c0_711 = arith.constant 0 : index
    %456 = vector.load %arg5[%c0_710, %c0_711] : memref<1x80xf32, #tpu.memory_space<vmem>>, vector<1x80xf32>
    %457 = vector.broadcast %456 : vector<1x80xf32> to vector<40x80xf32>
    %458 = arith.addf %455, %457 : vector<40x80xf32>
    %cst_712 = arith.constant 0.000000e+00 : f32
    %459 = vector.broadcast %cst_712 : f32 to vector<40x80xf32>
    %460 = arith.maximumf %458, %459 : vector<40x80xf32>
    %cst_713 = arith.constant 0.000000e+00 : f32
    %461 = vector.broadcast %cst_713 : f32 to vector<8x120xf32>
    %462 = vector.extract_strided_slice %460 {offsets = [0, 0], sizes = [8, 80], strides = [1, 1]} : vector<40x80xf32> to vector<8x80xf32>
    %c0_714 = arith.constant 0 : index
    %c0_715 = arith.constant 0 : index
    %c0_716 = arith.constant 0 : index
    %463 = vector.load %arg6[%c0_714, %c0_715, %c0_716] : memref<5x80x120xf32, #tpu.memory_space<vmem>>, vector<1x80x120xf32>
    %464 = vector.shape_cast %463 : vector<1x80x120xf32> to vector<80x120xf32>
    %cst_717 = arith.constant dense<0.000000e+00> : vector<8x120xf32>
    %465 = tpu.matmul %462, %464, %cst_717 {dimension_numbers = #tpu.dot_dimension_numbers<[1], [0], [0], [1], [0, 0, 1, 1], [], []>} : vector<8x80xf32>, vector<80x120xf32>, vector<8x120xf32> -> vector<8x120xf32>
    %466 = arith.addf %461, %465 : vector<8x120xf32>
    %467 = vector.extract_strided_slice %460 {offsets = [8, 0], sizes = [8, 80], strides = [1, 1]} : vector<40x80xf32> to vector<8x80xf32>
    %c1_718 = arith.constant 1 : index
    %c0_719 = arith.constant 0 : index
    %c0_720 = arith.constant 0 : index
    %468 = vector.load %arg6[%c1_718, %c0_719, %c0_720] : memref<5x80x120xf32, #tpu.memory_space<vmem>>, vector<1x80x120xf32>
    %469 = vector.shape_cast %468 : vector<1x80x120xf32> to vector<80x120xf32>
    %cst_721 = arith.constant dense<0.000000e+00> : vector<8x120xf32>
    %470 = tpu.matmul %467, %469, %cst_721 {dimension_numbers = #tpu.dot_dimension_numbers<[1], [0], [0], [1], [0, 0, 1, 1], [], []>} : vector<8x80xf32>, vector<80x120xf32>, vector<8x120xf32> -> vector<8x120xf32>
    %471 = arith.addf %466, %470 : vector<8x120xf32>
    %472 = vector.extract_strided_slice %460 {offsets = [16, 0], sizes = [8, 80], strides = [1, 1]} : vector<40x80xf32> to vector<8x80xf32>
    %c2_722 = arith.constant 2 : index
    %c0_723 = arith.constant 0 : index
    %c0_724 = arith.constant 0 : index
    %473 = vector.load %arg6[%c2_722, %c0_723, %c0_724] : memref<5x80x120xf32, #tpu.memory_space<vmem>>, vector<1x80x120xf32>
    %474 = vector.shape_cast %473 : vector<1x80x120xf32> to vector<80x120xf32>
    %cst_725 = arith.constant dense<0.000000e+00> : vector<8x120xf32>
    %475 = tpu.matmul %472, %474, %cst_725 {dimension_numbers = #tpu.dot_dimension_numbers<[1], [0], [0], [1], [0, 0, 1, 1], [], []>} : vector<8x80xf32>, vector<80x120xf32>, vector<8x120xf32> -> vector<8x120xf32>
    %476 = arith.addf %471, %475 : vector<8x120xf32>
    %477 = vector.extract_strided_slice %460 {offsets = [24, 0], sizes = [8, 80], strides = [1, 1]} : vector<40x80xf32> to vector<8x80xf32>
    %c3_726 = arith.constant 3 : index
    %c0_727 = arith.constant 0 : index
    %c0_728 = arith.constant 0 : index
    %478 = vector.load %arg6[%c3_726, %c0_727, %c0_728] : memref<5x80x120xf32, #tpu.memory_space<vmem>>, vector<1x80x120xf32>
    %479 = vector.shape_cast %478 : vector<1x80x120xf32> to vector<80x120xf32>
    %cst_729 = arith.constant dense<0.000000e+00> : vector<8x120xf32>
    %480 = tpu.matmul %477, %479, %cst_729 {dimension_numbers = #tpu.dot_dimension_numbers<[1], [0], [0], [1], [0, 0, 1, 1], [], []>} : vector<8x80xf32>, vector<80x120xf32>, vector<8x120xf32> -> vector<8x120xf32>
    %481 = arith.addf %476, %480 : vector<8x120xf32>
    %482 = vector.extract_strided_slice %460 {offsets = [32, 0], sizes = [8, 80], strides = [1, 1]} : vector<40x80xf32> to vector<8x80xf32>
    %c4_730 = arith.constant 4 : index
    %c0_731 = arith.constant 0 : index
    %c0_732 = arith.constant 0 : index
    %483 = vector.load %arg6[%c4_730, %c0_731, %c0_732] : memref<5x80x120xf32, #tpu.memory_space<vmem>>, vector<1x80x120xf32>
    %484 = vector.shape_cast %483 : vector<1x80x120xf32> to vector<80x120xf32>
    %cst_733 = arith.constant dense<0.000000e+00> : vector<8x120xf32>
    %485 = tpu.matmul %482, %484, %cst_733 {dimension_numbers = #tpu.dot_dimension_numbers<[1], [0], [0], [1], [0, 0, 1, 1], [], []>} : vector<8x80xf32>, vector<80x120xf32>, vector<8x120xf32> -> vector<8x120xf32>
    %486 = arith.addf %481, %485 : vector<8x120xf32>
    %c0_734 = arith.constant 0 : index
    %c0_735 = arith.constant 0 : index
    %487 = vector.load %arg7[%c0_734, %c0_735] : memref<1x120xf32, #tpu.memory_space<vmem>>, vector<1x120xf32>
    %488 = vector.broadcast %487 : vector<1x120xf32> to vector<8x120xf32>
    %489 = arith.addf %486, %488 : vector<8x120xf32>
    %cst_736 = arith.constant 0.000000e+00 : f32
    %490 = vector.broadcast %cst_736 : f32 to vector<8x120xf32>
    %491 = arith.maximumf %489, %490 : vector<8x120xf32>
    %c0_737 = arith.constant 0 : index
    %c0_738 = arith.constant 0 : index
    %492 = vector.load %arg8[%c0_737, %c0_738] : memref<120x84xf32, #tpu.memory_space<vmem>>, vector<120x84xf32>
    %cst_739 = arith.constant dense<0.000000e+00> : vector<8x84xf32>
    %493 = tpu.matmul %491, %492, %cst_739 {dimension_numbers = #tpu.dot_dimension_numbers<[1], [0], [0], [1], [0, 0, 1, 1], [], []>} : vector<8x120xf32>, vector<120x84xf32>, vector<8x84xf32> -> vector<8x84xf32>
    %c0_740 = arith.constant 0 : index
    %c0_741 = arith.constant 0 : index
    %494 = vector.load %arg9[%c0_740, %c0_741] : memref<1x84xf32, #tpu.memory_space<vmem>>, vector<1x84xf32>
    %495 = vector.broadcast %494 : vector<1x84xf32> to vector<8x84xf32>
    %496 = arith.addf %493, %495 : vector<8x84xf32>
    %cst_742 = arith.constant 0.000000e+00 : f32
    %497 = vector.broadcast %cst_742 : f32 to vector<8x84xf32>
    %498 = arith.maximumf %496, %497 : vector<8x84xf32>
    %c0_743 = arith.constant 0 : index
    %c0_744 = arith.constant 0 : index
    %499 = vector.load %arg10[%c0_743, %c0_744] : memref<84x10xf32, #tpu.memory_space<vmem>>, vector<84x10xf32>
    %cst_745 = arith.constant dense<0.000000e+00> : vector<8x10xf32>
    %500 = tpu.matmul %498, %499, %cst_745 {dimension_numbers = #tpu.dot_dimension_numbers<[1], [0], [0], [1], [0, 0, 1, 1], [], []>} : vector<8x84xf32>, vector<84x10xf32>, vector<8x10xf32> -> vector<8x10xf32>
    %c0_746 = arith.constant 0 : index
    %c0_747 = arith.constant 0 : index
    %501 = vector.load %arg11[%c0_746, %c0_747] : memref<1x10xf32, #tpu.memory_space<vmem>>, vector<1x10xf32>
    %502 = vector.broadcast %501 : vector<1x10xf32> to vector<8x10xf32>
    %503 = arith.addf %500, %502 : vector<8x10xf32>
    %c0_748 = arith.constant 0 : index
    %c0_749 = arith.constant 0 : index
    %504 = vector.load %arg12[%c0_748, %c0_749] : memref<8x10xf32, #tpu.memory_space<vmem>>, vector<8x10xf32>
    tpu.vector_store %arg12[%c0_748, %c0_749], %503 {strides = array<i32>} : memref<8x10xf32, #tpu.memory_space<vmem>>, vector<8x10xf32>,
    return
  }
  func.func @transform_0(%arg0: i32) -> (i32, i32, i32, i32) {
    %c0_i32 = arith.constant 0 : i32
    %c0_i32_0 = arith.constant 0 : i32
    %c0_i32_1 = arith.constant 0 : i32
    %c0_i32_2 = arith.constant 0 : i32
    return %arg0, %c0_i32, %c0_i32_0, %c0_i32_1 : i32, i32, i32, i32
  }
  func.func @transform_1(%arg0: i32) -> (i32, i32, i32) {
    %c0_i32 = arith.constant 0 : i32
    %c0_i32_0 = arith.constant 0 : i32
    %c0_i32_1 = arith.constant 0 : i32
    %c0_i32_2 = arith.constant 0 : i32
    return %c0_i32, %c0_i32_0, %c0_i32_1 : i32, i32, i32
  }
  func.func @transform_2(%arg0: i32) -> (i32, i32) {
    %c0_i32 = arith.constant 0 : i32
    %c0_i32_0 = arith.constant 0 : i32
    %c0_i32_1 = arith.constant 0 : i32
    return %c0_i32, %c0_i32_0 : i32, i32
  }
  func.func @transform_3(%arg0: i32) -> (i32, i32, i32) {
    %c0_i32 = arith.constant 0 : i32
    %c0_i32_0 = arith.constant 0 : i32
    %c0_i32_1 = arith.constant 0 : i32
    %c0_i32_2 = arith.constant 0 : i32
    return %c0_i32, %c0_i32_0, %c0_i32_1 : i32, i32, i32
  }
  func.func @transform_4(%arg0: i32) -> (i32, i32) {
    %c0_i32 = arith.constant 0 : i32
    %c0_i32_0 = arith.constant 0 : i32
    %c0_i32_1 = arith.constant 0 : i32
    return %c0_i32, %c0_i32_0 : i32, i32
  }
  func.func @transform_5(%arg0: i32) -> (i32, i32, i32) {
    %c0_i32 = arith.constant 0 : i32
    %c0_i32_0 = arith.constant 0 : i32
    %c0_i32_1 = arith.constant 0 : i32
    %c0_i32_2 = arith.constant 0 : i32
    return %c0_i32, %c0_i32_0, %c0_i32_1 : i32, i32, i32
  }
  func.func @transform_6(%arg0: i32) -> (i32, i32) {
    %c0_i32 = arith.constant 0 : i32
    %c0_i32_0 = arith.constant 0 : i32
    %c0_i32_1 = arith.constant 0 : i32
    return %c0_i32, %c0_i32_0 : i32, i32
  }
  func.func @transform_7(%arg0: i32) -> (i32, i32) {
    %c0_i32 = arith.constant 0 : i32
    %c0_i32_0 = arith.constant 0 : i32
    %c0_i32_1 = arith.constant 0 : i32
    return %c0_i32, %c0_i32_0 : i32, i32
  }
  func.func @transform_8(%arg0: i32) -> (i32, i32) {
    %c0_i32 = arith.constant 0 : i32
    %c0_i32_0 = arith.constant 0 : i32
    %c0_i32_1 = arith.constant 0 : i32
    return %c0_i32, %c0_i32_0 : i32, i32
  }
  func.func @transform_9(%arg0: i32) -> (i32, i32) {
    %c0_i32 = arith.constant 0 : i32
    %c0_i32_0 = arith.constant 0 : i32
    %c0_i32_1 = arith.constant 0 : i32
    return %c0_i32, %c0_i32_0 : i32, i32
  }
  func.func @transform_10(%arg0: i32) -> (i32, i32) {
    %c0_i32 = arith.constant 0 : i32
    %c0_i32_0 = arith.constant 0 : i32
    %c0_i32_1 = arith.constant 0 : i32
    return %c0_i32, %c0_i32_0 : i32, i32
  }
  func.func @transform_11(%arg0: i32) -> (i32, i32) {
    %c0_i32 = arith.constant 0 : i32
    %c0_i32_0 = arith.constant 0 : i32
    return %arg0, %c0_i32 : i32, i32
  }
}

</mosaic_0001>

<llo_original>
// kernel: net_forward.1
$region0: #{net_forward.1}
  #allocation0 [shape = 'u32[]', space=smem, size = 0x4, offset = 0x4, fixed_abs, tag = 'smem constant byte address 0x4 - core index']
  #allocation1 [shape = 'u32[144,128]{1,0:T(1,128)}', space=vmem, size = 0x12000, scoped, tag = 'internal scratch']
  #allocation2 [shape = 'f32[112,84]{1,0:T(8,128)}', space=vmem, size = 0xe000, scoped, tag = 'scratch operand']
  %s0 = inlined_call_operand.vmem [shape: f32[1,32,8,96], index: 0, kind: input, shape index: {}]
  %s1 = inlined_call_operand.vmem [shape: f32[5,96,256], index: 1, kind: input, shape index: {}]
  %s2 = inlined_call_operand.vmem [shape: f32[1,84], index: 2, kind: input, shape index: {}]
  %s3 = inlined_call_operand.vmem [shape: f32[5,84,256], index: 3, kind: input, shape index: {}]
  %s4 = inlined_call_operand.vmem [shape: f32[1,80], index: 4, kind: input, shape index: {}]
  %s5 = inlined_call_operand.vmem [shape: f32[5,80,120], index: 5, kind: input, shape index: {}]
  %s6 = inlined_call_operand.vmem [shape: f32[1,120], index: 6, kind: input, shape index: {}]
  %s7 = inlined_call_operand.vmem [shape: f32[120,84], index: 7, kind: input, shape index: {}]
  %s8 = inlined_call_operand.vmem [shape: f32[1,84], index: 8, kind: input, shape index: {}]
  %s9 = inlined_call_operand.vmem [shape: f32[84,10], index: 9, kind: input, shape index: {}]
  %s10 = inlined_call_operand.vmem [shape: f32[1,10], index: 10, kind: input, shape index: {}]
  %s11 = inlined_call_operand.vmem [shape: f32[8,10], index: 11, kind: output, shape index: {}]
  %s12 = sld [smem:[#allocation0]]
  $region54: #{net_forward.1} parent=0
    _
  %s14 = ssub.s32 1, %s12
  %s15 = scalar_select 0, %s14, %s12
  // Predicated region
  $region2: #{net_forward.1} parent=0 // pred_check
    _
  $region3: #{net_forward.1} parent=0 // pred_check_branch
    %17 = sbr.rel (0) target = $region5
  $region4: #{net_forward.1} parent=0 // pred_region
    _
  $region5: #{net_forward.1} parent=0 // pred_fallthru
    _
  // Predicated region
  $region6: #{net_forward.1} parent=0 // pred_check
    _
  $region7: #{net_forward.1} parent=0 // pred_check_branch
    %19 = sbr.rel (0) target = $region9
  $region8: #{net_forward.1} parent=0 // pred_region
    _
  $region9: #{net_forward.1} parent=0 // pred_fallthru
    _
  // Predicated region
  $region10: #{net_forward.1} parent=0 // pred_check
    _
  $region11: #{net_forward.1} parent=0 // pred_check_branch
    %21 = sbr.rel (0) target = $region13
  $region12: #{net_forward.1} parent=0 // pred_region
    _
  $region13: #{net_forward.1} parent=0 // pred_fallthru
    _
  // Predicated region
  $region14: #{net_forward.1} parent=0 // pred_check
    _
  $region15: #{net_forward.1} parent=0 // pred_check_branch
    %23 = sbr.rel (0) target = $region17
  $region16: #{net_forward.1} parent=0 // pred_region
    _
  $region17: #{net_forward.1} parent=0 // pred_fallthru
    _
  // Predicated region
  $region18: #{net_forward.1} parent=0 // pred_check
    _
  $region19: #{net_forward.1} parent=0 // pred_check_branch
    %25 = sbr.rel (0) target = $region21
  $region20: #{net_forward.1} parent=0 // pred_region
    _
  $region21: #{net_forward.1} parent=0 // pred_fallthru
    _
  // Predicated region
  $region22: #{net_forward.1} parent=0 // pred_check
    _
  $region23: #{net_forward.1} parent=0 // pred_check_branch
    %27 = sbr.rel (0) target = $region25
  $region24: #{net_forward.1} parent=0 // pred_region
    _
  $region25: #{net_forward.1} parent=0 // pred_fallthru
    _
  // Predicated region
  $region26: #{net_forward.1} parent=0 // pred_check
    _
  $region27: #{net_forward.1} parent=0 // pred_check_branch
    %29 = sbr.rel (0) target = $region29
  $region28: #{net_forward.1} parent=0 // pred_region
    _
  $region29: #{net_forward.1} parent=0 // pred_fallthru
    _
  // Predicated region
  $region30: #{net_forward.1} parent=0 // pred_check
    _
  $region31: #{net_forward.1} parent=0 // pred_check_branch
    %31 = sbr.rel (0) target = $region33
  $region32: #{net_forward.1} parent=0 // pred_region
    _
  $region33: #{net_forward.1} parent=0 // pred_fallthru
    _
  // Predicated region
  $region34: #{net_forward.1} parent=0 // pred_check
    _
  $region35: #{net_forward.1} parent=0 // pred_check_branch
    %33 = sbr.rel (0) target = $region37
  $region36: #{net_forward.1} parent=0 // pred_region
    _
  $region37: #{net_forward.1} parent=0 // pred_fallthru
    _
  // Predicated region
  $region38: #{net_forward.1} parent=0 // pred_check
    _
  $region39: #{net_forward.1} parent=0 // pred_check_branch
    %35 = sbr.rel (0) target = $region41
  $region40: #{net_forward.1} parent=0 // pred_region
    _
  $region41: #{net_forward.1} parent=0 // pred_fallthru
    _
  // Predicated region
  $region42: #{net_forward.1} parent=0 // pred_check
    _
  $region43: #{net_forward.1} parent=0 // pred_check_branch
    %37 = sbr.rel (0) target = $region45
  $region44: #{net_forward.1} parent=0 // pred_region
    _
  $region45: #{net_forward.1} parent=0 // pred_fallthru
    _
  %v38 = vld [vmem:[%s0] sm:$0xff]
  %s39 = scalar_lea.vmem %s0, 16
  %v40 = vld [vmem:[%s39] sm:$0xff]
  %s41 = scalar_lea.vmem %s0, 32
  %v42 = vld [vmem:[%s41] sm:$0xff]
  %s43 = scalar_lea.vmem %s0, 48
  %v44 = vld [vmem:[%s43] sm:$0xff]
  %s45 = scalar_lea.vmem %s0, 64
  %v46 = vld [vmem:[%s45] sm:$0xff]
  %s47 = scalar_lea.vmem %s0, 80
  %v48 = vld [vmem:[%s47] sm:$0xff]
  %s49 = scalar_lea.vmem %s0, 96
  %v50 = vld [vmem:[%s49] sm:$0xff]
  %s51 = scalar_lea.vmem %s0, 112
  %v52 = vld [vmem:[%s51] sm:$0xff]
  %s53 = scalar_lea.vmem %s0, 128
  %v54 = vld [vmem:[%s53] sm:$0xff]
  %s55 = scalar_lea.vmem %s0, 144
  %v56 = vld [vmem:[%s55] sm:$0xff]
  %s57 = scalar_lea.vmem %s0, 160
  %v58 = vld [vmem:[%s57] sm:$0xff]
  %s59 = scalar_lea.vmem %s0, 176
  %v60 = vld [vmem:[%s59] sm:$0xff]
  %s61 = scalar_lea.vmem %s0, 192
  %v62 = vld [vmem:[%s61] sm:$0xff]
  %s63 = scalar_lea.vmem %s0, 208
  %v64 = vld [vmem:[%s63] sm:$0xff]
  %v65 = vld [vmem:[%s1] sm:$0xff]
  %v66 = vld [vmem:[%s1 + $0x8] sm:$0xff]
  %v67 = vld [vmem:[%s1 + $0x10] sm:$0xff]
  %v68 = vld [vmem:[%s1 + $0x18] sm:$0xff]
  %v69 = vld [vmem:[%s1 + $0x20] sm:$0xff]
  %v70 = vld [vmem:[%s1 + $0x28] sm:$0xff]
  %v71 = vld [vmem:[%s1 + $0x30] sm:$0xff]
  %v72 = vld [vmem:[%s1 + $0x38] sm:$0xff]
  %v73 = vld [vmem:[%s1 + $0x40] sm:$0xff]
  %v74 = vld [vmem:[%s1 + $0x48] sm:$0xff]
  %v75 = vld [vmem:[%s1 + $0x50] sm:$0xff]
  %v76 = vld [vmem:[%s1 + $0x58] sm:$0xff]
  %v77 = vld [vmem:[%s1 + $0x60] sm:$0xff]
  %v78 = vld [vmem:[%s1 + $0x68] sm:$0xff]
  %v79 = vld [vmem:[%s1 + $0x70] sm:$0xff]
  %v80 = vld [vmem:[%s1 + $0x78] sm:$0xff]
  %v81 = vld [vmem:[%s1 + $0x80] sm:$0xff]
  %v82 = vld [vmem:[%s1 + $0x88] sm:$0xff]
  %v83 = vld [vmem:[%s1 + $0x90] sm:$0xff]
  %v84 = vld [vmem:[%s1 + $0x98] sm:$0xff]
  %v85 = vld [vmem:[%s1 + $0xa0] sm:$0xff]
  %v86 = vld [vmem:[%s1 + $0xa8] sm:$0xff]
  %v87 = vld [vmem:[%s1 + $0xb0] sm:$0xff]
  %v88 = vld [vmem:[%s1 + $0xb8] sm:$0xff]
  %s89 = scalar_lea.vmem %s0, 8
  %v90 = vld [vmem:[%s89] sm:$0xff]
  %s91 = scalar_lea.vmem %s0, 24
  %v92 = vld [vmem:[%s91] sm:$0xff]
  %s93 = scalar_lea.vmem %s0, 40
  %v94 = vld [vmem:[%s93] sm:$0xff]
  %s95 = scalar_lea.vmem %s0, 56
  %v96 = vld [vmem:[%s95] sm:$0xff]
  %s97 = scalar_lea.vmem %s0, 72
  %v98 = vld [vmem:[%s97] sm:$0xff]
  %s99 = scalar_lea.vmem %s0, 88
  %v100 = vld [vmem:[%s99] sm:$0xff]
  %s101 = scalar_lea.vmem %s0, 104
  %v102 = vld [vmem:[%s101] sm:$0xff]
  %s103 = scalar_lea.vmem %s0, 120
  %v104 = vld [vmem:[%s103] sm:$0xff]
  %s105 = scalar_lea.vmem %s0, 136
  %v106 = vld [vmem:[%s105] sm:$0xff]
  %s107 = scalar_lea.vmem %s0, 152
  %v108 = vld [vmem:[%s107] sm:$0xff]
  %s109 = scalar_lea.vmem %s0, 168
  %v110 = vld [vmem:[%s109] sm:$0xff]
  %s111 = scalar_lea.vmem %s0, 184
  %v112 = vld [vmem:[%s111] sm:$0xff]
  %s113 = scalar_lea.vmem %s0, 200
  %v114 = vld [vmem:[%s113] sm:$0xff]
  %s115 = scalar_lea.vmem %s0, 216
  %v116 = vld [vmem:[%s115] sm:$0xff]
  %s117 = scalar_lea.vmem %s1, 192
  %v118 = vld [vmem:[%s117] sm:$0xff]
  %v119 = vld [vmem:[%s117 + $0x8] sm:$0xff]
  %v120 = vld [vmem:[%s117 + $0x10] sm:$0xff]
  %v121 = vld [vmem:[%s117 + $0x18] sm:$0xff]
  %v122 = vld [vmem:[%s117 + $0x20] sm:$0xff]
  %v123 = vld [vmem:[%s117 + $0x28] sm:$0xff]
  %v124 = vld [vmem:[%s117 + $0x30] sm:$0xff]
  %v125 = vld [vmem:[%s117 + $0x38] sm:$0xff]
  %v126 = vld [vmem:[%s117 + $0x40] sm:$0xff]
  %v127 = vld [vmem:[%s117 + $0x48] sm:$0xff]
  %v128 = vld [vmem:[%s117 + $0x50] sm:$0xff]
  %v129 = vld [vmem:[%s117 + $0x58] sm:$0xff]
  %v130 = vld [vmem:[%s117 + $0x60] sm:$0xff]
  %v131 = vld [vmem:[%s117 + $0x68] sm:$0xff]
  %v132 = vld [vmem:[%s117 + $0x70] sm:$0xff]
  %v133 = vld [vmem:[%s117 + $0x78] sm:$0xff]
  %v134 = vld [vmem:[%s117 + $0x80] sm:$0xff]
  %v135 = vld [vmem:[%s117 + $0x88] sm:$0xff]
  %v136 = vld [vmem:[%s117 + $0x90] sm:$0xff]
  %v137 = vld [vmem:[%s117 + $0x98] sm:$0xff]
  %v138 = vld [vmem:[%s117 + $0xa0] sm:$0xff]
  %v139 = vld [vmem:[%s117 + $0xa8] sm:$0xff]
  %v140 = vld [vmem:[%s117 + $0xb0] sm:$0xff]
  %v141 = vld [vmem:[%s117 + $0xb8] sm:$0xff]
  %vm142 = vcmask 785408
  %v144 = vsel %vm142, %v90, 0
  %v147 = vsel %vm142, %v92, 0
  %v150 = vsel %vm142, %v94, 0
  %v153 = vsel %vm142, %v96, 0
  %v156 = vsel %vm142, %v98, 0
  %v159 = vsel %vm142, %v100, 0
  %v162 = vsel %vm142, %v102, 0
  %v165 = vsel %vm142, %v104, 0
  %v168 = vsel %vm142, %v106, 0
  %v171 = vsel %vm142, %v108, 0
  %v174 = vsel %vm142, %v110, 0
  %v177 = vsel %vm142, %v112, 0
  %v180 = vsel %vm142, %v114, 0
  %v183 = vsel %vm142, %v116, 0
  %185 = vmatprep.subr.mxu0 0.0
  %186 = vmatpush1.msra.mxu0 0.0
  %187 = vmatprep.subr.mxu0 0.0
  %188 = vmatpush1.msra.mxu0 0.0
  %189 = vmatprep.subr.mxu0 0.0
  %190 = vmatpush1.msra.mxu0 0.0
  %191 = vmatprep.subr.mxu0 0.0
  %192 = vmatpush1.msra.mxu0 0.0
  %193 = vmatprep.subr.mxu0 %v141
  %194 = vmatpush1.msra.mxu0 %v140
  %195 = vmatprep.subr.mxu0 %v139
  %196 = vmatpush1.msra.mxu0 %v138
  %197 = vmatprep.subr.mxu0 %v137
  %198 = vmatpush1.msra.mxu0 %v136
  %199 = vmatprep.subr.mxu0 %v135
  %200 = vmatpush1.msra.mxu0 %v134
  %201 = vmatprep.subr.mxu0 %v133
  %202 = vmatpush1.msra.mxu0 %v132
  %203 = vmatprep.subr.mxu0 %v131
  %204 = vmatpush1.msra.mxu0 %v130
  %205 = vmatprep.subr.mxu0 %v129
  %206 = vmatpush1.msra.mxu0 %v128
  %207 = vmatprep.subr.mxu0 %v127
  %208 = vmatpush1.msra.mxu0 %v126
  %209 = vmatprep.subr.mxu0 %v125
  %210 = vmatpush1.msra.mxu0 %v124
  %211 = vmatprep.subr.mxu0 %v123
  %212 = vmatpush1.msra.mxu0 %v122
  %213 = vmatprep.subr.mxu0 %v121
  %214 = vmatpush1.msra.mxu0 %v120
  %215 = vmatprep.subr.mxu0 %v119
  %216 = vmatpush1.msra.mxu0 %v118
  %217 = vmatprep.subr.mxu0 0.0
  %218 = vmatpush2.msra.mxu0 0.0
  %219 = vmatprep.subr.mxu0 0.0
  %220 = vmatpush2.msra.mxu0 0.0
  %221 = vmatprep.subr.mxu0 0.0
  %222 = vmatpush2.msra.mxu0 0.0
  %223 = vmatprep.subr.mxu0 0.0
  %224 = vmatpush2.msra.mxu0 0.0
  %225 = vmatprep.subr.mxu0 0.0
  %226 = vmatpush2.msra.mxu0 0.0
  %227 = vmatprep.subr.mxu0 0.0
  %228 = vmatpush2.msra.mxu0 0.0
  %229 = vmatprep.subr.mxu0 0.0
  %230 = vmatpush2.msra.mxu0 0.0
  %231 = vmatprep.subr.mxu0 0.0
  %232 = vmatpush2.msra.mxu0 0.0
  %233 = vmatprep.subr.mxu0 0.0
  %234 = vmatpush2.msra.mxu0 0.0
  %235 = vmatprep.subr.mxu0 0.0
  %236 = vmatpush2.msra.mxu0 0.0
  %237 = vmatprep.subr.mxu0 0.0
  %238 = vmatpush2.msra.mxu0 0.0
  %239 = vmatprep.subr.mxu0 0.0
  %240 = vmatpush2.msra.mxu0 0.0
  %241 = vmatprep.subr.mxu0 0.0
  %242 = vmatpush2.msra.mxu0 0.0
  %243 = vmatprep.subr.mxu0 0.0
  %244 = vmatpush2.msra.mxu0 0.0
  %245 = vmatprep.subr.mxu0 0.0
  %246 = vmatpush2.msra.mxu0 0.0
  %247 = vmatprep.subr.mxu0 0.0
  %248 = vmatpush2.msra.mxu0 0.0
  %249 = vmatprep.mubr.f32.mxu0 0.0
  %250 = vmatmul.mubr.f32.gmra.mxu0 %v144
  %v251 = vpop.f32.mrf.mxu0
  %v252 = vadd.f32 0.0, %v251
  %v253 = vpop.f32.mrf.mxu0
  %v254 = vadd.f32 0.0, %v253
  %255 = vmatprep.mubr.f32.mxu0 0.0
  %256 = vmatmul.mubr.f32.gmra.mxu0 %v147
  %v257 = vpop.f32.mrf.mxu0
  %v258 = vadd.f32 0.0, %v257
  %v259 = vpop.f32.mrf.mxu0
  %v260 = vadd.f32 0.0, %v259
  %261 = vmatprep.mubr.f32.mxu0 0.0
  %262 = vmatmul.mubr.f32.gmra.mxu0 %v150
  %v263 = vpop.f32.mrf.mxu0
  %v264 = vadd.f32 0.0, %v263
  %v265 = vpop.f32.mrf.mxu0
  %v266 = vadd.f32 0.0, %v265
  %267 = vmatprep.mubr.f32.mxu0 0.0
  %268 = vmatmul.mubr.f32.gmra.mxu0 %v153
  %v269 = vpop.f32.mrf.mxu0
  %v270 = vadd.f32 0.0, %v269
  %v271 = vpop.f32.mrf.mxu0
  %v272 = vadd.f32 0.0, %v271
  %273 = vmatprep.mubr.f32.mxu0 0.0
  %274 = vmatmul.mubr.f32.gmra.mxu0 %v156
  %v275 = vpop.f32.mrf.mxu0
  %v276 = vadd.f32 0.0, %v275
  %v277 = vpop.f32.mrf.mxu0
  %v278 = vadd.f32 0.0, %v277
  %279 = vmatprep.mubr.f32.mxu0 0.0
  %280 = vmatmul.mubr.f32.gmra.mxu0 %v159
  %v281 = vpop.f32.mrf.mxu0
  %v282 = vadd.f32 0.0, %v281
  %v283 = vpop.f32.mrf.mxu0
  %v284 = vadd.f32 0.0, %v283
  %285 = vmatprep.mubr.f32.mxu0 0.0
  %286 = vmatmul.mubr.f32.gmra.mxu0 %v162
  %v287 = vpop.f32.mrf.mxu0
  %v288 = vadd.f32 0.0, %v287
  %v289 = vpop.f32.mrf.mxu0
  %v290 = vadd.f32 0.0, %v289
  %291 = vmatprep.mubr.f32.mxu0 0.0
  %292 = vmatmul.mubr.f32.gmra.mxu0 %v165
  %v293 = vpop.f32.mrf.mxu0
  %v294 = vadd.f32 0.0, %v293
  %v295 = vpop.f32.mrf.mxu0
  %v296 = vadd.f32 0.0, %v295
  %297 = vmatprep.mubr.f32.mxu0 0.0
  %298 = vmatmul.mubr.f32.gmra.mxu0 %v168
  %v299 = vpop.f32.mrf.mxu0
  %v300 = vadd.f32 0.0, %v299
  %v301 = vpop.f32.mrf.mxu0
  %v302 = vadd.f32 0.0, %v301
  %303 = vmatprep.mubr.f32.mxu0 0.0
  %304 = vmatmul.mubr.f32.gmra.mxu0 %v171
  %v305 = vpop.f32.mrf.mxu0
  %v306 = vadd.f32 0.0, %v305
  %v307 = vpop.f32.mrf.mxu0
  %v308 = vadd.f32 0.0, %v307
  %309 = vmatprep.mubr.f32.mxu0 0.0
  %310 = vmatmul.mubr.f32.gmra.mxu0 %v174
  %v311 = vpop.f32.mrf.mxu0
  %v312 = vadd.f32 0.0, %v311
  %v313 = vpop.f32.mrf.mxu0
  %v314 = vadd.f32 0.0, %v313
  %315 = vmatprep.mubr.f32.mxu0 0.0
  %316 = vmatmul.mubr.f32.gmra.mxu0 %v177
  %v317 = vpop.f32.mrf.mxu0
  %v318 = vadd.f32 0.0, %v317
  %v319 = vpop.f32.mrf.mxu0
  %v320 = vadd.f32 0.0, %v319
  %321 = vmatprep.mubr.f32.mxu0 0.0
  %322 = vmatmul.mubr.f32.gmra.mxu0 %v180
  %v323 = vpop.f32.mrf.mxu0
  %v324 = vadd.f32 0.0, %v323
  %v325 = vpop.f32.mrf.mxu0
  %v326 = vadd.f32 0.0, %v325
  %327 = vmatprep.mubr.f32.mxu0 0.0
  %328 = vmatmul.mubr.f32.gmra.mxu0 %v183
  %v329 = vpop.f32.mrf.mxu0
  %v330 = vadd.f32 0.0, %v329
  %v331 = vpop.f32.mrf.mxu0
  %v332 = vadd.f32 0.0, %v331
  %333 = vdwg.mxu0
  %v335 = vsel %vm142, %v38, 0
  %v338 = vsel %vm142, %v40, 0
  %v341 = vsel %vm142, %v42, 0
  %v344 = vsel %vm142, %v44, 0
  %v347 = vsel %vm142, %v46, 0
  %v350 = vsel %vm142, %v48, 0
  %v353 = vsel %vm142, %v50, 0
  %v356 = vsel %vm142, %v52, 0
  %v359 = vsel %vm142, %v54, 0
  %v362 = vsel %vm142, %v56, 0
  %v365 = vsel %vm142, %v58, 0
  %v368 = vsel %vm142, %v60, 0
  %v371 = vsel %vm142, %v62, 0
  %v374 = vsel %vm142, %v64, 0
  %376 = vmatprep.subr.mxu0 0.0
  %377 = vmatpush1.msra.mxu0 0.0
  %378 = vmatprep.subr.mxu0 0.0
  %379 = vmatpush1.msra.mxu0 0.0
  %380 = vmatprep.subr.mxu0 0.0
  %381 = vmatpush1.msra.mxu0 0.0
  %382 = vmatprep.subr.mxu0 0.0
  %383 = vmatpush1.msra.mxu0 0.0
  %384 = vmatprep.subr.mxu0 %v88
  %385 = vmatpush1.msra.mxu0 %v87
  %386 = vmatprep.subr.mxu0 %v86
  %387 = vmatpush1.msra.mxu0 %v85
  %388 = vmatprep.subr.mxu0 %v84
  %389 = vmatpush1.msra.mxu0 %v83
  %390 = vmatprep.subr.mxu0 %v82
  %391 = vmatpush1.msra.mxu0 %v81
  %392 = vmatprep.subr.mxu0 %v80
  %393 = vmatpush1.msra.mxu0 %v79
  %394 = vmatprep.subr.mxu0 %v78
  %395 = vmatpush1.msra.mxu0 %v77
  %396 = vmatprep.subr.mxu0 %v76
  %397 = vmatpush1.msra.mxu0 %v75
  %398 = vmatprep.subr.mxu0 %v74
  %399 = vmatpush1.msra.mxu0 %v73
  %400 = vmatprep.subr.mxu0 %v72
  %401 = vmatpush1.msra.mxu0 %v71
  %402 = vmatprep.subr.mxu0 %v70
  %403 = vmatpush1.msra.mxu0 %v69
  %404 = vmatprep.subr.mxu0 %v68
  %405 = vmatpush1.msra.mxu0 %v67
  %406 = vmatprep.subr.mxu0 %v66
  %407 = vmatpush1.msra.mxu0 %v65
  %408 = vmatprep.subr.mxu0 0.0
  %409 = vmatpush2.msra.mxu0 0.0
  %410 = vmatprep.subr.mxu0 0.0
  %411 = vmatpush2.msra.mxu0 0.0
  %412 = vmatprep.subr.mxu0 0.0
  %413 = vmatpush2.msra.mxu0 0.0
  %414 = vmatprep.subr.mxu0 0.0
  %415 = vmatpush2.msra.mxu0 0.0
  %416 = vmatprep.subr.mxu0 0.0
  %417 = vmatpush2.msra.mxu0 0.0
  %418 = vmatprep.subr.mxu0 0.0
  %419 = vmatpush2.msra.mxu0 0.0
  %420 = vmatprep.subr.mxu0 0.0
  %421 = vmatpush2.msra.mxu0 0.0
  %422 = vmatprep.subr.mxu0 0.0
  %423 = vmatpush2.msra.mxu0 0.0
  %424 = vmatprep.subr.mxu0 0.0
  %425 = vmatpush2.msra.mxu0 0.0
  %426 = vmatprep.subr.mxu0 0.0
  %427 = vmatpush2.msra.mxu0 0.0
  %428 = vmatprep.subr.mxu0 0.0
  %429 = vmatpush2.msra.mxu0 0.0
  %430 = vmatprep.subr.mxu0 0.0
  %431 = vmatpush2.msra.mxu0 0.0
  %432 = vmatprep.subr.mxu0 0.0
  %433 = vmatpush2.msra.mxu0 0.0
  %434 = vmatprep.subr.mxu0 0.0
  %435 = vmatpush2.msra.mxu0 0.0
  %436 = vmatprep.subr.mxu0 0.0
  %437 = vmatpush2.msra.mxu0 0.0
  %438 = vmatprep.subr.mxu0 0.0
  %439 = vmatpush2.msra.mxu0 0.0
  %440 = vmatprep.mubr.f32.mxu0 0.0
  %441 = vmatmul.mubr.f32.gmra.mxu0 %v335
  %v442 = vpop.f32.mrf.mxu0
  %v443 = vadd.f32 %v252, %v442
  %v444 = vpop.f32.mrf.mxu0
  %v445 = vadd.f32 %v254, %v444
  %446 = vmatprep.mubr.f32.mxu0 0.0
  %447 = vmatmul.mubr.f32.gmra.mxu0 %v338
  %v448 = vpop.f32.mrf.mxu0
  %v449 = vadd.f32 %v258, %v448
  %v450 = vpop.f32.mrf.mxu0
  %v451 = vadd.f32 %v260, %v450
  %452 = vmatprep.mubr.f32.mxu0 0.0
  %453 = vmatmul.mubr.f32.gmra.mxu0 %v341
  %v454 = vpop.f32.mrf.mxu0
  %v455 = vadd.f32 %v264, %v454
  %v456 = vpop.f32.mrf.mxu0
  %v457 = vadd.f32 %v266, %v456
  %458 = vmatprep.mubr.f32.mxu0 0.0
  %459 = vmatmul.mubr.f32.gmra.mxu0 %v344
  %v460 = vpop.f32.mrf.mxu0
  %v461 = vadd.f32 %v270, %v460
  %v462 = vpop.f32.mrf.mxu0
  %v463 = vadd.f32 %v272, %v462
  %464 = vmatprep.mubr.f32.mxu0 0.0
  %465 = vmatmul.mubr.f32.gmra.mxu0 %v347
  %v466 = vpop.f32.mrf.mxu0
  %v467 = vadd.f32 %v276, %v466
  %v468 = vpop.f32.mrf.mxu0
  %v469 = vadd.f32 %v278, %v468
  %470 = vmatprep.mubr.f32.mxu0 0.0
  %471 = vmatmul.mubr.f32.gmra.mxu0 %v350
  %v472 = vpop.f32.mrf.mxu0
  %v473 = vadd.f32 %v282, %v472
  %v474 = vpop.f32.mrf.mxu0
  %v475 = vadd.f32 %v284, %v474
  %476 = vmatprep.mubr.f32.mxu0 0.0
  %477 = vmatmul.mubr.f32.gmra.mxu0 %v353
  %v478 = vpop.f32.mrf.mxu0
  %v479 = vadd.f32 %v288, %v478
  %v480 = vpop.f32.mrf.mxu0
  %v481 = vadd.f32 %v290, %v480
  %482 = vmatprep.mubr.f32.mxu0 0.0
  %483 = vmatmul.mubr.f32.gmra.mxu0 %v356
  %v484 = vpop.f32.mrf.mxu0
  %v485 = vadd.f32 %v294, %v484
  %v486 = vpop.f32.mrf.mxu0
  %v487 = vadd.f32 %v296, %v486
  %488 = vmatprep.mubr.f32.mxu0 0.0
  %489 = vmatmul.mubr.f32.gmra.mxu0 %v359
  %v490 = vpop.f32.mrf.mxu0
  %v491 = vadd.f32 %v300, %v490
  %v492 = vpop.f32.mrf.mxu0
  %v493 = vadd.f32 %v302, %v492
  %494 = vmatprep.mubr.f32.mxu0 0.0
  %495 = vmatmul.mubr.f32.gmra.mxu0 %v362
  %v496 = vpop.f32.mrf.mxu0
  %v497 = vadd.f32 %v306, %v496
  %v498 = vpop.f32.mrf.mxu0
  %v499 = vadd.f32 %v308, %v498
  %500 = vmatprep.mubr.f32.mxu0 0.0
  %501 = vmatmul.mubr.f32.gmra.mxu0 %v365
  %v502 = vpop.f32.mrf.mxu0
  %v503 = vadd.f32 %v312, %v502
  %v504 = vpop.f32.mrf.mxu0
  %v505 = vadd.f32 %v314, %v504
  %506 = vmatprep.mubr.f32.mxu0 0.0
  %507 = vmatmul.mubr.f32.gmra.mxu0 %v368
  %v508 = vpop.f32.mrf.mxu0
  %v509 = vadd.f32 %v318, %v508
  %v510 = vpop.f32.mrf.mxu0
  %v511 = vadd.f32 %v320, %v510
  %512 = vmatprep.mubr.f32.mxu0 0.0
  %513 = vmatmul.mubr.f32.gmra.mxu0 %v371
  %v514 = vpop.f32.mrf.mxu0
  %v515 = vadd.f32 %v324, %v514
  %v516 = vpop.f32.mrf.mxu0
  %v517 = vadd.f32 %v326, %v516
  %518 = vmatprep.mubr.f32.mxu0 0.0
  %519 = vmatmul.mubr.f32.gmra.mxu0 %v374
  %v520 = vpop.f32.mrf.mxu0
  %v521 = vadd.f32 %v330, %v520
  %v522 = vpop.f32.mrf.mxu0
  %v523 = vadd.f32 %v332, %v522
  %524 = vdwg.mxu0
  %s525 = scalar_lea.vmem %s0, 224
  %v526 = vld [vmem:[%s525] sm:$0xff]
  %s527 = scalar_lea.vmem %s1, 384
  %v528 = vld [vmem:[%s527] sm:$0xff]
  %v529 = vld [vmem:[%s527 + $0x8] sm:$0xff]
  %v530 = vld [vmem:[%s527 + $0x10] sm:$0xff]
  %v531 = vld [vmem:[%s527 + $0x18] sm:$0xff]
  %v532 = vld [vmem:[%s527 + $0x20] sm:$0xff]
  %v533 = vld [vmem:[%s527 + $0x28] sm:$0xff]
  %v534 = vld [vmem:[%s527 + $0x30] sm:$0xff]
  %v535 = vld [vmem:[%s527 + $0x38] sm:$0xff]
  %v536 = vld [vmem:[%s527 + $0x40] sm:$0xff]
  %v537 = vld [vmem:[%s527 + $0x48] sm:$0xff]
  %v538 = vld [vmem:[%s527 + $0x50] sm:$0xff]
  %v539 = vld [vmem:[%s527 + $0x58] sm:$0xff]
  %v540 = vld [vmem:[%s527 + $0x60] sm:$0xff]
  %v541 = vld [vmem:[%s527 + $0x68] sm:$0xff]
  %v542 = vld [vmem:[%s527 + $0x70] sm:$0xff]
  %v543 = vld [vmem:[%s527 + $0x78] sm:$0xff]
  %v544 = vld [vmem:[%s527 + $0x80] sm:$0xff]
  %v545 = vld [vmem:[%s527 + $0x88] sm:$0xff]
  %v546 = vld [vmem:[%s527 + $0x90] sm:$0xff]
  %v547 = vld [vmem:[%s527 + $0x98] sm:$0xff]
  %v548 = vld [vmem:[%s527 + $0xa0] sm:$0xff]
  %v549 = vld [vmem:[%s527 + $0xa8] sm:$0xff]
  %v550 = vld [vmem:[%s527 + $0xb0] sm:$0xff]
  %v551 = vld [vmem:[%s527 + $0xb8] sm:$0xff]
  %v553 = vsel %vm142, %v526, 0
  %555 = vmatprep.subr.mxu0 0.0
  %556 = vmatpush1.msra.mxu0 0.0
  %557 = vmatprep.subr.mxu0 0.0
  %558 = vmatpush1.msra.mxu0 0.0
  %559 = vmatprep.subr.mxu0 0.0
  %560 = vmatpush1.msra.mxu0 0.0
  %561 = vmatprep.subr.mxu0 0.0
  %562 = vmatpush1.msra.mxu0 0.0
  %563 = vmatprep.subr.mxu0 %v551
  %564 = vmatpush1.msra.mxu0 %v550
  %565 = vmatprep.subr.mxu0 %v549
  %566 = vmatpush1.msra.mxu0 %v548
  %567 = vmatprep.subr.mxu0 %v547
  %568 = vmatpush1.msra.mxu0 %v546
  %569 = vmatprep.subr.mxu0 %v545
  %570 = vmatpush1.msra.mxu0 %v544
  %571 = vmatprep.subr.mxu0 %v543
  %572 = vmatpush1.msra.mxu0 %v542
  %573 = vmatprep.subr.mxu0 %v541
  %574 = vmatpush1.msra.mxu0 %v540
  %575 = vmatprep.subr.mxu0 %v539
  %576 = vmatpush1.msra.mxu0 %v538
  %577 = vmatprep.subr.mxu0 %v537
  %578 = vmatpush1.msra.mxu0 %v536
  %579 = vmatprep.subr.mxu0 %v535
  %580 = vmatpush1.msra.mxu0 %v534
  %581 = vmatprep.subr.mxu0 %v533
  %582 = vmatpush1.msra.mxu0 %v532
  %583 = vmatprep.subr.mxu0 %v531
  %584 = vmatpush1.msra.mxu0 %v530
  %585 = vmatprep.subr.mxu0 %v529
  %586 = vmatpush1.msra.mxu0 %v528
  %587 = vmatprep.subr.mxu0 0.0
  %588 = vmatpush2.msra.mxu0 0.0
  %589 = vmatprep.subr.mxu0 0.0
  %590 = vmatpush2.msra.mxu0 0.0
  %591 = vmatprep.subr.mxu0 0.0
  %592 = vmatpush2.msra.mxu0 0.0
  %593 = vmatprep.subr.mxu0 0.0
  %594 = vmatpush2.msra.mxu0 0.0
  %595 = vmatprep.subr.mxu0 0.0
  %596 = vmatpush2.msra.mxu0 0.0
  %597 = vmatprep.subr.mxu0 0.0
  %598 = vmatpush2.msra.mxu0 0.0
  %599 = vmatprep.subr.mxu0 0.0
  %600 = vmatpush2.msra.mxu0 0.0
  %601 = vmatprep.subr.mxu0 0.0
  %602 = vmatpush2.msra.mxu0 0.0
  %603 = vmatprep.subr.mxu0 0.0
  %604 = vmatpush2.msra.mxu0 0.0
  %605 = vmatprep.subr.mxu0 0.0
  %606 = vmatpush2.msra.mxu0 0.0
  %607 = vmatprep.subr.mxu0 0.0
  %608 = vmatpush2.msra.mxu0 0.0
  %609 = vmatprep.subr.mxu0 0.0
  %610 = vmatpush2.msra.mxu0 0.0
  %611 = vmatprep.subr.mxu0 0.0
  %612 = vmatpush2.msra.mxu0 0.0
  %613 = vmatprep.subr.mxu0 0.0
  %614 = vmatpush2.msra.mxu0 0.0
  %615 = vmatprep.subr.mxu0 0.0
  %616 = vmatpush2.msra.mxu0 0.0
  %617 = vmatprep.subr.mxu0 0.0
  %618 = vmatpush2.msra.mxu0 0.0
  %619 = vmatprep.mubr.f32.mxu0 0.0
  %620 = vmatmul.mubr.f32.gmra.mxu0 %v338
  %v621 = vpop.f32.mrf.mxu0
  %v622 = vadd.f32 0.0, %v621
  %v623 = vpop.f32.mrf.mxu0
  %v624 = vadd.f32 0.0, %v623
  %625 = vmatprep.mubr.f32.mxu0 0.0
  %626 = vmatmul.mubr.f32.gmra.mxu0 %v341
  %v627 = vpop.f32.mrf.mxu0
  %v628 = vadd.f32 0.0, %v627
  %v629 = vpop.f32.mrf.mxu0
  %v630 = vadd.f32 0.0, %v629
  %631 = vmatprep.mubr.f32.mxu0 0.0
  %632 = vmatmul.mubr.f32.gmra.mxu0 %v344
  %v633 = vpop.f32.mrf.mxu0
  %v634 = vadd.f32 0.0, %v633
  %v635 = vpop.f32.mrf.mxu0
  %v636 = vadd.f32 0.0, %v635
  %637 = vmatprep.mubr.f32.mxu0 0.0
  %638 = vmatmul.mubr.f32.gmra.mxu0 %v347
  %v639 = vpop.f32.mrf.mxu0
  %v640 = vadd.f32 0.0, %v639
  %v641 = vpop.f32.mrf.mxu0
  %v642 = vadd.f32 0.0, %v641
  %643 = vmatprep.mubr.f32.mxu0 0.0
  %644 = vmatmul.mubr.f32.gmra.mxu0 %v350
  %v645 = vpop.f32.mrf.mxu0
  %v646 = vadd.f32 0.0, %v645
  %v647 = vpop.f32.mrf.mxu0
  %v648 = vadd.f32 0.0, %v647
  %649 = vmatprep.mubr.f32.mxu0 0.0
  %650 = vmatmul.mubr.f32.gmra.mxu0 %v353
  %v651 = vpop.f32.mrf.mxu0
  %v652 = vadd.f32 0.0, %v651
  %v653 = vpop.f32.mrf.mxu0
  %v654 = vadd.f32 0.0, %v653
  %655 = vmatprep.mubr.f32.mxu0 0.0
  %656 = vmatmul.mubr.f32.gmra.mxu0 %v356
  %v657 = vpop.f32.mrf.mxu0
  %v658 = vadd.f32 0.0, %v657
  %v659 = vpop.f32.mrf.mxu0
  %v660 = vadd.f32 0.0, %v659
  %661 = vmatprep.mubr.f32.mxu0 0.0
  %662 = vmatmul.mubr.f32.gmra.mxu0 %v359
  %v663 = vpop.f32.mrf.mxu0
  %v664 = vadd.f32 0.0, %v663
  %v665 = vpop.f32.mrf.mxu0
  %v666 = vadd.f32 0.0, %v665
  %667 = vmatprep.mubr.f32.mxu0 0.0
  %668 = vmatmul.mubr.f32.gmra.mxu0 %v362
  %v669 = vpop.f32.mrf.mxu0
  %v670 = vadd.f32 0.0, %v669
  %v671 = vpop.f32.mrf.mxu0
  %v672 = vadd.f32 0.0, %v671
  %673 = vmatprep.mubr.f32.mxu0 0.0
  %674 = vmatmul.mubr.f32.gmra.mxu0 %v365
  %v675 = vpop.f32.mrf.mxu0
  %v676 = vadd.f32 0.0, %v675
  %v677 = vpop.f32.mrf.mxu0
  %v678 = vadd.f32 0.0, %v677
  %679 = vmatprep.mubr.f32.mxu0 0.0
  %680 = vmatmul.mubr.f32.gmra.mxu0 %v368
  %v681 = vpop.f32.mrf.mxu0
  %v682 = vadd.f32 0.0, %v681
  %v683 = vpop.f32.mrf.mxu0
  %v684 = vadd.f32 0.0, %v683
  %685 = vmatprep.mubr.f32.mxu0 0.0
  %686 = vmatmul.mubr.f32.gmra.mxu0 %v371
  %v687 = vpop.f32.mrf.mxu0
  %v688 = vadd.f32 0.0, %v687
  %v689 = vpop.f32.mrf.mxu0
  %v690 = vadd.f32 0.0, %v689
  %691 = vmatprep.mubr.f32.mxu0 0.0
  %692 = vmatmul.mubr.f32.gmra.mxu0 %v374
  %v693 = vpop.f32.mrf.mxu0
  %v694 = vadd.f32 0.0, %v693
  %v695 = vpop.f32.mrf.mxu0
  %v696 = vadd.f32 0.0, %v695
  %697 = vmatprep.mubr.f32.mxu0 0.0
  %698 = vmatmul.mubr.f32.gmra.mxu0 %v553
  %v699 = vpop.f32.mrf.mxu0
  %v700 = vadd.f32 0.0, %v699
  %v701 = vpop.f32.mrf.mxu0
  %v702 = vadd.f32 0.0, %v701
  %703 = vdwg.mxu0
  %v704 = vadd.f32 %v443, %v622
  %v705 = vadd.f32 %v445, %v624
  %v706 = vadd.f32 %v449, %v628
  %v707 = vadd.f32 %v451, %v630
  %v708 = vadd.f32 %v455, %v634
  %v709 = vadd.f32 %v457, %v636
  %v710 = vadd.f32 %v461, %v640
  %v711 = vadd.f32 %v463, %v642
  %v712 = vadd.f32 %v467, %v646
  %v713 = vadd.f32 %v469, %v648
  %v714 = vadd.f32 %v473, %v652
  %v715 = vadd.f32 %v475, %v654
  %v716 = vadd.f32 %v479, %v658
  %v717 = vadd.f32 %v481, %v660
  %v718 = vadd.f32 %v485, %v664
  %v719 = vadd.f32 %v487, %v666
  %v720 = vadd.f32 %v491, %v670
  %v721 = vadd.f32 %v493, %v672
  %v722 = vadd.f32 %v497, %v676
  %v723 = vadd.f32 %v499, %v678
  %v724 = vadd.f32 %v503, %v682
  %v725 = vadd.f32 %v505, %v684
  %v726 = vadd.f32 %v509, %v688
  %v727 = vadd.f32 %v511, %v690
  %v728 = vadd.f32 %v515, %v694
  %v729 = vadd.f32 %v517, %v696
  %v730 = vadd.f32 %v521, %v700
  %v731 = vadd.f32 %v523, %v702
  %s732 = scalar_lea.vmem %s0, 232
  %v733 = vld [vmem:[%s732] sm:$0xff]
  %s734 = scalar_lea.vmem %s1, 576
  %v735 = vld [vmem:[%s734] sm:$0xff]
  %v736 = vld [vmem:[%s734 + $0x8] sm:$0xff]
  %v737 = vld [vmem:[%s734 + $0x10] sm:$0xff]
  %v738 = vld [vmem:[%s734 + $0x18] sm:$0xff]
  %v739 = vld [vmem:[%s734 + $0x20] sm:$0xff]
  %v740 = vld [vmem:[%s734 + $0x28] sm:$0xff]
  %v741 = vld [vmem:[%s734 + $0x30] sm:$0xff]
  %v742 = vld [vmem:[%s734 + $0x38] sm:$0xff]
  %v743 = vld [vmem:[%s734 + $0x40] sm:$0xff]
  %v744 = vld [vmem:[%s734 + $0x48] sm:$0xff]
  %v745 = vld [vmem:[%s734 + $0x50] sm:$0xff]
  %v746 = vld [vmem:[%s734 + $0x58] sm:$0xff]
  %v747 = vld [vmem:[%s734 + $0x60] sm:$0xff]
  %v748 = vld [vmem:[%s734 + $0x68] sm:$0xff]
  %v749 = vld [vmem:[%s734 + $0x70] sm:$0xff]
  %v750 = vld [vmem:[%s734 + $0x78] sm:$0xff]
  %v751 = vld [vmem:[%s734 + $0x80] sm:$0xff]
  %v752 = vld [vmem:[%s734 + $0x88] sm:$0xff]
  %v753 = vld [vmem:[%s734 + $0x90] sm:$0xff]
  %v754 = vld [vmem:[%s734 + $0x98] sm:$0xff]
  %v755 = vld [vmem:[%s734 + $0xa0] sm:$0xff]
  %v756 = vld [vmem:[%s734 + $0xa8] sm:$0xff]
  %v757 = vld [vmem:[%s734 + $0xb0] sm:$0xff]
  %v758 = vld [vmem:[%s734 + $0xb8] sm:$0xff]
  %v760 = vsel %vm142, %v733, 0
  %762 = vmatprep.subr.mxu0 0.0
  %763 = vmatpush1.msra.mxu0 0.0
  %764 = vmatprep.subr.mxu0 0.0
  %765 = vmatpush1.msra.mxu0 0.0
  %766 = vmatprep.subr.mxu0 0.0
  %767 = vmatpush1.msra.mxu0 0.0
  %768 = vmatprep.subr.mxu0 0.0
  %769 = vmatpush1.msra.mxu0 0.0
  %770 = vmatprep.subr.mxu0 %v758
  %771 = vmatpush1.msra.mxu0 %v757
  %772 = vmatprep.subr.mxu0 %v756
  %773 = vmatpush1.msra.mxu0 %v755
  %774 = vmatprep.subr.mxu0 %v754
  %775 = vmatpush1.msra.mxu0 %v753
  %776 = vmatprep.subr.mxu0 %v752
  %777 = vmatpush1.msra.mxu0 %v751
  %778 = vmatprep.subr.mxu0 %v750
  %779 = vmatpush1.msra.mxu0 %v749
  %780 = vmatprep.subr.mxu0 %v748
  %781 = vmatpush1.msra.mxu0 %v747
  %782 = vmatprep.subr.mxu0 %v746
  %783 = vmatpush1.msra.mxu0 %v745
  %784 = vmatprep.subr.mxu0 %v744
  %785 = vmatpush1.msra.mxu0 %v743
  %786 = vmatprep.subr.mxu0 %v742
  %787 = vmatpush1.msra.mxu0 %v741
  %788 = vmatprep.subr.mxu0 %v740
  %789 = vmatpush1.msra.mxu0 %v739
  %790 = vmatprep.subr.mxu0 %v738
  %791 = vmatpush1.msra.mxu0 %v737
  %792 = vmatprep.subr.mxu0 %v736
  %793 = vmatpush1.msra.mxu0 %v735
  %794 = vmatprep.subr.mxu0 0.0
  %795 = vmatpush2.msra.mxu0 0.0
  %796 = vmatprep.subr.mxu0 0.0
  %797 = vmatpush2.msra.mxu0 0.0
  %798 = vmatprep.subr.mxu0 0.0
  %799 = vmatpush2.msra.mxu0 0.0
  %800 = vmatprep.subr.mxu0 0.0
  %801 = vmatpush2.msra.mxu0 0.0
  %802 = vmatprep.subr.mxu0 0.0
  %803 = vmatpush2.msra.mxu0 0.0
  %804 = vmatprep.subr.mxu0 0.0
  %805 = vmatpush2.msra.mxu0 0.0
  %806 = vmatprep.subr.mxu0 0.0
  %807 = vmatpush2.msra.mxu0 0.0
  %808 = vmatprep.subr.mxu0 0.0
  %809 = vmatpush2.msra.mxu0 0.0
  %810 = vmatprep.subr.mxu0 0.0
  %811 = vmatpush2.msra.mxu0 0.0
  %812 = vmatprep.subr.mxu0 0.0
  %813 = vmatpush2.msra.mxu0 0.0
  %814 = vmatprep.subr.mxu0 0.0
  %815 = vmatpush2.msra.mxu0 0.0
  %816 = vmatprep.subr.mxu0 0.0
  %817 = vmatpush2.msra.mxu0 0.0
  %818 = vmatprep.subr.mxu0 0.0
  %819 = vmatpush2.msra.mxu0 0.0
  %820 = vmatprep.subr.mxu0 0.0
  %821 = vmatpush2.msra.mxu0 0.0
  %822 = vmatprep.subr.mxu0 0.0
  %823 = vmatpush2.msra.mxu0 0.0
  %824 = vmatprep.subr.mxu0 0.0
  %825 = vmatpush2.msra.mxu0 0.0
  %826 = vmatprep.mubr.f32.mxu0 0.0
  %827 = vmatmul.mubr.f32.gmra.mxu0 %v147
  %v828 = vpop.f32.mrf.mxu0
  %v829 = vadd.f32 0.0, %v828
  %v830 = vpop.f32.mrf.mxu0
  %v831 = vadd.f32 0.0, %v830
  %832 = vmatprep.mubr.f32.mxu0 0.0
  %833 = vmatmul.mubr.f32.gmra.mxu0 %v150
  %v834 = vpop.f32.mrf.mxu0
  %v835 = vadd.f32 0.0, %v834
  %v836 = vpop.f32.mrf.mxu0
  %v837 = vadd.f32 0.0, %v836
  %838 = vmatprep.mubr.f32.mxu0 0.0
  %839 = vmatmul.mubr.f32.gmra.mxu0 %v153
  %v840 = vpop.f32.mrf.mxu0
  %v841 = vadd.f32 0.0, %v840
  %v842 = vpop.f32.mrf.mxu0
  %v843 = vadd.f32 0.0, %v842
  %844 = vmatprep.mubr.f32.mxu0 0.0
  %845 = vmatmul.mubr.f32.gmra.mxu0 %v156
  %v846 = vpop.f32.mrf.mxu0
  %v847 = vadd.f32 0.0, %v846
  %v848 = vpop.f32.mrf.mxu0
  %v849 = vadd.f32 0.0, %v848
  %850 = vmatprep.mubr.f32.mxu0 0.0
  %851 = vmatmul.mubr.f32.gmra.mxu0 %v159
  %v852 = vpop.f32.mrf.mxu0
  %v853 = vadd.f32 0.0, %v852
  %v854 = vpop.f32.mrf.mxu0
  %v855 = vadd.f32 0.0, %v854
  %856 = vmatprep.mubr.f32.mxu0 0.0
  %857 = vmatmul.mubr.f32.gmra.mxu0 %v162
  %v858 = vpop.f32.mrf.mxu0
  %v859 = vadd.f32 0.0, %v858
  %v860 = vpop.f32.mrf.mxu0
  %v861 = vadd.f32 0.0, %v860
  %862 = vmatprep.mubr.f32.mxu0 0.0
  %863 = vmatmul.mubr.f32.gmra.mxu0 %v165
  %v864 = vpop.f32.mrf.mxu0
  %v865 = vadd.f32 0.0, %v864
  %v866 = vpop.f32.mrf.mxu0
  %v867 = vadd.f32 0.0, %v866
  %868 = vmatprep.mubr.f32.mxu0 0.0
  %869 = vmatmul.mubr.f32.gmra.mxu0 %v168
  %v870 = vpop.f32.mrf.mxu0
  %v871 = vadd.f32 0.0, %v870
  %v872 = vpop.f32.mrf.mxu0
  %v873 = vadd.f32 0.0, %v872
  %874 = vmatprep.mubr.f32.mxu0 0.0
  %875 = vmatmul.mubr.f32.gmra.mxu0 %v171
  %v876 = vpop.f32.mrf.mxu0
  %v877 = vadd.f32 0.0, %v876
  %v878 = vpop.f32.mrf.mxu0
  %v879 = vadd.f32 0.0, %v878
  %880 = vmatprep.mubr.f32.mxu0 0.0
  %881 = vmatmul.mubr.f32.gmra.mxu0 %v174
  %v882 = vpop.f32.mrf.mxu0
  %v883 = vadd.f32 0.0, %v882
  %v884 = vpop.f32.mrf.mxu0
  %v885 = vadd.f32 0.0, %v884
  %886 = vmatprep.mubr.f32.mxu0 0.0
  %887 = vmatmul.mubr.f32.gmra.mxu0 %v177
  %v888 = vpop.f32.mrf.mxu0
  %v889 = vadd.f32 0.0, %v888
  %v890 = vpop.f32.mrf.mxu0
  %v891 = vadd.f32 0.0, %v890
  %892 = vmatprep.mubr.f32.mxu0 0.0
  %893 = vmatmul.mubr.f32.gmra.mxu0 %v180
  %v894 = vpop.f32.mrf.mxu0
  %v895 = vadd.f32 0.0, %v894
  %v896 = vpop.f32.mrf.mxu0
  %v897 = vadd.f32 0.0, %v896
  %898 = vmatprep.mubr.f32.mxu0 0.0
  %899 = vmatmul.mubr.f32.gmra.mxu0 %v183
  %v900 = vpop.f32.mrf.mxu0
  %v901 = vadd.f32 0.0, %v900
  %v902 = vpop.f32.mrf.mxu0
  %v903 = vadd.f32 0.0, %v902
  %904 = vmatprep.mubr.f32.mxu0 0.0
  %905 = vmatmul.mubr.f32.gmra.mxu0 %v760
  %v906 = vpop.f32.mrf.mxu0
  %v907 = vadd.f32 0.0, %v906
  %v908 = vpop.f32.mrf.mxu0
  %v909 = vadd.f32 0.0, %v908
  %910 = vdwg.mxu0
  %v911 = vadd.f32 %v704, %v829
  %v912 = vadd.f32 %v705, %v831
  %v913 = vadd.f32 %v706, %v835
  %v914 = vadd.f32 %v707, %v837
  %v915 = vadd.f32 %v708, %v841
  %v916 = vadd.f32 %v709, %v843
  %v917 = vadd.f32 %v710, %v847
  %v918 = vadd.f32 %v711, %v849
  %v919 = vadd.f32 %v712, %v853
  %v920 = vadd.f32 %v713, %v855
  %v921 = vadd.f32 %v714, %v859
  %v922 = vadd.f32 %v715, %v861
  %v923 = vadd.f32 %v716, %v865
  %v924 = vadd.f32 %v717, %v867
  %v925 = vadd.f32 %v718, %v871
  %v926 = vadd.f32 %v719, %v873
  %v927 = vadd.f32 %v720, %v877
  %v928 = vadd.f32 %v721, %v879
  %v929 = vadd.f32 %v722, %v883
  %v930 = vadd.f32 %v723, %v885
  %v931 = vadd.f32 %v724, %v889
  %v932 = vadd.f32 %v725, %v891
  %v933 = vadd.f32 %v726, %v895
  %v934 = vadd.f32 %v727, %v897
  %v935 = vadd.f32 %v728, %v901
  %v936 = vadd.f32 %v729, %v903
  %v937 = vadd.f32 %v730, %v907
  %v938 = vadd.f32 %v731, %v909
  %s939 = scalar_lea.vmem %s0, 240
  %v940 = vld [vmem:[%s939] sm:$0xff]
  %s941 = scalar_lea.vmem %s1, 768
  %v942 = vld [vmem:[%s941] sm:$0xff]
  %v943 = vld [vmem:[%s941 + $0x8] sm:$0xff]
  %v944 = vld [vmem:[%s941 + $0x10] sm:$0xff]
  %v945 = vld [vmem:[%s941 + $0x18] sm:$0xff]
  %v946 = vld [vmem:[%s941 + $0x20] sm:$0xff]
  %v947 = vld [vmem:[%s941 + $0x28] sm:$0xff]
  %v948 = vld [vmem:[%s941 + $0x30] sm:$0xff]
  %v949 = vld [vmem:[%s941 + $0x38] sm:$0xff]
  %v950 = vld [vmem:[%s941 + $0x40] sm:$0xff]
  %v951 = vld [vmem:[%s941 + $0x48] sm:$0xff]
  %v952 = vld [vmem:[%s941 + $0x50] sm:$0xff]
  %v953 = vld [vmem:[%s941 + $0x58] sm:$0xff]
  %v954 = vld [vmem:[%s941 + $0x60] sm:$0xff]
  %v955 = vld [vmem:[%s941 + $0x68] sm:$0xff]
  %v956 = vld [vmem:[%s941 + $0x70] sm:$0xff]
  %v957 = vld [vmem:[%s941 + $0x78] sm:$0xff]
  %v958 = vld [vmem:[%s941 + $0x80] sm:$0xff]
  %v959 = vld [vmem:[%s941 + $0x88] sm:$0xff]
  %v960 = vld [vmem:[%s941 + $0x90] sm:$0xff]
  %v961 = vld [vmem:[%s941 + $0x98] sm:$0xff]
  %v962 = vld [vmem:[%s941 + $0xa0] sm:$0xff]
  %v963 = vld [vmem:[%s941 + $0xa8] sm:$0xff]
  %v964 = vld [vmem:[%s941 + $0xb0] sm:$0xff]
  %v965 = vld [vmem:[%s941 + $0xb8] sm:$0xff]
  %v967 = vsel %vm142, %v940, 0
  %969 = vmatprep.subr.mxu0 0.0
  %970 = vmatpush1.msra.mxu0 0.0
  %971 = vmatprep.subr.mxu0 0.0
  %972 = vmatpush1.msra.mxu0 0.0
  %973 = vmatprep.subr.mxu0 0.0
  %974 = vmatpush1.msra.mxu0 0.0
  %975 = vmatprep.subr.mxu0 0.0
  %976 = vmatpush1.msra.mxu0 0.0
  %977 = vmatprep.subr.mxu0 %v965
  %978 = vmatpush1.msra.mxu0 %v964
  %979 = vmatprep.subr.mxu0 %v963
  %980 = vmatpush1.msra.mxu0 %v962
  %981 = vmatprep.subr.mxu0 %v961
  %982 = vmatpush1.msra.mxu0 %v960
  %983 = vmatprep.subr.mxu0 %v959
  %984 = vmatpush1.msra.mxu0 %v958
  %985 = vmatprep.subr.mxu0 %v957
  %986 = vmatpush1.msra.mxu0 %v956
  %987 = vmatprep.subr.mxu0 %v955
  %988 = vmatpush1.msra.mxu0 %v954
  %989 = vmatprep.subr.mxu0 %v953
  %990 = vmatpush1.msra.mxu0 %v952
  %991 = vmatprep.subr.mxu0 %v951
  %992 = vmatpush1.msra.mxu0 %v950
  %993 = vmatprep.subr.mxu0 %v949
  %994 = vmatpush1.msra.mxu0 %v948
  %995 = vmatprep.subr.mxu0 %v947
  %996 = vmatpush1.msra.mxu0 %v946
  %997 = vmatprep.subr.mxu0 %v945
  %998 = vmatpush1.msra.mxu0 %v944
  %999 = vmatprep.subr.mxu0 %v943
  %1000 = vmatpush1.msra.mxu0 %v942
  %1001 = vmatprep.subr.mxu0 0.0
  %1002 = vmatpush2.msra.mxu0 0.0
  %1003 = vmatprep.subr.mxu0 0.0
  %1004 = vmatpush2.msra.mxu0 0.0
  %1005 = vmatprep.subr.mxu0 0.0
  %1006 = vmatpush2.msra.mxu0 0.0
  %1007 = vmatprep.subr.mxu0 0.0
  %1008 = vmatpush2.msra.mxu0 0.0
  %1009 = vmatprep.subr.mxu0 0.0
  %1010 = vmatpush2.msra.mxu0 0.0
  %1011 = vmatprep.subr.mxu0 0.0
  %1012 = vmatpush2.msra.mxu0 0.0
  %1013 = vmatprep.subr.mxu0 0.0
  %1014 = vmatpush2.msra.mxu0 0.0
  %1015 = vmatprep.subr.mxu0 0.0
  %1016 = vmatpush2.msra.mxu0 0.0
  %1017 = vmatprep.subr.mxu0 0.0
  %1018 = vmatpush2.msra.mxu0 0.0
  %1019 = vmatprep.subr.mxu0 0.0
  %1020 = vmatpush2.msra.mxu0 0.0
  %1021 = vmatprep.subr.mxu0 0.0
  %1022 = vmatpush2.msra.mxu0 0.0
  %1023 = vmatprep.subr.mxu0 0.0
  %1024 = vmatpush2.msra.mxu0 0.0
  %1025 = vmatprep.subr.mxu0 0.0
  %1026 = vmatpush2.msra.mxu0 0.0
  %1027 = vmatprep.subr.mxu0 0.0
  %1028 = vmatpush2.msra.mxu0 0.0
  %1029 = vmatprep.subr.mxu0 0.0
  %1030 = vmatpush2.msra.mxu0 0.0
  %1031 = vmatprep.subr.mxu0 0.0
  %1032 = vmatpush2.msra.mxu0 0.0
  %1033 = vmatprep.mubr.f32.mxu0 0.0
  %1034 = vmatmul.mubr.f32.gmra.mxu0 %v341
  %v1035 = vpop.f32.mrf.mxu0
  %v1036 = vadd.f32 0.0, %v1035
  %v1037 = vpop.f32.mrf.mxu0
  %v1038 = vadd.f32 0.0, %v1037
  %1039 = vmatprep.mubr.f32.mxu0 0.0
  %1040 = vmatmul.mubr.f32.gmra.mxu0 %v344
  %v1041 = vpop.f32.mrf.mxu0
  %v1042 = vadd.f32 0.0, %v1041
  %v1043 = vpop.f32.mrf.mxu0
  %v1044 = vadd.f32 0.0, %v1043
  %1045 = vmatprep.mubr.f32.mxu0 0.0
  %1046 = vmatmul.mubr.f32.gmra.mxu0 %v347
  %v1047 = vpop.f32.mrf.mxu0
  %v1048 = vadd.f32 0.0, %v1047
  %v1049 = vpop.f32.mrf.mxu0
  %v1050 = vadd.f32 0.0, %v1049
  %1051 = vmatprep.mubr.f32.mxu0 0.0
  %1052 = vmatmul.mubr.f32.gmra.mxu0 %v350
  %v1053 = vpop.f32.mrf.mxu0
  %v1054 = vadd.f32 0.0, %v1053
  %v1055 = vpop.f32.mrf.mxu0
  %v1056 = vadd.f32 0.0, %v1055
  %1057 = vmatprep.mubr.f32.mxu0 0.0
  %1058 = vmatmul.mubr.f32.gmra.mxu0 %v353
  %v1059 = vpop.f32.mrf.mxu0
  %v1060 = vadd.f32 0.0, %v1059
  %v1061 = vpop.f32.mrf.mxu0
  %v1062 = vadd.f32 0.0, %v1061
  %1063 = vmatprep.mubr.f32.mxu0 0.0
  %1064 = vmatmul.mubr.f32.gmra.mxu0 %v356
  %v1065 = vpop.f32.mrf.mxu0
  %v1066 = vadd.f32 0.0, %v1065
  %v1067 = vpop.f32.mrf.mxu0
  %v1068 = vadd.f32 0.0, %v1067
  %1069 = vmatprep.mubr.f32.mxu0 0.0
  %1070 = vmatmul.mubr.f32.gmra.mxu0 %v359
  %v1071 = vpop.f32.mrf.mxu0
  %v1072 = vadd.f32 0.0, %v1071
  %v1073 = vpop.f32.mrf.mxu0
  %v1074 = vadd.f32 0.0, %v1073
  %1075 = vmatprep.mubr.f32.mxu0 0.0
  %1076 = vmatmul.mubr.f32.gmra.mxu0 %v362
  %v1077 = vpop.f32.mrf.mxu0
  %v1078 = vadd.f32 0.0, %v1077
  %v1079 = vpop.f32.mrf.mxu0
  %v1080 = vadd.f32 0.0, %v1079
  %1081 = vmatprep.mubr.f32.mxu0 0.0
  %1082 = vmatmul.mubr.f32.gmra.mxu0 %v365
  %v1083 = vpop.f32.mrf.mxu0
  %v1084 = vadd.f32 0.0, %v1083
  %v1085 = vpop.f32.mrf.mxu0
  %v1086 = vadd.f32 0.0, %v1085
  %1087 = vmatprep.mubr.f32.mxu0 0.0
  %1088 = vmatmul.mubr.f32.gmra.mxu0 %v368
  %v1089 = vpop.f32.mrf.mxu0
  %v1090 = vadd.f32 0.0, %v1089
  %v1091 = vpop.f32.mrf.mxu0
  %v1092 = vadd.f32 0.0, %v1091
  %1093 = vmatprep.mubr.f32.mxu0 0.0
  %1094 = vmatmul.mubr.f32.gmra.mxu0 %v371
  %v1095 = vpop.f32.mrf.mxu0
  %v1096 = vadd.f32 0.0, %v1095
  %v1097 = vpop.f32.mrf.mxu0
  %v1098 = vadd.f32 0.0, %v1097
  %1099 = vmatprep.mubr.f32.mxu0 0.0
  %1100 = vmatmul.mubr.f32.gmra.mxu0 %v374
  %v1101 = vpop.f32.mrf.mxu0
  %v1102 = vadd.f32 0.0, %v1101
  %v1103 = vpop.f32.mrf.mxu0
  %v1104 = vadd.f32 0.0, %v1103
  %1105 = vmatprep.mubr.f32.mxu0 0.0
  %1106 = vmatmul.mubr.f32.gmra.mxu0 %v553
  %v1107 = vpop.f32.mrf.mxu0
  %v1108 = vadd.f32 0.0, %v1107
  %v1109 = vpop.f32.mrf.mxu0
  %v1110 = vadd.f32 0.0, %v1109
  %1111 = vmatprep.mubr.f32.mxu0 0.0
  %1112 = vmatmul.mubr.f32.gmra.mxu0 %v967
  %v1113 = vpop.f32.mrf.mxu0
  %v1114 = vadd.f32 0.0, %v1113
  %v1115 = vpop.f32.mrf.mxu0
  %v1116 = vadd.f32 0.0, %v1115
  %1117 = vdwg.mxu0
  %v1118 = vadd.f32 %v911, %v1036
  %v1119 = vadd.f32 %v912, %v1038
  %v1120 = vadd.f32 %v913, %v1042
  %v1121 = vadd.f32 %v914, %v1044
  %v1122 = vadd.f32 %v915, %v1048
  %v1123 = vadd.f32 %v916, %v1050
  %v1124 = vadd.f32 %v917, %v1054
  %v1125 = vadd.f32 %v918, %v1056
  %v1126 = vadd.f32 %v919, %v1060
  %v1127 = vadd.f32 %v920, %v1062
  %v1128 = vadd.f32 %v921, %v1066
  %v1129 = vadd.f32 %v922, %v1068
  %v1130 = vadd.f32 %v923, %v1072
  %v1131 = vadd.f32 %v924, %v1074
  %v1132 = vadd.f32 %v925, %v1078
  %v1133 = vadd.f32 %v926, %v1080
  %v1134 = vadd.f32 %v927, %v1084
  %v1135 = vadd.f32 %v928, %v1086
  %v1136 = vadd.f32 %v929, %v1090
  %v1137 = vadd.f32 %v930, %v1092
  %v1138 = vadd.f32 %v931, %v1096
  %v1139 = vadd.f32 %v932, %v1098
  %v1140 = vadd.f32 %v933, %v1102
  %v1141 = vadd.f32 %v934, %v1104
  %v1142 = vadd.f32 %v935, %v1108
  %v1143 = vadd.f32 %v936, %v1110
  %v1144 = vadd.f32 %v937, %v1114
  %v1145 = vadd.f32 %v938, %v1116
  %v1146 = vmax.f32 %v1118, %v1119
  %v1147 = vmax.f32 %v1120, %v1121
  %v1148 = vmax.f32 %v1122, %v1123
  %v1149 = vmax.f32 %v1124, %v1125
  %v1150 = vmax.f32 %v1126, %v1127
  %v1151 = vmax.f32 %v1128, %v1129
  %v1152 = vmax.f32 %v1130, %v1131
  %v1153 = vmax.f32 %v1132, %v1133
  %v1154 = vmax.f32 %v1134, %v1135
  %v1155 = vmax.f32 %v1136, %v1137
  %v1156 = vmax.f32 %v1138, %v1139
  %v1157 = vmax.f32 %v1140, %v1141
  %v1158 = vmax.f32 %v1142, %v1143
  %v1159 = vmax.f32 %v1144, %v1145
  %vm1160 = vcmask 687104
  %1161 = vst.msk [vmem:[#allocation2] sm:$0xff] %vm1160, %v1146
  %1162 = vst.msk [vmem:[#allocation2 + $0x8] sm:$0xff] %vm1160, %v1147
  %1163 = vst.msk [vmem:[#allocation2 + $0x10] sm:$0xff] %vm1160, %v1148
  %1164 = vst.msk [vmem:[#allocation2 + $0x18] sm:$0xff] %vm1160, %v1149
  %1165 = vst.msk [vmem:[#allocation2 + $0x20] sm:$0xff] %vm1160, %v1150
  %1166 = vst.msk [vmem:[#allocation2 + $0x28] sm:$0xff] %vm1160, %v1151
  %1167 = vst.msk [vmem:[#allocation2 + $0x30] sm:$0xff] %vm1160, %v1152
  %1168 = vst.msk [vmem:[#allocation2 + $0x38] sm:$0xff] %vm1160, %v1153
  %1169 = vst.msk [vmem:[#allocation2 + $0x40] sm:$0xff] %vm1160, %v1154
  %1170 = vst.msk [vmem:[#allocation2 + $0x48] sm:$0xff] %vm1160, %v1155
  %1171 = vst.msk [vmem:[#allocation2 + $0x50] sm:$0xff] %vm1160, %v1156
  %1172 = vst.msk [vmem:[#allocation2 + $0x58] sm:$0xff] %vm1160, %v1157
  %1173 = vst.msk [vmem:[#allocation2 + $0x60] sm:$0xff] %vm1160, %v1158
  %1174 = vst.msk [vmem:[#allocation2 + $0x68] sm:$0xff] %vm1160, %v1159
  %v1175 = vld [vmem:[%s89] sm:$0xff]
  %v1176 = vld [vmem:[%s91] sm:$0xff]
  %v1177 = vld [vmem:[%s93] sm:$0xff]
  %v1178 = vld [vmem:[%s95] sm:$0xff]
  %v1179 = vld [vmem:[%s97] sm:$0xff]
  %v1180 = vld [vmem:[%s99] sm:$0xff]
  %v1181 = vld [vmem:[%s101] sm:$0xff]
  %v1182 = vld [vmem:[%s103] sm:$0xff]
  %v1183 = vld [vmem:[%s105] sm:$0xff]
  %v1184 = vld [vmem:[%s107] sm:$0xff]
  %v1185 = vld [vmem:[%s109] sm:$0xff]
  %v1186 = vld [vmem:[%s111] sm:$0xff]
  %v1187 = vld [vmem:[%s113] sm:$0xff]
  %v1188 = vld [vmem:[%s115] sm:$0xff]
  %v1189 = vld [vmem:[%s1] sm:$0xff]
  %v1190 = vld [vmem:[%s1 + $0x8] sm:$0xff]
  %v1191 = vld [vmem:[%s1 + $0x10] sm:$0xff]
  %v1192 = vld [vmem:[%s1 + $0x18] sm:$0xff]
  %v1193 = vld [vmem:[%s1 + $0x20] sm:$0xff]
  %v1194 = vld [vmem:[%s1 + $0x28] sm:$0xff]
  %v1195 = vld [vmem:[%s1 + $0x30] sm:$0xff]
  %v1196 = vld [vmem:[%s1 + $0x38] sm:$0xff]
  %v1197 = vld [vmem:[%s1 + $0x40] sm:$0xff]
  %v1198 = vld [vmem:[%s1 + $0x48] sm:$0xff]
  %v1199 = vld [vmem:[%s1 + $0x50] sm:$0xff]
  %v1200 = vld [vmem:[%s1 + $0x58] sm:$0xff]
  %v1201 = vld [vmem:[%s1 + $0x60] sm:$0xff]
  %v1202 = vld [vmem:[%s1 + $0x68] sm:$0xff]
  %v1203 = vld [vmem:[%s1 + $0x70] sm:$0xff]
  %v1204 = vld [vmem:[%s1 + $0x78] sm:$0xff]
  %v1205 = vld [vmem:[%s1 + $0x80] sm:$0xff]
  %v1206 = vld [vmem:[%s1 + $0x88] sm:$0xff]
  %v1207 = vld [vmem:[%s1 + $0x90] sm:$0xff]
  %v1208 = vld [vmem:[%s1 + $0x98] sm:$0xff]
  %v1209 = vld [vmem:[%s1 + $0xa0] sm:$0xff]
  %v1210 = vld [vmem:[%s1 + $0xa8] sm:$0xff]
  %v1211 = vld [vmem:[%s1 + $0xb0] sm:$0xff]
  %v1212 = vld [vmem:[%s1 + $0xb8] sm:$0xff]
  %v1213 = vld [vmem:[%s39] sm:$0xff]
  %v1214 = vld [vmem:[%s41] sm:$0xff]
  %v1215 = vld [vmem:[%s43] sm:$0xff]
  %v1216 = vld [vmem:[%s45] sm:$0xff]
  %v1217 = vld [vmem:[%s47] sm:$0xff]
  %v1218 = vld [vmem:[%s49] sm:$0xff]
  %v1219 = vld [vmem:[%s51] sm:$0xff]
  %v1220 = vld [vmem:[%s53] sm:$0xff]
  %v1221 = vld [vmem:[%s55] sm:$0xff]
  %v1222 = vld [vmem:[%s57] sm:$0xff]
  %v1223 = vld [vmem:[%s59] sm:$0xff]
  %v1224 = vld [vmem:[%s61] sm:$0xff]
  %v1225 = vld [vmem:[%s63] sm:$0xff]
  %v1226 = vld [vmem:[%s525] sm:$0xff]
  %v1227 = vld [vmem:[%s117] sm:$0xff]
  %v1228 = vld [vmem:[%s117 + $0x8] sm:$0xff]
  %v1229 = vld [vmem:[%s117 + $0x10] sm:$0xff]
  %v1230 = vld [vmem:[%s117 + $0x18] sm:$0xff]
  %v1231 = vld [vmem:[%s117 + $0x20] sm:$0xff]
  %v1232 = vld [vmem:[%s117 + $0x28] sm:$0xff]
  %v1233 = vld [vmem:[%s117 + $0x30] sm:$0xff]
  %v1234 = vld [vmem:[%s117 + $0x38] sm:$0xff]
  %v1235 = vld [vmem:[%s117 + $0x40] sm:$0xff]
  %v1236 = vld [vmem:[%s117 + $0x48] sm:$0xff]
  %v1237 = vld [vmem:[%s117 + $0x50] sm:$0xff]
  %v1238 = vld [vmem:[%s117 + $0x58] sm:$0xff]
  %v1239 = vld [vmem:[%s117 + $0x60] sm:$0xff]
  %v1240 = vld [vmem:[%s117 + $0x68] sm:$0xff]
  %v1241 = vld [vmem:[%s117 + $0x70] sm:$0xff]
  %v1242 = vld [vmem:[%s117 + $0x78] sm:$0xff]
  %v1243 = vld [vmem:[%s117 + $0x80] sm:$0xff]
  %v1244 = vld [vmem:[%s117 + $0x88] sm:$0xff]
  %v1245 = vld [vmem:[%s117 + $0x90] sm:$0xff]
  %v1246 = vld [vmem:[%s117 + $0x98] sm:$0xff]
  %v1247 = vld [vmem:[%s117 + $0xa0] sm:$0xff]
  %v1248 = vld [vmem:[%s117 + $0xa8] sm:$0xff]
  %v1249 = vld [vmem:[%s117 + $0xb0] sm:$0xff]
  %v1250 = vld [vmem:[%s117 + $0xb8] sm:$0xff]
  %v1252 = vsel %vm142, %v1213, 0
  %v1255 = vsel %vm142, %v1214, 0
  %v1258 = vsel %vm142, %v1215, 0
  %v1261 = vsel %vm142, %v1216, 0
  %v1264 = vsel %vm142, %v1217, 0
  %v1267 = vsel %vm142, %v1218, 0
  %v1270 = vsel %vm142, %v1219, 0
  %v1273 = vsel %vm142, %v1220, 0
  %v1276 = vsel %vm142, %v1221, 0
  %v1279 = vsel %vm142, %v1222, 0
  %v1282 = vsel %vm142, %v1223, 0
  %v1285 = vsel %vm142, %v1224, 0
  %v1288 = vsel %vm142, %v1225, 0
  %v1291 = vsel %vm142, %v1226, 0
  %1293 = vmatprep.subr.mxu0 0.0
  %1294 = vmatpush1.msra.mxu0 0.0
  %1295 = vmatprep.subr.mxu0 0.0
  %1296 = vmatpush1.msra.mxu0 0.0
  %1297 = vmatprep.subr.mxu0 0.0
  %1298 = vmatpush1.msra.mxu0 0.0
  %1299 = vmatprep.subr.mxu0 0.0
  %1300 = vmatpush1.msra.mxu0 0.0
  %1301 = vmatprep.subr.mxu0 %v1250
  %1302 = vmatpush1.msra.mxu0 %v1249
  %1303 = vmatprep.subr.mxu0 %v1248
  %1304 = vmatpush1.msra.mxu0 %v1247
  %1305 = vmatprep.subr.mxu0 %v1246
  %1306 = vmatpush1.msra.mxu0 %v1245
  %1307 = vmatprep.subr.mxu0 %v1244
  %1308 = vmatpush1.msra.mxu0 %v1243
  %1309 = vmatprep.subr.mxu0 %v1242
  %1310 = vmatpush1.msra.mxu0 %v1241
  %1311 = vmatprep.subr.mxu0 %v1240
  %1312 = vmatpush1.msra.mxu0 %v1239
  %1313 = vmatprep.subr.mxu0 %v1238
  %1314 = vmatpush1.msra.mxu0 %v1237
  %1315 = vmatprep.subr.mxu0 %v1236
  %1316 = vmatpush1.msra.mxu0 %v1235
  %1317 = vmatprep.subr.mxu0 %v1234
  %1318 = vmatpush1.msra.mxu0 %v1233
  %1319 = vmatprep.subr.mxu0 %v1232
  %1320 = vmatpush1.msra.mxu0 %v1231
  %1321 = vmatprep.subr.mxu0 %v1230
  %1322 = vmatpush1.msra.mxu0 %v1229
  %1323 = vmatprep.subr.mxu0 %v1228
  %1324 = vmatpush1.msra.mxu0 %v1227
  %1325 = vmatprep.subr.mxu0 0.0
  %1326 = vmatpush2.msra.mxu0 0.0
  %1327 = vmatprep.subr.mxu0 0.0
  %1328 = vmatpush2.msra.mxu0 0.0
  %1329 = vmatprep.subr.mxu0 0.0
  %1330 = vmatpush2.msra.mxu0 0.0
  %1331 = vmatprep.subr.mxu0 0.0
  %1332 = vmatpush2.msra.mxu0 0.0
  %1333 = vmatprep.subr.mxu0 0.0
  %1334 = vmatpush2.msra.mxu0 0.0
  %1335 = vmatprep.subr.mxu0 0.0
  %1336 = vmatpush2.msra.mxu0 0.0
  %1337 = vmatprep.subr.mxu0 0.0
  %1338 = vmatpush2.msra.mxu0 0.0
  %1339 = vmatprep.subr.mxu0 0.0
  %1340 = vmatpush2.msra.mxu0 0.0
  %1341 = vmatprep.subr.mxu0 0.0
  %1342 = vmatpush2.msra.mxu0 0.0
  %1343 = vmatprep.subr.mxu0 0.0
  %1344 = vmatpush2.msra.mxu0 0.0
  %1345 = vmatprep.subr.mxu0 0.0
  %1346 = vmatpush2.msra.mxu0 0.0
  %1347 = vmatprep.subr.mxu0 0.0
  %1348 = vmatpush2.msra.mxu0 0.0
  %1349 = vmatprep.subr.mxu0 0.0
  %1350 = vmatpush2.msra.mxu0 0.0
  %1351 = vmatprep.subr.mxu0 0.0
  %1352 = vmatpush2.msra.mxu0 0.0
  %1353 = vmatprep.subr.mxu0 0.0
  %1354 = vmatpush2.msra.mxu0 0.0
  %1355 = vmatprep.subr.mxu0 0.0
  %1356 = vmatpush2.msra.mxu0 0.0
  %1357 = vmatprep.mubr.f32.mxu0 0.0
  %1358 = vmatmul.mubr.f32.gmra.mxu0 %v1252
  %v1359 = vpop.f32.mrf.mxu0
  %v1360 = vadd.f32 0.0, %v1359
  %v1361 = vpop.f32.mrf.mxu0
  %v1362 = vadd.f32 0.0, %v1361
  %1363 = vmatprep.mubr.f32.mxu0 0.0
  %1364 = vmatmul.mubr.f32.gmra.mxu0 %v1255
  %v1365 = vpop.f32.mrf.mxu0
  %v1366 = vadd.f32 0.0, %v1365
  %v1367 = vpop.f32.mrf.mxu0
  %v1368 = vadd.f32 0.0, %v1367
  %1369 = vmatprep.mubr.f32.mxu0 0.0
  %1370 = vmatmul.mubr.f32.gmra.mxu0 %v1258
  %v1371 = vpop.f32.mrf.mxu0
  %v1372 = vadd.f32 0.0, %v1371
  %v1373 = vpop.f32.mrf.mxu0
  %v1374 = vadd.f32 0.0, %v1373
  %1375 = vmatprep.mubr.f32.mxu0 0.0
  %1376 = vmatmul.mubr.f32.gmra.mxu0 %v1261
  %v1377 = vpop.f32.mrf.mxu0
  %v1378 = vadd.f32 0.0, %v1377
  %v1379 = vpop.f32.mrf.mxu0
  %v1380 = vadd.f32 0.0, %v1379
  %1381 = vmatprep.mubr.f32.mxu0 0.0
  %1382 = vmatmul.mubr.f32.gmra.mxu0 %v1264
  %v1383 = vpop.f32.mrf.mxu0
  %v1384 = vadd.f32 0.0, %v1383
  %v1385 = vpop.f32.mrf.mxu0
  %v1386 = vadd.f32 0.0, %v1385
  %1387 = vmatprep.mubr.f32.mxu0 0.0
  %1388 = vmatmul.mubr.f32.gmra.mxu0 %v1267
  %v1389 = vpop.f32.mrf.mxu0
  %v1390 = vadd.f32 0.0, %v1389
  %v1391 = vpop.f32.mrf.mxu0
  %v1392 = vadd.f32 0.0, %v1391
  %1393 = vmatprep.mubr.f32.mxu0 0.0
  %1394 = vmatmul.mubr.f32.gmra.mxu0 %v1270
  %v1395 = vpop.f32.mrf.mxu0
  %v1396 = vadd.f32 0.0, %v1395
  %v1397 = vpop.f32.mrf.mxu0
  %v1398 = vadd.f32 0.0, %v1397
  %1399 = vmatprep.mubr.f32.mxu0 0.0
  %1400 = vmatmul.mubr.f32.gmra.mxu0 %v1273
  %v1401 = vpop.f32.mrf.mxu0
  %v1402 = vadd.f32 0.0, %v1401
  %v1403 = vpop.f32.mrf.mxu0
  %v1404 = vadd.f32 0.0, %v1403
  %1405 = vmatprep.mubr.f32.mxu0 0.0
  %1406 = vmatmul.mubr.f32.gmra.mxu0 %v1276
  %v1407 = vpop.f32.mrf.mxu0
  %v1408 = vadd.f32 0.0, %v1407
  %v1409 = vpop.f32.mrf.mxu0
  %v1410 = vadd.f32 0.0, %v1409
  %1411 = vmatprep.mubr.f32.mxu0 0.0
  %1412 = vmatmul.mubr.f32.gmra.mxu0 %v1279
  %v1413 = vpop.f32.mrf.mxu0
  %v1414 = vadd.f32 0.0, %v1413
  %v1415 = vpop.f32.mrf.mxu0
  %v1416 = vadd.f32 0.0, %v1415
  %1417 = vmatprep.mubr.f32.mxu0 0.0
  %1418 = vmatmul.mubr.f32.gmra.mxu0 %v1282
  %v1419 = vpop.f32.mrf.mxu0
  %v1420 = vadd.f32 0.0, %v1419
  %v1421 = vpop.f32.mrf.mxu0
  %v1422 = vadd.f32 0.0, %v1421
  %1423 = vmatprep.mubr.f32.mxu0 0.0
  %1424 = vmatmul.mubr.f32.gmra.mxu0 %v1285
  %v1425 = vpop.f32.mrf.mxu0
  %v1426 = vadd.f32 0.0, %v1425
  %v1427 = vpop.f32.mrf.mxu0
  %v1428 = vadd.f32 0.0, %v1427
  %1429 = vmatprep.mubr.f32.mxu0 0.0
  %1430 = vmatmul.mubr.f32.gmra.mxu0 %v1288
  %v1431 = vpop.f32.mrf.mxu0
  %v1432 = vadd.f32 0.0, %v1431
  %v1433 = vpop.f32.mrf.mxu0
  %v1434 = vadd.f32 0.0, %v1433
  %1435 = vmatprep.mubr.f32.mxu0 0.0
  %1436 = vmatmul.mubr.f32.gmra.mxu0 %v1291
  %v1437 = vpop.f32.mrf.mxu0
  %v1438 = vadd.f32 0.0, %v1437
  %v1439 = vpop.f32.mrf.mxu0
  %v1440 = vadd.f32 0.0, %v1439
  %1441 = vdwg.mxu0
  %v1443 = vsel %vm142, %v1175, 0
  %v1446 = vsel %vm142, %v1176, 0
  %v1449 = vsel %vm142, %v1177, 0
  %v1452 = vsel %vm142, %v1178, 0
  %v1455 = vsel %vm142, %v1179, 0
  %v1458 = vsel %vm142, %v1180, 0
  %v1461 = vsel %vm142, %v1181, 0
  %v1464 = vsel %vm142, %v1182, 0
  %v1467 = vsel %vm142, %v1183, 0
  %v1470 = vsel %vm142, %v1184, 0
  %v1473 = vsel %vm142, %v1185, 0
  %v1476 = vsel %vm142, %v1186, 0
  %v1479 = vsel %vm142, %v1187, 0
  %v1482 = vsel %vm142, %v1188, 0
  %1484 = vmatprep.subr.mxu0 0.0
  %1485 = vmatpush1.msra.mxu0 0.0
  %1486 = vmatprep.subr.mxu0 0.0
  %1487 = vmatpush1.msra.mxu0 0.0
  %1488 = vmatprep.subr.mxu0 0.0
  %1489 = vmatpush1.msra.mxu0 0.0
  %1490 = vmatprep.subr.mxu0 0.0
  %1491 = vmatpush1.msra.mxu0 0.0
  %1492 = vmatprep.subr.mxu0 %v1212
  %1493 = vmatpush1.msra.mxu0 %v1211
  %1494 = vmatprep.subr.mxu0 %v1210
  %1495 = vmatpush1.msra.mxu0 %v1209
  %1496 = vmatprep.subr.mxu0 %v1208
  %1497 = vmatpush1.msra.mxu0 %v1207
  %1498 = vmatprep.subr.mxu0 %v1206
  %1499 = vmatpush1.msra.mxu0 %v1205
  %1500 = vmatprep.subr.mxu0 %v1204
  %1501 = vmatpush1.msra.mxu0 %v1203
  %1502 = vmatprep.subr.mxu0 %v1202
  %1503 = vmatpush1.msra.mxu0 %v1201
  %1504 = vmatprep.subr.mxu0 %v1200
  %1505 = vmatpush1.msra.mxu0 %v1199
  %1506 = vmatprep.subr.mxu0 %v1198
  %1507 = vmatpush1.msra.mxu0 %v1197
  %1508 = vmatprep.subr.mxu0 %v1196
  %1509 = vmatpush1.msra.mxu0 %v1195
  %1510 = vmatprep.subr.mxu0 %v1194
  %1511 = vmatpush1.msra.mxu0 %v1193
  %1512 = vmatprep.subr.mxu0 %v1192
  %1513 = vmatpush1.msra.mxu0 %v1191
  %1514 = vmatprep.subr.mxu0 %v1190
  %1515 = vmatpush1.msra.mxu0 %v1189
  %1516 = vmatprep.subr.mxu0 0.0
  %1517 = vmatpush2.msra.mxu0 0.0
  %1518 = vmatprep.subr.mxu0 0.0
  %1519 = vmatpush2.msra.mxu0 0.0
  %1520 = vmatprep.subr.mxu0 0.0
  %1521 = vmatpush2.msra.mxu0 0.0
  %1522 = vmatprep.subr.mxu0 0.0
  %1523 = vmatpush2.msra.mxu0 0.0
  %1524 = vmatprep.subr.mxu0 0.0
  %1525 = vmatpush2.msra.mxu0 0.0
  %1526 = vmatprep.subr.mxu0 0.0
  %1527 = vmatpush2.msra.mxu0 0.0
  %1528 = vmatprep.subr.mxu0 0.0
  %1529 = vmatpush2.msra.mxu0 0.0
  %1530 = vmatprep.subr.mxu0 0.0
  %1531 = vmatpush2.msra.mxu0 0.0
  %1532 = vmatprep.subr.mxu0 0.0
  %1533 = vmatpush2.msra.mxu0 0.0
  %1534 = vmatprep.subr.mxu0 0.0
  %1535 = vmatpush2.msra.mxu0 0.0
  %1536 = vmatprep.subr.mxu0 0.0
  %1537 = vmatpush2.msra.mxu0 0.0
  %1538 = vmatprep.subr.mxu0 0.0
  %1539 = vmatpush2.msra.mxu0 0.0
  %1540 = vmatprep.subr.mxu0 0.0
  %1541 = vmatpush2.msra.mxu0 0.0
  %1542 = vmatprep.subr.mxu0 0.0
  %1543 = vmatpush2.msra.mxu0 0.0
  %1544 = vmatprep.subr.mxu0 0.0
  %1545 = vmatpush2.msra.mxu0 0.0
  %1546 = vmatprep.subr.mxu0 0.0
  %1547 = vmatpush2.msra.mxu0 0.0
  %1548 = vmatprep.mubr.f32.mxu0 0.0
  %1549 = vmatmul.mubr.f32.gmra.mxu0 %v1443
  %v1550 = vpop.f32.mrf.mxu0
  %v1551 = vadd.f32 %v1360, %v1550
  %v1552 = vpop.f32.mrf.mxu0
  %v1553 = vadd.f32 %v1362, %v1552
  %1554 = vmatprep.mubr.f32.mxu0 0.0
  %1555 = vmatmul.mubr.f32.gmra.mxu0 %v1446
  %v1556 = vpop.f32.mrf.mxu0
  %v1557 = vadd.f32 %v1366, %v1556
  %v1558 = vpop.f32.mrf.mxu0
  %v1559 = vadd.f32 %v1368, %v1558
  %1560 = vmatprep.mubr.f32.mxu0 0.0
  %1561 = vmatmul.mubr.f32.gmra.mxu0 %v1449
  %v1562 = vpop.f32.mrf.mxu0
  %v1563 = vadd.f32 %v1372, %v1562
  %v1564 = vpop.f32.mrf.mxu0
  %v1565 = vadd.f32 %v1374, %v1564
  %1566 = vmatprep.mubr.f32.mxu0 0.0
  %1567 = vmatmul.mubr.f32.gmra.mxu0 %v1452
  %v1568 = vpop.f32.mrf.mxu0
  %v1569 = vadd.f32 %v1378, %v1568
  %v1570 = vpop.f32.mrf.mxu0
  %v1571 = vadd.f32 %v1380, %v1570
  %1572 = vmatprep.mubr.f32.mxu0 0.0
  %1573 = vmatmul.mubr.f32.gmra.mxu0 %v1455
  %v1574 = vpop.f32.mrf.mxu0
  %v1575 = vadd.f32 %v1384, %v1574
  %v1576 = vpop.f32.mrf.mxu0
  %v1577 = vadd.f32 %v1386, %v1576
  %1578 = vmatprep.mubr.f32.mxu0 0.0
  %1579 = vmatmul.mubr.f32.gmra.mxu0 %v1458
  %v1580 = vpop.f32.mrf.mxu0
  %v1581 = vadd.f32 %v1390, %v1580
  %v1582 = vpop.f32.mrf.mxu0
  %v1583 = vadd.f32 %v1392, %v1582
  %1584 = vmatprep.mubr.f32.mxu0 0.0
  %1585 = vmatmul.mubr.f32.gmra.mxu0 %v1461
  %v1586 = vpop.f32.mrf.mxu0
  %v1587 = vadd.f32 %v1396, %v1586
  %v1588 = vpop.f32.mrf.mxu0
  %v1589 = vadd.f32 %v1398, %v1588
  %1590 = vmatprep.mubr.f32.mxu0 0.0
  %1591 = vmatmul.mubr.f32.gmra.mxu0 %v1464
  %v1592 = vpop.f32.mrf.mxu0
  %v1593 = vadd.f32 %v1402, %v1592
  %v1594 = vpop.f32.mrf.mxu0
  %v1595 = vadd.f32 %v1404, %v1594
  %1596 = vmatprep.mubr.f32.mxu0 0.0
  %1597 = vmatmul.mubr.f32.gmra.mxu0 %v1467
  %v1598 = vpop.f32.mrf.mxu0
  %v1599 = vadd.f32 %v1408, %v1598
  %v1600 = vpop.f32.mrf.mxu0
  %v1601 = vadd.f32 %v1410, %v1600
  %1602 = vmatprep.mubr.f32.mxu0 0.0
  %1603 = vmatmul.mubr.f32.gmra.mxu0 %v1470
  %v1604 = vpop.f32.mrf.mxu0
  %v1605 = vadd.f32 %v1414, %v1604
  %v1606 = vpop.f32.mrf.mxu0
  %v1607 = vadd.f32 %v1416, %v1606
  %1608 = vmatprep.mubr.f32.mxu0 0.0
  %1609 = vmatmul.mubr.f32.gmra.mxu0 %v1473
  %v1610 = vpop.f32.mrf.mxu0
  %v1611 = vadd.f32 %v1420, %v1610
  %v1612 = vpop.f32.mrf.mxu0
  %v1613 = vadd.f32 %v1422, %v1612
  %1614 = vmatprep.mubr.f32.mxu0 0.0
  %1615 = vmatmul.mubr.f32.gmra.mxu0 %v1476
  %v1616 = vpop.f32.mrf.mxu0
  %v1617 = vadd.f32 %v1426, %v1616
  %v1618 = vpop.f32.mrf.mxu0
  %v1619 = vadd.f32 %v1428, %v1618
  %1620 = vmatprep.mubr.f32.mxu0 0.0
  %1621 = vmatmul.mubr.f32.gmra.mxu0 %v1479
  %v1622 = vpop.f32.mrf.mxu0
  %v1623 = vadd.f32 %v1432, %v1622
  %v1624 = vpop.f32.mrf.mxu0
  %v1625 = vadd.f32 %v1434, %v1624
  %1626 = vmatprep.mubr.f32.mxu0 0.0
  %1627 = vmatmul.mubr.f32.gmra.mxu0 %v1482
  %v1628 = vpop.f32.mrf.mxu0
  %v1629 = vadd.f32 %v1438, %v1628
  %v1630 = vpop.f32.mrf.mxu0
  %v1631 = vadd.f32 %v1440, %v1630
  %1632 = vdwg.mxu0
  %v1633 = vld [vmem:[%s732] sm:$0xff]
  %v1634 = vld [vmem:[%s527] sm:$0xff]
  %v1635 = vld [vmem:[%s527 + $0x8] sm:$0xff]
  %v1636 = vld [vmem:[%s527 + $0x10] sm:$0xff]
  %v1637 = vld [vmem:[%s527 + $0x18] sm:$0xff]
  %v1638 = vld [vmem:[%s527 + $0x20] sm:$0xff]
  %v1639 = vld [vmem:[%s527 + $0x28] sm:$0xff]
  %v1640 = vld [vmem:[%s527 + $0x30] sm:$0xff]
  %v1641 = vld [vmem:[%s527 + $0x38] sm:$0xff]
  %v1642 = vld [vmem:[%s527 + $0x40] sm:$0xff]
  %v1643 = vld [vmem:[%s527 + $0x48] sm:$0xff]
  %v1644 = vld [vmem:[%s527 + $0x50] sm:$0xff]
  %v1645 = vld [vmem:[%s527 + $0x58] sm:$0xff]
  %v1646 = vld [vmem:[%s527 + $0x60] sm:$0xff]
  %v1647 = vld [vmem:[%s527 + $0x68] sm:$0xff]
  %v1648 = vld [vmem:[%s527 + $0x70] sm:$0xff]
  %v1649 = vld [vmem:[%s527 + $0x78] sm:$0xff]
  %v1650 = vld [vmem:[%s527 + $0x80] sm:$0xff]
  %v1651 = vld [vmem:[%s527 + $0x88] sm:$0xff]
  %v1652 = vld [vmem:[%s527 + $0x90] sm:$0xff]
  %v1653 = vld [vmem:[%s527 + $0x98] sm:$0xff]
  %v1654 = vld [vmem:[%s527 + $0xa0] sm:$0xff]
  %v1655 = vld [vmem:[%s527 + $0xa8] sm:$0xff]
  %v1656 = vld [vmem:[%s527 + $0xb0] sm:$0xff]
  %v1657 = vld [vmem:[%s527 + $0xb8] sm:$0xff]
  %v1659 = vsel %vm142, %v1633, 0
  %1661 = vmatprep.subr.mxu0 0.0
  %1662 = vmatpush1.msra.mxu0 0.0
  %1663 = vmatprep.subr.mxu0 0.0
  %1664 = vmatpush1.msra.mxu0 0.0
  %1665 = vmatprep.subr.mxu0 0.0
  %1666 = vmatpush1.msra.mxu0 0.0
  %1667 = vmatprep.subr.mxu0 0.0
  %1668 = vmatpush1.msra.mxu0 0.0
  %1669 = vmatprep.subr.mxu0 %v1657
  %1670 = vmatpush1.msra.mxu0 %v1656
  %1671 = vmatprep.subr.mxu0 %v1655
  %1672 = vmatpush1.msra.mxu0 %v1654
  %1673 = vmatprep.subr.mxu0 %v1653
  %1674 = vmatpush1.msra.mxu0 %v1652
  %1675 = vmatprep.subr.mxu0 %v1651
  %1676 = vmatpush1.msra.mxu0 %v1650
  %1677 = vmatprep.subr.mxu0 %v1649
  %1678 = vmatpush1.msra.mxu0 %v1648
  %1679 = vmatprep.subr.mxu0 %v1647
  %1680 = vmatpush1.msra.mxu0 %v1646
  %1681 = vmatprep.subr.mxu0 %v1645
  %1682 = vmatpush1.msra.mxu0 %v1644
  %1683 = vmatprep.subr.mxu0 %v1643
  %1684 = vmatpush1.msra.mxu0 %v1642
  %1685 = vmatprep.subr.mxu0 %v1641
  %1686 = vmatpush1.msra.mxu0 %v1640
  %1687 = vmatprep.subr.mxu0 %v1639
  %1688 = vmatpush1.msra.mxu0 %v1638
  %1689 = vmatprep.subr.mxu0 %v1637
  %1690 = vmatpush1.msra.mxu0 %v1636
  %1691 = vmatprep.subr.mxu0 %v1635
  %1692 = vmatpush1.msra.mxu0 %v1634
  %1693 = vmatprep.subr.mxu0 0.0
  %1694 = vmatpush2.msra.mxu0 0.0
  %1695 = vmatprep.subr.mxu0 0.0
  %1696 = vmatpush2.msra.mxu0 0.0
  %1697 = vmatprep.subr.mxu0 0.0
  %1698 = vmatpush2.msra.mxu0 0.0
  %1699 = vmatprep.subr.mxu0 0.0
  %1700 = vmatpush2.msra.mxu0 0.0
  %1701 = vmatprep.subr.mxu0 0.0
  %1702 = vmatpush2.msra.mxu0 0.0
  %1703 = vmatprep.subr.mxu0 0.0
  %1704 = vmatpush2.msra.mxu0 0.0
  %1705 = vmatprep.subr.mxu0 0.0
  %1706 = vmatpush2.msra.mxu0 0.0
  %1707 = vmatprep.subr.mxu0 0.0
  %1708 = vmatpush2.msra.mxu0 0.0
  %1709 = vmatprep.subr.mxu0 0.0
  %1710 = vmatpush2.msra.mxu0 0.0
  %1711 = vmatprep.subr.mxu0 0.0
  %1712 = vmatpush2.msra.mxu0 0.0
  %1713 = vmatprep.subr.mxu0 0.0
  %1714 = vmatpush2.msra.mxu0 0.0
  %1715 = vmatprep.subr.mxu0 0.0
  %1716 = vmatpush2.msra.mxu0 0.0
  %1717 = vmatprep.subr.mxu0 0.0
  %1718 = vmatpush2.msra.mxu0 0.0
  %1719 = vmatprep.subr.mxu0 0.0
  %1720 = vmatpush2.msra.mxu0 0.0
  %1721 = vmatprep.subr.mxu0 0.0
  %1722 = vmatpush2.msra.mxu0 0.0
  %1723 = vmatprep.subr.mxu0 0.0
  %1724 = vmatpush2.msra.mxu0 0.0
  %1725 = vmatprep.mubr.f32.mxu0 0.0
  %1726 = vmatmul.mubr.f32.gmra.mxu0 %v1446
  %v1727 = vpop.f32.mrf.mxu0
  %v1728 = vadd.f32 0.0, %v1727
  %v1729 = vpop.f32.mrf.mxu0
  %v1730 = vadd.f32 0.0, %v1729
  %1731 = vmatprep.mubr.f32.mxu0 0.0
  %1732 = vmatmul.mubr.f32.gmra.mxu0 %v1449
  %v1733 = vpop.f32.mrf.mxu0
  %v1734 = vadd.f32 0.0, %v1733
  %v1735 = vpop.f32.mrf.mxu0
  %v1736 = vadd.f32 0.0, %v1735
  %1737 = vmatprep.mubr.f32.mxu0 0.0
  %1738 = vmatmul.mubr.f32.gmra.mxu0 %v1452
  %v1739 = vpop.f32.mrf.mxu0
  %v1740 = vadd.f32 0.0, %v1739
  %v1741 = vpop.f32.mrf.mxu0
  %v1742 = vadd.f32 0.0, %v1741
  %1743 = vmatprep.mubr.f32.mxu0 0.0
  %1744 = vmatmul.mubr.f32.gmra.mxu0 %v1455
  %v1745 = vpop.f32.mrf.mxu0
  %v1746 = vadd.f32 0.0, %v1745
  %v1747 = vpop.f32.mrf.mxu0
  %v1748 = vadd.f32 0.0, %v1747
  %1749 = vmatprep.mubr.f32.mxu0 0.0
  %1750 = vmatmul.mubr.f32.gmra.mxu0 %v1458
  %v1751 = vpop.f32.mrf.mxu0
  %v1752 = vadd.f32 0.0, %v1751
  %v1753 = vpop.f32.mrf.mxu0
  %v1754 = vadd.f32 0.0, %v1753
  %1755 = vmatprep.mubr.f32.mxu0 0.0
  %1756 = vmatmul.mubr.f32.gmra.mxu0 %v1461
  %v1757 = vpop.f32.mrf.mxu0
  %v1758 = vadd.f32 0.0, %v1757
  %v1759 = vpop.f32.mrf.mxu0
  %v1760 = vadd.f32 0.0, %v1759
  %1761 = vmatprep.mubr.f32.mxu0 0.0
  %1762 = vmatmul.mubr.f32.gmra.mxu0 %v1464
  %v1763 = vpop.f32.mrf.mxu0
  %v1764 = vadd.f32 0.0, %v1763
  %v1765 = vpop.f32.mrf.mxu0
  %v1766 = vadd.f32 0.0, %v1765
  %1767 = vmatprep.mubr.f32.mxu0 0.0
  %1768 = vmatmul.mubr.f32.gmra.mxu0 %v1467
  %v1769 = vpop.f32.mrf.mxu0
  %v1770 = vadd.f32 0.0, %v1769
  %v1771 = vpop.f32.mrf.mxu0
  %v1772 = vadd.f32 0.0, %v1771
  %1773 = vmatprep.mubr.f32.mxu0 0.0
  %1774 = vmatmul.mubr.f32.gmra.mxu0 %v1470
  %v1775 = vpop.f32.mrf.mxu0
  %v1776 = vadd.f32 0.0, %v1775
  %v1777 = vpop.f32.mrf.mxu0
  %v1778 = vadd.f32 0.0, %v1777
  %1779 = vmatprep.mubr.f32.mxu0 0.0
  %1780 = vmatmul.mubr.f32.gmra.mxu0 %v1473
  %v1781 = vpop.f32.mrf.mxu0
  %v1782 = vadd.f32 0.0, %v1781
  %v1783 = vpop.f32.mrf.mxu0
  %v1784 = vadd.f32 0.0, %v1783
  %1785 = vmatprep.mubr.f32.mxu0 0.0
  %1786 = vmatmul.mubr.f32.gmra.mxu0 %v1476
  %v1787 = vpop.f32.mrf.mxu0
  %v1788 = vadd.f32 0.0, %v1787
  %v1789 = vpop.f32.mrf.mxu0
  %v1790 = vadd.f32 0.0, %v1789
  %1791 = vmatprep.mubr.f32.mxu0 0.0
  %1792 = vmatmul.mubr.f32.gmra.mxu0 %v1479
  %v1793 = vpop.f32.mrf.mxu0
  %v1794 = vadd.f32 0.0, %v1793
  %v1795 = vpop.f32.mrf.mxu0
  %v1796 = vadd.f32 0.0, %v1795
  %1797 = vmatprep.mubr.f32.mxu0 0.0
  %1798 = vmatmul.mubr.f32.gmra.mxu0 %v1482
  %v1799 = vpop.f32.mrf.mxu0
  %v1800 = vadd.f32 0.0, %v1799
  %v1801 = vpop.f32.mrf.mxu0
  %v1802 = vadd.f32 0.0, %v1801
  %1803 = vmatprep.mubr.f32.mxu0 0.0
  %1804 = vmatmul.mubr.f32.gmra.mxu0 %v1659
  %v1805 = vpop.f32.mrf.mxu0
  %v1806 = vadd.f32 0.0, %v1805
  %v1807 = vpop.f32.mrf.mxu0
  %v1808 = vadd.f32 0.0, %v1807
  %1809 = vdwg.mxu0
  %v1810 = vadd.f32 %v1551, %v1728
  %v1811 = vadd.f32 %v1553, %v1730
  %v1812 = vadd.f32 %v1557, %v1734
  %v1813 = vadd.f32 %v1559, %v1736
  %v1814 = vadd.f32 %v1563, %v1740
  %v1815 = vadd.f32 %v1565, %v1742
  %v1816 = vadd.f32 %v1569, %v1746
  %v1817 = vadd.f32 %v1571, %v1748
  %v1818 = vadd.f32 %v1575, %v1752
  %v1819 = vadd.f32 %v1577, %v1754
  %v1820 = vadd.f32 %v1581, %v1758
  %v1821 = vadd.f32 %v1583, %v1760
  %v1822 = vadd.f32 %v1587, %v1764
  %v1823 = vadd.f32 %v1589, %v1766
  %v1824 = vadd.f32 %v1593, %v1770
  %v1825 = vadd.f32 %v1595, %v1772
  %v1826 = vadd.f32 %v1599, %v1776
  %v1827 = vadd.f32 %v1601, %v1778
  %v1828 = vadd.f32 %v1605, %v1782
  %v1829 = vadd.f32 %v1607, %v1784
  %v1830 = vadd.f32 %v1611, %v1788
  %v1831 = vadd.f32 %v1613, %v1790
  %v1832 = vadd.f32 %v1617, %v1794
  %v1833 = vadd.f32 %v1619, %v1796
  %v1834 = vadd.f32 %v1623, %v1800
  %v1835 = vadd.f32 %v1625, %v1802
  %v1836 = vadd.f32 %v1629, %v1806
  %v1837 = vadd.f32 %v1631, %v1808
  %v1838 = vld [vmem:[%s939] sm:$0xff]
  %v1839 = vld [vmem:[%s734] sm:$0xff]
  %v1840 = vld [vmem:[%s734 + $0x8] sm:$0xff]
  %v1841 = vld [vmem:[%s734 + $0x10] sm:$0xff]
  %v1842 = vld [vmem:[%s734 + $0x18] sm:$0xff]
  %v1843 = vld [vmem:[%s734 + $0x20] sm:$0xff]
  %v1844 = vld [vmem:[%s734 + $0x28] sm:$0xff]
  %v1845 = vld [vmem:[%s734 + $0x30] sm:$0xff]
  %v1846 = vld [vmem:[%s734 + $0x38] sm:$0xff]
  %v1847 = vld [vmem:[%s734 + $0x40] sm:$0xff]
  %v1848 = vld [vmem:[%s734 + $0x48] sm:$0xff]
  %v1849 = vld [vmem:[%s734 + $0x50] sm:$0xff]
  %v1850 = vld [vmem:[%s734 + $0x58] sm:$0xff]
  %v1851 = vld [vmem:[%s734 + $0x60] sm:$0xff]
  %v1852 = vld [vmem:[%s734 + $0x68] sm:$0xff]
  %v1853 = vld [vmem:[%s734 + $0x70] sm:$0xff]
  %v1854 = vld [vmem:[%s734 + $0x78] sm:$0xff]
  %v1855 = vld [vmem:[%s734 + $0x80] sm:$0xff]
  %v1856 = vld [vmem:[%s734 + $0x88] sm:$0xff]
  %v1857 = vld [vmem:[%s734 + $0x90] sm:$0xff]
  %v1858 = vld [vmem:[%s734 + $0x98] sm:$0xff]
  %v1859 = vld [vmem:[%s734 + $0xa0] sm:$0xff]
  %v1860 = vld [vmem:[%s734 + $0xa8] sm:$0xff]
  %v1861 = vld [vmem:[%s734 + $0xb0] sm:$0xff]
  %v1862 = vld [vmem:[%s734 + $0xb8] sm:$0xff]
  %v1864 = vsel %vm142, %v1838, 0
  %1866 = vmatprep.subr.mxu0 0.0
  %1867 = vmatpush1.msra.mxu0 0.0
  %1868 = vmatprep.subr.mxu0 0.0
  %1869 = vmatpush1.msra.mxu0 0.0
  %1870 = vmatprep.subr.mxu0 0.0
  %1871 = vmatpush1.msra.mxu0 0.0
  %1872 = vmatprep.subr.mxu0 0.0
  %1873 = vmatpush1.msra.mxu0 0.0
  %1874 = vmatprep.subr.mxu0 %v1862
  %1875 = vmatpush1.msra.mxu0 %v1861
  %1876 = vmatprep.subr.mxu0 %v1860
  %1877 = vmatpush1.msra.mxu0 %v1859
  %1878 = vmatprep.subr.mxu0 %v1858
  %1879 = vmatpush1.msra.mxu0 %v1857
  %1880 = vmatprep.subr.mxu0 %v1856
  %1881 = vmatpush1.msra.mxu0 %v1855
  %1882 = vmatprep.subr.mxu0 %v1854
  %1883 = vmatpush1.msra.mxu0 %v1853
  %1884 = vmatprep.subr.mxu0 %v1852
  %1885 = vmatpush1.msra.mxu0 %v1851
  %1886 = vmatprep.subr.mxu0 %v1850
  %1887 = vmatpush1.msra.mxu0 %v1849
  %1888 = vmatprep.subr.mxu0 %v1848
  %1889 = vmatpush1.msra.mxu0 %v1847
  %1890 = vmatprep.subr.mxu0 %v1846
  %1891 = vmatpush1.msra.mxu0 %v1845
  %1892 = vmatprep.subr.mxu0 %v1844
  %1893 = vmatpush1.msra.mxu0 %v1843
  %1894 = vmatprep.subr.mxu0 %v1842
  %1895 = vmatpush1.msra.mxu0 %v1841
  %1896 = vmatprep.subr.mxu0 %v1840
  %1897 = vmatpush1.msra.mxu0 %v1839
  %1898 = vmatprep.subr.mxu0 0.0
  %1899 = vmatpush2.msra.mxu0 0.0
  %1900 = vmatprep.subr.mxu0 0.0
  %1901 = vmatpush2.msra.mxu0 0.0
  %1902 = vmatprep.subr.mxu0 0.0
  %1903 = vmatpush2.msra.mxu0 0.0
  %1904 = vmatprep.subr.mxu0 0.0
  %1905 = vmatpush2.msra.mxu0 0.0
  %1906 = vmatprep.subr.mxu0 0.0
  %1907 = vmatpush2.msra.mxu0 0.0
  %1908 = vmatprep.subr.mxu0 0.0
  %1909 = vmatpush2.msra.mxu0 0.0
  %1910 = vmatprep.subr.mxu0 0.0
  %1911 = vmatpush2.msra.mxu0 0.0
  %1912 = vmatprep.subr.mxu0 0.0
  %1913 = vmatpush2.msra.mxu0 0.0
  %1914 = vmatprep.subr.mxu0 0.0
  %1915 = vmatpush2.msra.mxu0 0.0
  %1916 = vmatprep.subr.mxu0 0.0
  %1917 = vmatpush2.msra.mxu0 0.0
  %1918 = vmatprep.subr.mxu0 0.0
  %1919 = vmatpush2.msra.mxu0 0.0
  %1920 = vmatprep.subr.mxu0 0.0
  %1921 = vmatpush2.msra.mxu0 0.0
  %1922 = vmatprep.subr.mxu0 0.0
  %1923 = vmatpush2.msra.mxu0 0.0
  %1924 = vmatprep.subr.mxu0 0.0
  %1925 = vmatpush2.msra.mxu0 0.0
  %1926 = vmatprep.subr.mxu0 0.0
  %1927 = vmatpush2.msra.mxu0 0.0
  %1928 = vmatprep.subr.mxu0 0.0
  %1929 = vmatpush2.msra.mxu0 0.0
  %1930 = vmatprep.mubr.f32.mxu0 0.0
  %1931 = vmatmul.mubr.f32.gmra.mxu0 %v1255
  %v1932 = vpop.f32.mrf.mxu0
  %v1933 = vadd.f32 0.0, %v1932
  %v1934 = vpop.f32.mrf.mxu0
  %v1935 = vadd.f32 0.0, %v1934
  %1936 = vmatprep.mubr.f32.mxu0 0.0
  %1937 = vmatmul.mubr.f32.gmra.mxu0 %v1258
  %v1938 = vpop.f32.mrf.mxu0
  %v1939 = vadd.f32 0.0, %v1938
  %v1940 = vpop.f32.mrf.mxu0
  %v1941 = vadd.f32 0.0, %v1940
  %1942 = vmatprep.mubr.f32.mxu0 0.0
  %1943 = vmatmul.mubr.f32.gmra.mxu0 %v1261
  %v1944 = vpop.f32.mrf.mxu0
  %v1945 = vadd.f32 0.0, %v1944
  %v1946 = vpop.f32.mrf.mxu0
  %v1947 = vadd.f32 0.0, %v1946
  %1948 = vmatprep.mubr.f32.mxu0 0.0
  %1949 = vmatmul.mubr.f32.gmra.mxu0 %v1264
  %v1950 = vpop.f32.mrf.mxu0
  %v1951 = vadd.f32 0.0, %v1950
  %v1952 = vpop.f32.mrf.mxu0
  %v1953 = vadd.f32 0.0, %v1952
  %1954 = vmatprep.mubr.f32.mxu0 0.0
  %1955 = vmatmul.mubr.f32.gmra.mxu0 %v1267
  %v1956 = vpop.f32.mrf.mxu0
  %v1957 = vadd.f32 0.0, %v1956
  %v1958 = vpop.f32.mrf.mxu0
  %v1959 = vadd.f32 0.0, %v1958
  %1960 = vmatprep.mubr.f32.mxu0 0.0
  %1961 = vmatmul.mubr.f32.gmra.mxu0 %v1270
  %v1962 = vpop.f32.mrf.mxu0
  %v1963 = vadd.f32 0.0, %v1962
  %v1964 = vpop.f32.mrf.mxu0
  %v1965 = vadd.f32 0.0, %v1964
  %1966 = vmatprep.mubr.f32.mxu0 0.0
  %1967 = vmatmul.mubr.f32.gmra.mxu0 %v1273
  %v1968 = vpop.f32.mrf.mxu0
  %v1969 = vadd.f32 0.0, %v1968
  %v1970 = vpop.f32.mrf.mxu0
  %v1971 = vadd.f32 0.0, %v1970
  %1972 = vmatprep.mubr.f32.mxu0 0.0
  %1973 = vmatmul.mubr.f32.gmra.mxu0 %v1276
  %v1974 = vpop.f32.mrf.mxu0
  %v1975 = vadd.f32 0.0, %v1974
  %v1976 = vpop.f32.mrf.mxu0
  %v1977 = vadd.f32 0.0, %v1976
  %1978 = vmatprep.mubr.f32.mxu0 0.0
  %1979 = vmatmul.mubr.f32.gmra.mxu0 %v1279
  %v1980 = vpop.f32.mrf.mxu0
  %v1981 = vadd.f32 0.0, %v1980
  %v1982 = vpop.f32.mrf.mxu0
  %v1983 = vadd.f32 0.0, %v1982
  %1984 = vmatprep.mubr.f32.mxu0 0.0
  %1985 = vmatmul.mubr.f32.gmra.mxu0 %v1282
  %v1986 = vpop.f32.mrf.mxu0
  %v1987 = vadd.f32 0.0, %v1986
  %v1988 = vpop.f32.mrf.mxu0
  %v1989 = vadd.f32 0.0, %v1988
  %1990 = vmatprep.mubr.f32.mxu0 0.0
  %1991 = vmatmul.mubr.f32.gmra.mxu0 %v1285
  %v1992 = vpop.f32.mrf.mxu0
  %v1993 = vadd.f32 0.0, %v1992
  %v1994 = vpop.f32.mrf.mxu0
  %v1995 = vadd.f32 0.0, %v1994
  %1996 = vmatprep.mubr.f32.mxu0 0.0
  %1997 = vmatmul.mubr.f32.gmra.mxu0 %v1288
  %v1998 = vpop.f32.mrf.mxu0
  %v1999 = vadd.f32 0.0, %v1998
  %v2000 = vpop.f32.mrf.mxu0
  %v2001 = vadd.f32 0.0, %v2000
  %2002 = vmatprep.mubr.f32.mxu0 0.0
  %2003 = vmatmul.mubr.f32.gmra.mxu0 %v1291
  %v2004 = vpop.f32.mrf.mxu0
  %v2005 = vadd.f32 0.0, %v2004
  %v2006 = vpop.f32.mrf.mxu0
  %v2007 = vadd.f32 0.0, %v2006
  %2008 = vmatprep.mubr.f32.mxu0 0.0
  %2009 = vmatmul.mubr.f32.gmra.mxu0 %v1864
  %v2010 = vpop.f32.mrf.mxu0
  %v2011 = vadd.f32 0.0, %v2010
  %v2012 = vpop.f32.mrf.mxu0
  %v2013 = vadd.f32 0.0, %v2012
  %2014 = vdwg.mxu0
  %v2015 = vadd.f32 %v1810, %v1933
  %v2016 = vadd.f32 %v1811, %v1935
  %v2017 = vadd.f32 %v1812, %v1939
  %v2018 = vadd.f32 %v1813, %v1941
  %v2019 = vadd.f32 %v1814, %v1945
  %v2020 = vadd.f32 %v1815, %v1947
  %v2021 = vadd.f32 %v1816, %v1951
  %v2022 = vadd.f32 %v1817, %v1953
  %v2023 = vadd.f32 %v1818, %v1957
  %v2024 = vadd.f32 %v1819, %v1959
  %v2025 = vadd.f32 %v1820, %v1963
  %v2026 = vadd.f32 %v1821, %v1965
  %v2027 = vadd.f32 %v1822, %v1969
  %v2028 = vadd.f32 %v1823, %v1971
  %v2029 = vadd.f32 %v1824, %v1975
  %v2030 = vadd.f32 %v1825, %v1977
  %v2031 = vadd.f32 %v1826, %v1981
  %v2032 = vadd.f32 %v1827, %v1983
  %v2033 = vadd.f32 %v1828, %v1987
  %v2034 = vadd.f32 %v1829, %v1989
  %v2035 = vadd.f32 %v1830, %v1993
  %v2036 = vadd.f32 %v1831, %v1995
  %v2037 = vadd.f32 %v1832, %v1999
  %v2038 = vadd.f32 %v1833, %v2001
  %v2039 = vadd.f32 %v1834, %v2005
  %v2040 = vadd.f32 %v1835, %v2007
  %v2041 = vadd.f32 %v1836, %v2011
  %v2042 = vadd.f32 %v1837, %v2013
  %s2043 = scalar_lea.vmem %s0, 248
  %v2044 = vld [vmem:[%s2043] sm:$0xff]
  %v2045 = vld [vmem:[%s941] sm:$0xff]
  %v2046 = vld [vmem:[%s941 + $0x8] sm:$0xff]
  %v2047 = vld [vmem:[%s941 + $0x10] sm:$0xff]
  %v2048 = vld [vmem:[%s941 + $0x18] sm:$0xff]
  %v2049 = vld [vmem:[%s941 + $0x20] sm:$0xff]
  %v2050 = vld [vmem:[%s941 + $0x28] sm:$0xff]
  %v2051 = vld [vmem:[%s941 + $0x30] sm:$0xff]
  %v2052 = vld [vmem:[%s941 + $0x38] sm:$0xff]
  %v2053 = vld [vmem:[%s941 + $0x40] sm:$0xff]
  %v2054 = vld [vmem:[%s941 + $0x48] sm:$0xff]
  %v2055 = vld [vmem:[%s941 + $0x50] sm:$0xff]
  %v2056 = vld [vmem:[%s941 + $0x58] sm:$0xff]
  %v2057 = vld [vmem:[%s941 + $0x60] sm:$0xff]
  %v2058 = vld [vmem:[%s941 + $0x68] sm:$0xff]
  %v2059 = vld [vmem:[%s941 + $0x70] sm:$0xff]
  %v2060 = vld [vmem:[%s941 + $0x78] sm:$0xff]
  %v2061 = vld [vmem:[%s941 + $0x80] sm:$0xff]
  %v2062 = vld [vmem:[%s941 + $0x88] sm:$0xff]
  %v2063 = vld [vmem:[%s941 + $0x90] sm:$0xff]
  %v2064 = vld [vmem:[%s941 + $0x98] sm:$0xff]
  %v2065 = vld [vmem:[%s941 + $0xa0] sm:$0xff]
  %v2066 = vld [vmem:[%s941 + $0xa8] sm:$0xff]
  %v2067 = vld [vmem:[%s941 + $0xb0] sm:$0xff]
  %v2068 = vld [vmem:[%s941 + $0xb8] sm:$0xff]
  %v2070 = vsel %vm142, %v2044, 0
  %2072 = vmatprep.subr.mxu0 0.0
  %2073 = vmatpush1.msra.mxu0 0.0
  %2074 = vmatprep.subr.mxu0 0.0
  %2075 = vmatpush1.msra.mxu0 0.0
  %2076 = vmatprep.subr.mxu0 0.0
  %2077 = vmatpush1.msra.mxu0 0.0
  %2078 = vmatprep.subr.mxu0 0.0
  %2079 = vmatpush1.msra.mxu0 0.0
  %2080 = vmatprep.subr.mxu0 %v2068
  %2081 = vmatpush1.msra.mxu0 %v2067
  %2082 = vmatprep.subr.mxu0 %v2066
  %2083 = vmatpush1.msra.mxu0 %v2065
  %2084 = vmatprep.subr.mxu0 %v2064
  %2085 = vmatpush1.msra.mxu0 %v2063
  %2086 = vmatprep.subr.mxu0 %v2062
  %2087 = vmatpush1.msra.mxu0 %v2061
  %2088 = vmatprep.subr.mxu0 %v2060
  %2089 = vmatpush1.msra.mxu0 %v2059
  %2090 = vmatprep.subr.mxu0 %v2058
  %2091 = vmatpush1.msra.mxu0 %v2057
  %2092 = vmatprep.subr.mxu0 %v2056
  %2093 = vmatpush1.msra.mxu0 %v2055
  %2094 = vmatprep.subr.mxu0 %v2054
  %2095 = vmatpush1.msra.mxu0 %v2053
  %2096 = vmatprep.subr.mxu0 %v2052
  %2097 = vmatpush1.msra.mxu0 %v2051
  %2098 = vmatprep.subr.mxu0 %v2050
  %2099 = vmatpush1.msra.mxu0 %v2049
  %2100 = vmatprep.subr.mxu0 %v2048
  %2101 = vmatpush1.msra.mxu0 %v2047
  %2102 = vmatprep.subr.mxu0 %v2046
  %2103 = vmatpush1.msra.mxu0 %v2045
  %2104 = vmatprep.subr.mxu0 0.0
  %2105 = vmatpush2.msra.mxu0 0.0
  %2106 = vmatprep.subr.mxu0 0.0
  %2107 = vmatpush2.msra.mxu0 0.0
  %2108 = vmatprep.subr.mxu0 0.0
  %2109 = vmatpush2.msra.mxu0 0.0
  %2110 = vmatprep.subr.mxu0 0.0
  %2111 = vmatpush2.msra.mxu0 0.0
  %2112 = vmatprep.subr.mxu0 0.0
  %2113 = vmatpush2.msra.mxu0 0.0
  %2114 = vmatprep.subr.mxu0 0.0
  %2115 = vmatpush2.msra.mxu0 0.0
  %2116 = vmatprep.subr.mxu0 0.0
  %2117 = vmatpush2.msra.mxu0 0.0
  %2118 = vmatprep.subr.mxu0 0.0
  %2119 = vmatpush2.msra.mxu0 0.0
  %2120 = vmatprep.subr.mxu0 0.0
  %2121 = vmatpush2.msra.mxu0 0.0
  %2122 = vmatprep.subr.mxu0 0.0
  %2123 = vmatpush2.msra.mxu0 0.0
  %2124 = vmatprep.subr.mxu0 0.0
  %2125 = vmatpush2.msra.mxu0 0.0
  %2126 = vmatprep.subr.mxu0 0.0
  %2127 = vmatpush2.msra.mxu0 0.0
  %2128 = vmatprep.subr.mxu0 0.0
  %2129 = vmatpush2.msra.mxu0 0.0
  %2130 = vmatprep.subr.mxu0 0.0
  %2131 = vmatpush2.msra.mxu0 0.0
  %2132 = vmatprep.subr.mxu0 0.0
  %2133 = vmatpush2.msra.mxu0 0.0
  %2134 = vmatprep.subr.mxu0 0.0
  %2135 = vmatpush2.msra.mxu0 0.0
  %2136 = vmatprep.mubr.f32.mxu0 0.0
  %2137 = vmatmul.mubr.f32.gmra.mxu0 %v1449
  %v2138 = vpop.f32.mrf.mxu0
  %v2139 = vadd.f32 0.0, %v2138
  %v2140 = vpop.f32.mrf.mxu0
  %v2141 = vadd.f32 0.0, %v2140
  %2142 = vmatprep.mubr.f32.mxu0 0.0
  %2143 = vmatmul.mubr.f32.gmra.mxu0 %v1452
  %v2144 = vpop.f32.mrf.mxu0
  %v2145 = vadd.f32 0.0, %v2144
  %v2146 = vpop.f32.mrf.mxu0
  %v2147 = vadd.f32 0.0, %v2146
  %2148 = vmatprep.mubr.f32.mxu0 0.0
  %2149 = vmatmul.mubr.f32.gmra.mxu0 %v1455
  %v2150 = vpop.f32.mrf.mxu0
  %v2151 = vadd.f32 0.0, %v2150
  %v2152 = vpop.f32.mrf.mxu0
  %v2153 = vadd.f32 0.0, %v2152
  %2154 = vmatprep.mubr.f32.mxu0 0.0
  %2155 = vmatmul.mubr.f32.gmra.mxu0 %v1458
  %v2156 = vpop.f32.mrf.mxu0
  %v2157 = vadd.f32 0.0, %v2156
  %v2158 = vpop.f32.mrf.mxu0
  %v2159 = vadd.f32 0.0, %v2158
  %2160 = vmatprep.mubr.f32.mxu0 0.0
  %2161 = vmatmul.mubr.f32.gmra.mxu0 %v1461
  %v2162 = vpop.f32.mrf.mxu0
  %v2163 = vadd.f32 0.0, %v2162
  %v2164 = vpop.f32.mrf.mxu0
  %v2165 = vadd.f32 0.0, %v2164
  %2166 = vmatprep.mubr.f32.mxu0 0.0
  %2167 = vmatmul.mubr.f32.gmra.mxu0 %v1464
  %v2168 = vpop.f32.mrf.mxu0
  %v2169 = vadd.f32 0.0, %v2168
  %v2170 = vpop.f32.mrf.mxu0
  %v2171 = vadd.f32 0.0, %v2170
  %2172 = vmatprep.mubr.f32.mxu0 0.0
  %2173 = vmatmul.mubr.f32.gmra.mxu0 %v1467
  %v2174 = vpop.f32.mrf.mxu0
  %v2175 = vadd.f32 0.0, %v2174
  %v2176 = vpop.f32.mrf.mxu0
  %v2177 = vadd.f32 0.0, %v2176
  %2178 = vmatprep.mubr.f32.mxu0 0.0
  %2179 = vmatmul.mubr.f32.gmra.mxu0 %v1470
  %v2180 = vpop.f32.mrf.mxu0
  %v2181 = vadd.f32 0.0, %v2180
  %v2182 = vpop.f32.mrf.mxu0
  %v2183 = vadd.f32 0.0, %v2182
  %2184 = vmatprep.mubr.f32.mxu0 0.0
  %2185 = vmatmul.mubr.f32.gmra.mxu0 %v1473
  %v2186 = vpop.f32.mrf.mxu0
  %v2187 = vadd.f32 0.0, %v2186
  %v2188 = vpop.f32.mrf.mxu0
  %v2189 = vadd.f32 0.0, %v2188
  %2190 = vmatprep.mubr.f32.mxu0 0.0
  %2191 = vmatmul.mubr.f32.gmra.mxu0 %v1476
  %v2192 = vpop.f32.mrf.mxu0
  %v2193 = vadd.f32 0.0, %v2192
  %v2194 = vpop.f32.mrf.mxu0
  %v2195 = vadd.f32 0.0, %v2194
  %2196 = vmatprep.mubr.f32.mxu0 0.0
  %2197 = vmatmul.mubr.f32.gmra.mxu0 %v1479
  %v2198 = vpop.f32.mrf.mxu0
  %v2199 = vadd.f32 0.0, %v2198
  %v2200 = vpop.f32.mrf.mxu0
  %v2201 = vadd.f32 0.0, %v2200
  %2202 = vmatprep.mubr.f32.mxu0 0.0
  %2203 = vmatmul.mubr.f32.gmra.mxu0 %v1482
  %v2204 = vpop.f32.mrf.mxu0
  %v2205 = vadd.f32 0.0, %v2204
  %v2206 = vpop.f32.mrf.mxu0
  %v2207 = vadd.f32 0.0, %v2206
  %2208 = vmatprep.mubr.f32.mxu0 0.0
  %2209 = vmatmul.mubr.f32.gmra.mxu0 %v1659
  %v2210 = vpop.f32.mrf.mxu0
  %v2211 = vadd.f32 0.0, %v2210
  %v2212 = vpop.f32.mrf.mxu0
  %v2213 = vadd.f32 0.0, %v2212
  %2214 = vmatprep.mubr.f32.mxu0 0.0
  %2215 = vmatmul.mubr.f32.gmra.mxu0 %v2070
  %v2216 = vpop.f32.mrf.mxu0
  %v2217 = vadd.f32 0.0, %v2216
  %v2218 = vpop.f32.mrf.mxu0
  %v2219 = vadd.f32 0.0, %v2218
  %2220 = vdwg.mxu0
  %v2221 = vadd.f32 %v2015, %v2139
  %v2222 = vadd.f32 %v2016, %v2141
  %v2223 = vadd.f32 %v2017, %v2145
  %v2224 = vadd.f32 %v2018, %v2147
  %v2225 = vadd.f32 %v2019, %v2151
  %v2226 = vadd.f32 %v2020, %v2153
  %v2227 = vadd.f32 %v2021, %v2157
  %v2228 = vadd.f32 %v2022, %v2159
  %v2229 = vadd.f32 %v2023, %v2163
  %v2230 = vadd.f32 %v2024, %v2165
  %v2231 = vadd.f32 %v2025, %v2169
  %v2232 = vadd.f32 %v2026, %v2171
  %v2233 = vadd.f32 %v2027, %v2175
  %v2234 = vadd.f32 %v2028, %v2177
  %v2235 = vadd.f32 %v2029, %v2181
  %v2236 = vadd.f32 %v2030, %v2183
  %v2237 = vadd.f32 %v2031, %v2187
  %v2238 = vadd.f32 %v2032, %v2189
  %v2239 = vadd.f32 %v2033, %v2193
  %v2240 = vadd.f32 %v2034, %v2195
  %v2241 = vadd.f32 %v2035, %v2199
  %v2242 = vadd.f32 %v2036, %v2201
  %v2243 = vadd.f32 %v2037, %v2205
  %v2244 = vadd.f32 %v2038, %v2207
  %v2245 = vadd.f32 %v2039, %v2211
  %v2246 = vadd.f32 %v2040, %v2213
  %v2247 = vadd.f32 %v2041, %v2217
  %v2248 = vadd.f32 %v2042, %v2219
  %v2249 = vmax.f32 %v2221, %v2222
  %v2250 = vmax.f32 %v2223, %v2224
  %v2251 = vmax.f32 %v2225, %v2226
  %v2252 = vmax.f32 %v2227, %v2228
  %v2253 = vmax.f32 %v2229, %v2230
  %v2254 = vmax.f32 %v2231, %v2232
  %v2255 = vmax.f32 %v2233, %v2234
  %v2256 = vmax.f32 %v2235, %v2236
  %v2257 = vmax.f32 %v2237, %v2238
  %v2258 = vmax.f32 %v2239, %v2240
  %v2259 = vmax.f32 %v2241, %v2242
  %v2260 = vmax.f32 %v2243, %v2244
  %v2261 = vmax.f32 %v2245, %v2246
  %v2262 = vmax.f32 %v2247, %v2248
  %v2263 = vld [vmem:[#allocation2] sm:$0xff]
  %v2264 = vld [vmem:[#allocation2 + $0x8] sm:$0xff]
  %v2265 = vld [vmem:[#allocation2 + $0x10] sm:$0xff]
  %v2266 = vld [vmem:[#allocation2 + $0x18] sm:$0xff]
  %v2267 = vld [vmem:[#allocation2 + $0x20] sm:$0xff]
  %v2268 = vld [vmem:[#allocation2 + $0x28] sm:$0xff]
  %v2269 = vld [vmem:[#allocation2 + $0x30] sm:$0xff]
  %v2270 = vld [vmem:[#allocation2 + $0x38] sm:$0xff]
  %v2271 = vld [vmem:[#allocation2 + $0x40] sm:$0xff]
  %v2272 = vld [vmem:[#allocation2 + $0x48] sm:$0xff]
  %v2273 = vld [vmem:[#allocation2 + $0x50] sm:$0xff]
  %v2274 = vld [vmem:[#allocation2 + $0x58] sm:$0xff]
  %v2275 = vld [vmem:[#allocation2 + $0x60] sm:$0xff]
  %v2276 = vld [vmem:[#allocation2 + $0x68] sm:$0xff]
  %v2277 = vmax.f32 %v2263, %v2249
  %v2278 = vmax.f32 %v2264, %v2250
  %v2279 = vmax.f32 %v2265, %v2251
  %v2280 = vmax.f32 %v2266, %v2252
  %v2281 = vmax.f32 %v2267, %v2253
  %v2282 = vmax.f32 %v2268, %v2254
  %v2283 = vmax.f32 %v2269, %v2255
  %v2284 = vmax.f32 %v2270, %v2256
  %v2285 = vmax.f32 %v2271, %v2257
  %v2286 = vmax.f32 %v2272, %v2258
  %v2287 = vmax.f32 %v2273, %v2259
  %v2288 = vmax.f32 %v2274, %v2260
  %v2289 = vmax.f32 %v2275, %v2261
  %v2290 = vmax.f32 %v2276, %v2262
  %v2291 = vld [vmem:[%s2] sm:$0x1]
  %v2293 = vlaneseq
  %v2294 = vshrl.u32 %v2293, 7
  %v2295 = vsub.s32 0, %v2294
  %v2296 = vrot.slane %v2291, %v2295
  %v2298 = vadd.f32 %v2277, %v2296
  %v2299 = vadd.f32 %v2278, %v2296
  %v2300 = vadd.f32 %v2279, %v2296
  %v2301 = vadd.f32 %v2280, %v2296
  %v2302 = vadd.f32 %v2281, %v2296
  %v2303 = vadd.f32 %v2282, %v2296
  %v2304 = vadd.f32 %v2283, %v2296
  %v2305 = vadd.f32 %v2284, %v2296
  %v2306 = vadd.f32 %v2285, %v2296
  %v2307 = vadd.f32 %v2286, %v2296
  %v2308 = vadd.f32 %v2287, %v2296
  %v2309 = vadd.f32 %v2288, %v2296
  %v2310 = vadd.f32 %v2289, %v2296
  %v2311 = vadd.f32 %v2290, %v2296
  %v2312 = vmax.f32 %v2298, 0.0
  %v2313 = vmax.f32 %v2299, 0.0
  %v2314 = vmax.f32 %v2300, 0.0
  %v2315 = vmax.f32 %v2301, 0.0
  %v2316 = vmax.f32 %v2302, 0.0
  %v2317 = vmax.f32 %v2303, 0.0
  %v2318 = vmax.f32 %v2304, 0.0
  %v2319 = vmax.f32 %v2305, 0.0
  %v2320 = vmax.f32 %v2306, 0.0
  %v2321 = vmax.f32 %v2307, 0.0
  %v2322 = vmax.f32 %v2308, 0.0
  %v2323 = vmax.f32 %v2309, 0.0
  %v2324 = vmax.f32 %v2310, 0.0
  %v2325 = vmax.f32 %v2311, 0.0
  %2326 = vst.msk [vmem:[#allocation2] sm:$0xff] %vm1160, %v2312
  %2327 = vst.msk [vmem:[#allocation2 + $0x8] sm:$0xff] %vm1160, %v2313
  %2328 = vst.msk [vmem:[#allocation2 + $0x10] sm:$0xff] %vm1160, %v2314
  %2329 = vst.msk [vmem:[#allocation2 + $0x18] sm:$0xff] %vm1160, %v2315
  %2330 = vst.msk [vmem:[#allocation2 + $0x20] sm:$0xff] %vm1160, %v2316
  %2331 = vst.msk [vmem:[#allocation2 + $0x28] sm:$0xff] %vm1160, %v2317
  %2332 = vst.msk [vmem:[#allocation2 + $0x30] sm:$0xff] %vm1160, %v2318
  %2333 = vst.msk [vmem:[#allocation2 + $0x38] sm:$0xff] %vm1160, %v2319
  %2334 = vst.msk [vmem:[#allocation2 + $0x40] sm:$0xff] %vm1160, %v2320
  %2335 = vst.msk [vmem:[#allocation2 + $0x48] sm:$0xff] %vm1160, %v2321
  %2336 = vst.msk [vmem:[#allocation2 + $0x50] sm:$0xff] %vm1160, %v2322
  %2337 = vst.msk [vmem:[#allocation2 + $0x58] sm:$0xff] %vm1160, %v2323
  %2338 = vst.msk [vmem:[#allocation2 + $0x60] sm:$0xff] %vm1160, %v2324
  %2339 = vst.msk [vmem:[#allocation2 + $0x68] sm:$0xff] %vm1160, %v2325
  %v2340 = vld [vmem:[#allocation2] sm:$0xff]
  %v2341 = vld [vmem:[#allocation2 + $0x10] sm:$0xff]
  %v2342 = vld [vmem:[#allocation2 + $0x20] sm:$0xff]
  %v2343 = vld [vmem:[#allocation2 + $0x30] sm:$0xff]
  %v2344 = vld [vmem:[#allocation2 + $0x40] sm:$0xff]
  %v2345 = vld [vmem:[%s3] sm:$0xff]
  %v2346 = vld [vmem:[%s3 + $0x8] sm:$0xff]
  %v2347 = vld [vmem:[%s3 + $0x10] sm:$0xff]
  %v2348 = vld [vmem:[%s3 + $0x18] sm:$0xff]
  %v2349 = vld [vmem:[%s3 + $0x20] sm:$0xff]
  %v2350 = vld [vmem:[%s3 + $0x28] sm:$0xff]
  %v2351 = vld [vmem:[%s3 + $0x30] sm:$0xff]
  %v2352 = vld [vmem:[%s3 + $0x38] sm:$0xff]
  %v2353 = vld [vmem:[%s3 + $0x40] sm:$0xff]
  %v2354 = vld [vmem:[%s3 + $0x48] sm:$0xff]
  %v2355 = vld [vmem:[%s3 + $0x50] sm:$0xff]
  %v2356 = vld [vmem:[%s3 + $0x58] sm:$0xff]
  %v2357 = vld [vmem:[%s3 + $0x60] sm:$0xff]
  %v2358 = vld [vmem:[%s3 + $0x68] sm:$0xff]
  %v2359 = vld [vmem:[%s3 + $0x70] sm:$0xff]
  %v2360 = vld [vmem:[%s3 + $0x78] sm:$0xff]
  %v2361 = vld [vmem:[%s3 + $0x80] sm:$0xff]
  %v2362 = vld [vmem:[%s3 + $0x88] sm:$0xff]
  %v2363 = vld [vmem:[%s3 + $0x90] sm:$0xff]
  %v2364 = vld [vmem:[%s3 + $0x98] sm:$0xff]
  %v2365 = vld [vmem:[%s3 + $0xa0] sm:$0xf]
  %v2366 = vld [vmem:[%s3 + $0xa8] sm:$0xf]
  %v2367 = vld [vmem:[#allocation2 + $0x8] sm:$0xff]
  %v2368 = vld [vmem:[#allocation2 + $0x18] sm:$0xff]
  %v2369 = vld [vmem:[#allocation2 + $0x28] sm:$0xff]
  %v2370 = vld [vmem:[#allocation2 + $0x38] sm:$0xff]
  %v2371 = vld [vmem:[#allocation2 + $0x48] sm:$0xff]
  %s2372 = scalar_lea.vmem %s3, 176
  %v2373 = vld [vmem:[%s2372] sm:$0xff]
  %v2374 = vld [vmem:[%s2372 + $0x8] sm:$0xff]
  %v2375 = vld [vmem:[%s2372 + $0x10] sm:$0xff]
  %v2376 = vld [vmem:[%s2372 + $0x18] sm:$0xff]
  %v2377 = vld [vmem:[%s2372 + $0x20] sm:$0xff]
  %v2378 = vld [vmem:[%s2372 + $0x28] sm:$0xff]
  %v2379 = vld [vmem:[%s2372 + $0x30] sm:$0xff]
  %v2380 = vld [vmem:[%s2372 + $0x38] sm:$0xff]
  %v2381 = vld [vmem:[%s2372 + $0x40] sm:$0xff]
  %v2382 = vld [vmem:[%s2372 + $0x48] sm:$0xff]
  %v2383 = vld [vmem:[%s2372 + $0x50] sm:$0xff]
  %v2384 = vld [vmem:[%s2372 + $0x58] sm:$0xff]
  %v2385 = vld [vmem:[%s2372 + $0x60] sm:$0xff]
  %v2386 = vld [vmem:[%s2372 + $0x68] sm:$0xff]
  %v2387 = vld [vmem:[%s2372 + $0x70] sm:$0xff]
  %v2388 = vld [vmem:[%s2372 + $0x78] sm:$0xff]
  %v2389 = vld [vmem:[%s2372 + $0x80] sm:$0xff]
  %v2390 = vld [vmem:[%s2372 + $0x88] sm:$0xff]
  %v2391 = vld [vmem:[%s2372 + $0x90] sm:$0xff]
  %v2392 = vld [vmem:[%s2372 + $0x98] sm:$0xff]
  %v2393 = vld [vmem:[%s2372 + $0xa0] sm:$0xf]
  %v2394 = vld [vmem:[%s2372 + $0xa8] sm:$0xf]
  %v2396 = vsel %vm1160, %v2367, 0
  %v2399 = vsel %vm1160, %v2368, 0
  %v2402 = vsel %vm1160, %v2369, 0
  %v2405 = vsel %vm1160, %v2370, 0
  %v2408 = vsel %vm1160, %v2371, 0
  %vm2410 = vcmask 1043456
  %v2412 = vsel %vm2410, %v2393, 0
  %v2415 = vsel %vm2410, %v2394, 0
  %2417 = vmatprep.subr.mxu0 0.0
  %2418 = vmatpush1.msra.mxu0 0.0
  %2419 = vmatprep.subr.mxu0 0.0
  %2420 = vmatpush1.msra.mxu0 0.0
  %2421 = vmatprep.subr.mxu0 0.0
  %2422 = vmatpush1.msra.mxu0 0.0
  %2423 = vmatprep.subr.mxu0 0.0
  %2424 = vmatpush1.msra.mxu0 0.0
  %2425 = vmatprep.subr.mxu0 0.0
  %2426 = vmatpush1.msra.mxu0 0.0
  %2427 = vmatprep.subr.mxu0 %v2415
  %2428 = vmatpush1.msra.mxu0 %v2412
  %2429 = vmatprep.subr.mxu0 %v2392
  %2430 = vmatpush1.msra.mxu0 %v2391
  %2431 = vmatprep.subr.mxu0 %v2390
  %2432 = vmatpush1.msra.mxu0 %v2389
  %2433 = vmatprep.subr.mxu0 %v2388
  %2434 = vmatpush1.msra.mxu0 %v2387
  %2435 = vmatprep.subr.mxu0 %v2386
  %2436 = vmatpush1.msra.mxu0 %v2385
  %2437 = vmatprep.subr.mxu0 %v2384
  %2438 = vmatpush1.msra.mxu0 %v2383
  %2439 = vmatprep.subr.mxu0 %v2382
  %2440 = vmatpush1.msra.mxu0 %v2381
  %2441 = vmatprep.subr.mxu0 %v2380
  %2442 = vmatpush1.msra.mxu0 %v2379
  %2443 = vmatprep.subr.mxu0 %v2378
  %2444 = vmatpush1.msra.mxu0 %v2377
  %2445 = vmatprep.subr.mxu0 %v2376
  %2446 = vmatpush1.msra.mxu0 %v2375
  %2447 = vmatprep.subr.mxu0 %v2374
  %2448 = vmatpush1.msra.mxu0 %v2373
  %2449 = vmatprep.subr.mxu0 0.0
  %2450 = vmatpush2.msra.mxu0 0.0
  %2451 = vmatprep.subr.mxu0 0.0
  %2452 = vmatpush2.msra.mxu0 0.0
  %2453 = vmatprep.subr.mxu0 0.0
  %2454 = vmatpush2.msra.mxu0 0.0
  %2455 = vmatprep.subr.mxu0 0.0
  %2456 = vmatpush2.msra.mxu0 0.0
  %2457 = vmatprep.subr.mxu0 0.0
  %2458 = vmatpush2.msra.mxu0 0.0
  %2459 = vmatprep.subr.mxu0 0.0
  %2460 = vmatpush2.msra.mxu0 0.0
  %2461 = vmatprep.subr.mxu0 0.0
  %2462 = vmatpush2.msra.mxu0 0.0
  %2463 = vmatprep.subr.mxu0 0.0
  %2464 = vmatpush2.msra.mxu0 0.0
  %2465 = vmatprep.subr.mxu0 0.0
  %2466 = vmatpush2.msra.mxu0 0.0
  %2467 = vmatprep.subr.mxu0 0.0
  %2468 = vmatpush2.msra.mxu0 0.0
  %2469 = vmatprep.subr.mxu0 0.0
  %2470 = vmatpush2.msra.mxu0 0.0
  %2471 = vmatprep.subr.mxu0 0.0
  %2472 = vmatpush2.msra.mxu0 0.0
  %2473 = vmatprep.subr.mxu0 0.0
  %2474 = vmatpush2.msra.mxu0 0.0
  %2475 = vmatprep.subr.mxu0 0.0
  %2476 = vmatpush2.msra.mxu0 0.0
  %2477 = vmatprep.subr.mxu0 0.0
  %2478 = vmatpush2.msra.mxu0 0.0
  %2479 = vmatprep.subr.mxu0 0.0
  %2480 = vmatpush2.msra.mxu0 0.0
  %2481 = vmatprep.mubr.f32.mxu0 0.0
  %2482 = vmatmul.mubr.f32.gmra.mxu0 %v2396
  %v2483 = vpop.f32.mrf.mxu0
  %v2484 = vadd.f32 0.0, %v2483
  %v2485 = vpop.f32.mrf.mxu0
  %v2486 = vadd.f32 0.0, %v2485
  %2487 = vmatprep.mubr.f32.mxu0 0.0
  %2488 = vmatmul.mubr.f32.gmra.mxu0 %v2399
  %v2489 = vpop.f32.mrf.mxu0
  %v2490 = vadd.f32 0.0, %v2489
  %v2491 = vpop.f32.mrf.mxu0
  %v2492 = vadd.f32 0.0, %v2491
  %2493 = vmatprep.mubr.f32.mxu0 0.0
  %2494 = vmatmul.mubr.f32.gmra.mxu0 %v2402
  %v2495 = vpop.f32.mrf.mxu0
  %v2496 = vadd.f32 0.0, %v2495
  %v2497 = vpop.f32.mrf.mxu0
  %v2498 = vadd.f32 0.0, %v2497
  %2499 = vmatprep.mubr.f32.mxu0 0.0
  %2500 = vmatmul.mubr.f32.gmra.mxu0 %v2405
  %v2501 = vpop.f32.mrf.mxu0
  %v2502 = vadd.f32 0.0, %v2501
  %v2503 = vpop.f32.mrf.mxu0
  %v2504 = vadd.f32 0.0, %v2503
  %2505 = vmatprep.mubr.f32.mxu0 0.0
  %2506 = vmatmul.mubr.f32.gmra.mxu0 %v2408
  %v2507 = vpop.f32.mrf.mxu0
  %v2508 = vadd.f32 0.0, %v2507
  %v2509 = vpop.f32.mrf.mxu0
  %v2510 = vadd.f32 0.0, %v2509
  %2511 = vdwg.mxu0
  %v2513 = vsel %vm1160, %v2340, 0
  %v2516 = vsel %vm1160, %v2341, 0
  %v2519 = vsel %vm1160, %v2342, 0
  %v2522 = vsel %vm1160, %v2343, 0
  %v2525 = vsel %vm1160, %v2344, 0
  %v2528 = vsel %vm2410, %v2365, 0
  %v2531 = vsel %vm2410, %v2366, 0
  %2533 = vmatprep.subr.mxu0 0.0
  %2534 = vmatpush1.msra.mxu0 0.0
  %2535 = vmatprep.subr.mxu0 0.0
  %2536 = vmatpush1.msra.mxu0 0.0
  %2537 = vmatprep.subr.mxu0 0.0
  %2538 = vmatpush1.msra.mxu0 0.0
  %2539 = vmatprep.subr.mxu0 0.0
  %2540 = vmatpush1.msra.mxu0 0.0
  %2541 = vmatprep.subr.mxu0 0.0
  %2542 = vmatpush1.msra.mxu0 0.0
  %2543 = vmatprep.subr.mxu0 %v2531
  %2544 = vmatpush1.msra.mxu0 %v2528
  %2545 = vmatprep.subr.mxu0 %v2364
  %2546 = vmatpush1.msra.mxu0 %v2363
  %2547 = vmatprep.subr.mxu0 %v2362
  %2548 = vmatpush1.msra.mxu0 %v2361
  %2549 = vmatprep.subr.mxu0 %v2360
  %2550 = vmatpush1.msra.mxu0 %v2359
  %2551 = vmatprep.subr.mxu0 %v2358
  %2552 = vmatpush1.msra.mxu0 %v2357
  %2553 = vmatprep.subr.mxu0 %v2356
  %2554 = vmatpush1.msra.mxu0 %v2355
  %2555 = vmatprep.subr.mxu0 %v2354
  %2556 = vmatpush1.msra.mxu0 %v2353
  %2557 = vmatprep.subr.mxu0 %v2352
  %2558 = vmatpush1.msra.mxu0 %v2351
  %2559 = vmatprep.subr.mxu0 %v2350
  %2560 = vmatpush1.msra.mxu0 %v2349
  %2561 = vmatprep.subr.mxu0 %v2348
  %2562 = vmatpush1.msra.mxu0 %v2347
  %2563 = vmatprep.subr.mxu0 %v2346
  %2564 = vmatpush1.msra.mxu0 %v2345
  %2565 = vmatprep.subr.mxu0 0.0
  %2566 = vmatpush2.msra.mxu0 0.0
  %2567 = vmatprep.subr.mxu0 0.0
  %2568 = vmatpush2.msra.mxu0 0.0
  %2569 = vmatprep.subr.mxu0 0.0
  %2570 = vmatpush2.msra.mxu0 0.0
  %2571 = vmatprep.subr.mxu0 0.0
  %2572 = vmatpush2.msra.mxu0 0.0
  %2573 = vmatprep.subr.mxu0 0.0
  %2574 = vmatpush2.msra.mxu0 0.0
  %2575 = vmatprep.subr.mxu0 0.0
  %2576 = vmatpush2.msra.mxu0 0.0
  %2577 = vmatprep.subr.mxu0 0.0
  %2578 = vmatpush2.msra.mxu0 0.0
  %2579 = vmatprep.subr.mxu0 0.0
  %2580 = vmatpush2.msra.mxu0 0.0
  %2581 = vmatprep.subr.mxu0 0.0
  %2582 = vmatpush2.msra.mxu0 0.0
  %2583 = vmatprep.subr.mxu0 0.0
  %2584 = vmatpush2.msra.mxu0 0.0
  %2585 = vmatprep.subr.mxu0 0.0
  %2586 = vmatpush2.msra.mxu0 0.0
  %2587 = vmatprep.subr.mxu0 0.0
  %2588 = vmatpush2.msra.mxu0 0.0
  %2589 = vmatprep.subr.mxu0 0.0
  %2590 = vmatpush2.msra.mxu0 0.0
  %2591 = vmatprep.subr.mxu0 0.0
  %2592 = vmatpush2.msra.mxu0 0.0
  %2593 = vmatprep.subr.mxu0 0.0
  %2594 = vmatpush2.msra.mxu0 0.0
  %2595 = vmatprep.subr.mxu0 0.0
  %2596 = vmatpush2.msra.mxu0 0.0
  %2597 = vmatprep.mubr.f32.mxu0 0.0
  %2598 = vmatmul.mubr.f32.gmra.mxu0 %v2513
  %v2599 = vpop.f32.mrf.mxu0
  %v2600 = vadd.f32 %v2484, %v2599
  %v2601 = vpop.f32.mrf.mxu0
  %v2602 = vadd.f32 %v2486, %v2601
  %2603 = vmatprep.mubr.f32.mxu0 0.0
  %2604 = vmatmul.mubr.f32.gmra.mxu0 %v2516
  %v2605 = vpop.f32.mrf.mxu0
  %v2606 = vadd.f32 %v2490, %v2605
  %v2607 = vpop.f32.mrf.mxu0
  %v2608 = vadd.f32 %v2492, %v2607
  %2609 = vmatprep.mubr.f32.mxu0 0.0
  %2610 = vmatmul.mubr.f32.gmra.mxu0 %v2519
  %v2611 = vpop.f32.mrf.mxu0
  %v2612 = vadd.f32 %v2496, %v2611
  %v2613 = vpop.f32.mrf.mxu0
  %v2614 = vadd.f32 %v2498, %v2613
  %2615 = vmatprep.mubr.f32.mxu0 0.0
  %2616 = vmatmul.mubr.f32.gmra.mxu0 %v2522
  %v2617 = vpop.f32.mrf.mxu0
  %v2618 = vadd.f32 %v2502, %v2617
  %v2619 = vpop.f32.mrf.mxu0
  %v2620 = vadd.f32 %v2504, %v2619
  %2621 = vmatprep.mubr.f32.mxu0 0.0
  %2622 = vmatmul.mubr.f32.gmra.mxu0 %v2525
  %v2623 = vpop.f32.mrf.mxu0
  %v2624 = vadd.f32 %v2508, %v2623
  %v2625 = vpop.f32.mrf.mxu0
  %v2626 = vadd.f32 %v2510, %v2625
  %2627 = vdwg.mxu0
  %v2628 = vld [vmem:[#allocation2 + $0x50] sm:$0xff]
  %s2629 = scalar_lea.vmem %s3, 352
  %v2630 = vld [vmem:[%s2629] sm:$0xff]
  %v2631 = vld [vmem:[%s2629 + $0x8] sm:$0xff]
  %v2632 = vld [vmem:[%s2629 + $0x10] sm:$0xff]
  %v2633 = vld [vmem:[%s2629 + $0x18] sm:$0xff]
  %v2634 = vld [vmem:[%s2629 + $0x20] sm:$0xff]
  %v2635 = vld [vmem:[%s2629 + $0x28] sm:$0xff]
  %v2636 = vld [vmem:[%s2629 + $0x30] sm:$0xff]
  %v2637 = vld [vmem:[%s2629 + $0x38] sm:$0xff]
  %v2638 = vld [vmem:[%s2629 + $0x40] sm:$0xff]
  %v2639 = vld [vmem:[%s2629 + $0x48] sm:$0xff]
  %v2640 = vld [vmem:[%s2629 + $0x50] sm:$0xff]
  %v2641 = vld [vmem:[%s2629 + $0x58] sm:$0xff]
  %v2642 = vld [vmem:[%s2629 + $0x60] sm:$0xff]
  %v2643 = vld [vmem:[%s2629 + $0x68] sm:$0xff]
  %v2644 = vld [vmem:[%s2629 + $0x70] sm:$0xff]
  %v2645 = vld [vmem:[%s2629 + $0x78] sm:$0xff]
  %v2646 = vld [vmem:[%s2629 + $0x80] sm:$0xff]
  %v2647 = vld [vmem:[%s2629 + $0x88] sm:$0xff]
  %v2648 = vld [vmem:[%s2629 + $0x90] sm:$0xff]
  %v2649 = vld [vmem:[%s2629 + $0x98] sm:$0xff]
  %v2650 = vld [vmem:[%s2629 + $0xa0] sm:$0xf]
  %v2651 = vld [vmem:[%s2629 + $0xa8] sm:$0xf]
  %v2653 = vsel %vm1160, %v2628, 0
  %v2656 = vsel %vm2410, %v2650, 0
  %v2659 = vsel %vm2410, %v2651, 0
  %2661 = vmatprep.subr.mxu0 0.0
  %2662 = vmatpush1.msra.mxu0 0.0
  %2663 = vmatprep.subr.mxu0 0.0
  %2664 = vmatpush1.msra.mxu0 0.0
  %2665 = vmatprep.subr.mxu0 0.0
  %2666 = vmatpush1.msra.mxu0 0.0
  %2667 = vmatprep.subr.mxu0 0.0
  %2668 = vmatpush1.msra.mxu0 0.0
  %2669 = vmatprep.subr.mxu0 0.0
  %2670 = vmatpush1.msra.mxu0 0.0
  %2671 = vmatprep.subr.mxu0 %v2659
  %2672 = vmatpush1.msra.mxu0 %v2656
  %2673 = vmatprep.subr.mxu0 %v2649
  %2674 = vmatpush1.msra.mxu0 %v2648
  %2675 = vmatprep.subr.mxu0 %v2647
  %2676 = vmatpush1.msra.mxu0 %v2646
  %2677 = vmatprep.subr.mxu0 %v2645
  %2678 = vmatpush1.msra.mxu0 %v2644
  %2679 = vmatprep.subr.mxu0 %v2643
  %2680 = vmatpush1.msra.mxu0 %v2642
  %2681 = vmatprep.subr.mxu0 %v2641
  %2682 = vmatpush1.msra.mxu0 %v2640
  %2683 = vmatprep.subr.mxu0 %v2639
  %2684 = vmatpush1.msra.mxu0 %v2638
  %2685 = vmatprep.subr.mxu0 %v2637
  %2686 = vmatpush1.msra.mxu0 %v2636
  %2687 = vmatprep.subr.mxu0 %v2635
  %2688 = vmatpush1.msra.mxu0 %v2634
  %2689 = vmatprep.subr.mxu0 %v2633
  %2690 = vmatpush1.msra.mxu0 %v2632
  %2691 = vmatprep.subr.mxu0 %v2631
  %2692 = vmatpush1.msra.mxu0 %v2630
  %2693 = vmatprep.subr.mxu0 0.0
  %2694 = vmatpush2.msra.mxu0 0.0
  %2695 = vmatprep.subr.mxu0 0.0
  %2696 = vmatpush2.msra.mxu0 0.0
  %2697 = vmatprep.subr.mxu0 0.0
  %2698 = vmatpush2.msra.mxu0 0.0
  %2699 = vmatprep.subr.mxu0 0.0
  %2700 = vmatpush2.msra.mxu0 0.0
  %2701 = vmatprep.subr.mxu0 0.0
  %2702 = vmatpush2.msra.mxu0 0.0
  %2703 = vmatprep.subr.mxu0 0.0
  %2704 = vmatpush2.msra.mxu0 0.0
  %2705 = vmatprep.subr.mxu0 0.0
  %2706 = vmatpush2.msra.mxu0 0.0
  %2707 = vmatprep.subr.mxu0 0.0
  %2708 = vmatpush2.msra.mxu0 0.0
  %2709 = vmatprep.subr.mxu0 0.0
  %2710 = vmatpush2.msra.mxu0 0.0
  %2711 = vmatprep.subr.mxu0 0.0
  %2712 = vmatpush2.msra.mxu0 0.0
  %2713 = vmatprep.subr.mxu0 0.0
  %2714 = vmatpush2.msra.mxu0 0.0
  %2715 = vmatprep.subr.mxu0 0.0
  %2716 = vmatpush2.msra.mxu0 0.0
  %2717 = vmatprep.subr.mxu0 0.0
  %2718 = vmatpush2.msra.mxu0 0.0
  %2719 = vmatprep.subr.mxu0 0.0
  %2720 = vmatpush2.msra.mxu0 0.0
  %2721 = vmatprep.subr.mxu0 0.0
  %2722 = vmatpush2.msra.mxu0 0.0
  %2723 = vmatprep.subr.mxu0 0.0
  %2724 = vmatpush2.msra.mxu0 0.0
  %2725 = vmatprep.mubr.f32.mxu0 0.0
  %2726 = vmatmul.mubr.f32.gmra.mxu0 %v2516
  %v2727 = vpop.f32.mrf.mxu0
  %v2728 = vadd.f32 0.0, %v2727
  %v2729 = vpop.f32.mrf.mxu0
  %v2730 = vadd.f32 0.0, %v2729
  %2731 = vmatprep.mubr.f32.mxu0 0.0
  %2732 = vmatmul.mubr.f32.gmra.mxu0 %v2519
  %v2733 = vpop.f32.mrf.mxu0
  %v2734 = vadd.f32 0.0, %v2733
  %v2735 = vpop.f32.mrf.mxu0
  %v2736 = vadd.f32 0.0, %v2735
  %2737 = vmatprep.mubr.f32.mxu0 0.0
  %2738 = vmatmul.mubr.f32.gmra.mxu0 %v2522
  %v2739 = vpop.f32.mrf.mxu0
  %v2740 = vadd.f32 0.0, %v2739
  %v2741 = vpop.f32.mrf.mxu0
  %v2742 = vadd.f32 0.0, %v2741
  %2743 = vmatprep.mubr.f32.mxu0 0.0
  %2744 = vmatmul.mubr.f32.gmra.mxu0 %v2525
  %v2745 = vpop.f32.mrf.mxu0
  %v2746 = vadd.f32 0.0, %v2745
  %v2747 = vpop.f32.mrf.mxu0
  %v2748 = vadd.f32 0.0, %v2747
  %2749 = vmatprep.mubr.f32.mxu0 0.0
  %2750 = vmatmul.mubr.f32.gmra.mxu0 %v2653
  %v2751 = vpop.f32.mrf.mxu0
  %v2752 = vadd.f32 0.0, %v2751
  %v2753 = vpop.f32.mrf.mxu0
  %v2754 = vadd.f32 0.0, %v2753
  %2755 = vdwg.mxu0
  %v2756 = vadd.f32 %v2600, %v2728
  %v2757 = vadd.f32 %v2602, %v2730
  %v2758 = vadd.f32 %v2606, %v2734
  %v2759 = vadd.f32 %v2608, %v2736
  %v2760 = vadd.f32 %v2612, %v2740
  %v2761 = vadd.f32 %v2614, %v2742
  %v2762 = vadd.f32 %v2618, %v2746
  %v2763 = vadd.f32 %v2620, %v2748
  %v2764 = vadd.f32 %v2624, %v2752
  %v2765 = vadd.f32 %v2626, %v2754
  %v2766 = vld [vmem:[#allocation2 + $0x58] sm:$0xff]
  %s2767 = scalar_lea.vmem %s3, 528
  %v2768 = vld [vmem:[%s2767] sm:$0xff]
  %v2769 = vld [vmem:[%s2767 + $0x8] sm:$0xff]
  %v2770 = vld [vmem:[%s2767 + $0x10] sm:$0xff]
  %v2771 = vld [vmem:[%s2767 + $0x18] sm:$0xff]
  %v2772 = vld [vmem:[%s2767 + $0x20] sm:$0xff]
  %v2773 = vld [vmem:[%s2767 + $0x28] sm:$0xff]
  %v2774 = vld [vmem:[%s2767 + $0x30] sm:$0xff]
  %v2775 = vld [vmem:[%s2767 + $0x38] sm:$0xff]
  %v2776 = vld [vmem:[%s2767 + $0x40] sm:$0xff]
  %v2777 = vld [vmem:[%s2767 + $0x48] sm:$0xff]
  %v2778 = vld [vmem:[%s2767 + $0x50] sm:$0xff]
  %v2779 = vld [vmem:[%s2767 + $0x58] sm:$0xff]
  %v2780 = vld [vmem:[%s2767 + $0x60] sm:$0xff]
  %v2781 = vld [vmem:[%s2767 + $0x68] sm:$0xff]
  %v2782 = vld [vmem:[%s2767 + $0x70] sm:$0xff]
  %v2783 = vld [vmem:[%s2767 + $0x78] sm:$0xff]
  %v2784 = vld [vmem:[%s2767 + $0x80] sm:$0xff]
  %v2785 = vld [vmem:[%s2767 + $0x88] sm:$0xff]
  %v2786 = vld [vmem:[%s2767 + $0x90] sm:$0xff]
  %v2787 = vld [vmem:[%s2767 + $0x98] sm:$0xff]
  %v2788 = vld [vmem:[%s2767 + $0xa0] sm:$0xf]
  %v2789 = vld [vmem:[%s2767 + $0xa8] sm:$0xf]
  %v2791 = vsel %vm1160, %v2766, 0
  %v2794 = vsel %vm2410, %v2788, 0
  %v2797 = vsel %vm2410, %v2789, 0
  %2799 = vmatprep.subr.mxu0 0.0
  %2800 = vmatpush1.msra.mxu0 0.0
  %2801 = vmatprep.subr.mxu0 0.0
  %2802 = vmatpush1.msra.mxu0 0.0
  %2803 = vmatprep.subr.mxu0 0.0
  %2804 = vmatpush1.msra.mxu0 0.0
  %2805 = vmatprep.subr.mxu0 0.0
  %2806 = vmatpush1.msra.mxu0 0.0
  %2807 = vmatprep.subr.mxu0 0.0
  %2808 = vmatpush1.msra.mxu0 0.0
  %2809 = vmatprep.subr.mxu0 %v2797
  %2810 = vmatpush1.msra.mxu0 %v2794
  %2811 = vmatprep.subr.mxu0 %v2787
  %2812 = vmatpush1.msra.mxu0 %v2786
  %2813 = vmatprep.subr.mxu0 %v2785
  %2814 = vmatpush1.msra.mxu0 %v2784
  %2815 = vmatprep.subr.mxu0 %v2783
  %2816 = vmatpush1.msra.mxu0 %v2782
  %2817 = vmatprep.subr.mxu0 %v2781
  %2818 = vmatpush1.msra.mxu0 %v2780
  %2819 = vmatprep.subr.mxu0 %v2779
  %2820 = vmatpush1.msra.mxu0 %v2778
  %2821 = vmatprep.subr.mxu0 %v2777
  %2822 = vmatpush1.msra.mxu0 %v2776
  %2823 = vmatprep.subr.mxu0 %v2775
  %2824 = vmatpush1.msra.mxu0 %v2774
  %2825 = vmatprep.subr.mxu0 %v2773
  %2826 = vmatpush1.msra.mxu0 %v2772
  %2827 = vmatprep.subr.mxu0 %v2771
  %2828 = vmatpush1.msra.mxu0 %v2770
  %2829 = vmatprep.subr.mxu0 %v2769
  %2830 = vmatpush1.msra.mxu0 %v2768
  %2831 = vmatprep.subr.mxu0 0.0
  %2832 = vmatpush2.msra.mxu0 0.0
  %2833 = vmatprep.subr.mxu0 0.0
  %2834 = vmatpush2.msra.mxu0 0.0
  %2835 = vmatprep.subr.mxu0 0.0
  %2836 = vmatpush2.msra.mxu0 0.0
  %2837 = vmatprep.subr.mxu0 0.0
  %2838 = vmatpush2.msra.mxu0 0.0
  %2839 = vmatprep.subr.mxu0 0.0
  %2840 = vmatpush2.msra.mxu0 0.0
  %2841 = vmatprep.subr.mxu0 0.0
  %2842 = vmatpush2.msra.mxu0 0.0
  %2843 = vmatprep.subr.mxu0 0.0
  %2844 = vmatpush2.msra.mxu0 0.0
  %2845 = vmatprep.subr.mxu0 0.0
  %2846 = vmatpush2.msra.mxu0 0.0
  %2847 = vmatprep.subr.mxu0 0.0
  %2848 = vmatpush2.msra.mxu0 0.0
  %2849 = vmatprep.subr.mxu0 0.0
  %2850 = vmatpush2.msra.mxu0 0.0
  %2851 = vmatprep.subr.mxu0 0.0
  %2852 = vmatpush2.msra.mxu0 0.0
  %2853 = vmatprep.subr.mxu0 0.0
  %2854 = vmatpush2.msra.mxu0 0.0
  %2855 = vmatprep.subr.mxu0 0.0
  %2856 = vmatpush2.msra.mxu0 0.0
  %2857 = vmatprep.subr.mxu0 0.0
  %2858 = vmatpush2.msra.mxu0 0.0
  %2859 = vmatprep.subr.mxu0 0.0
  %2860 = vmatpush2.msra.mxu0 0.0
  %2861 = vmatprep.subr.mxu0 0.0
  %2862 = vmatpush2.msra.mxu0 0.0
  %2863 = vmatprep.mubr.f32.mxu0 0.0
  %2864 = vmatmul.mubr.f32.gmra.mxu0 %v2399
  %v2865 = vpop.f32.mrf.mxu0
  %v2866 = vadd.f32 0.0, %v2865
  %v2867 = vpop.f32.mrf.mxu0
  %v2868 = vadd.f32 0.0, %v2867
  %2869 = vmatprep.mubr.f32.mxu0 0.0
  %2870 = vmatmul.mubr.f32.gmra.mxu0 %v2402
  %v2871 = vpop.f32.mrf.mxu0
  %v2872 = vadd.f32 0.0, %v2871
  %v2873 = vpop.f32.mrf.mxu0
  %v2874 = vadd.f32 0.0, %v2873
  %2875 = vmatprep.mubr.f32.mxu0 0.0
  %2876 = vmatmul.mubr.f32.gmra.mxu0 %v2405
  %v2877 = vpop.f32.mrf.mxu0
  %v2878 = vadd.f32 0.0, %v2877
  %v2879 = vpop.f32.mrf.mxu0
  %v2880 = vadd.f32 0.0, %v2879
  %2881 = vmatprep.mubr.f32.mxu0 0.0
  %2882 = vmatmul.mubr.f32.gmra.mxu0 %v2408
  %v2883 = vpop.f32.mrf.mxu0
  %v2884 = vadd.f32 0.0, %v2883
  %v2885 = vpop.f32.mrf.mxu0
  %v2886 = vadd.f32 0.0, %v2885
  %2887 = vmatprep.mubr.f32.mxu0 0.0
  %2888 = vmatmul.mubr.f32.gmra.mxu0 %v2791
  %v2889 = vpop.f32.mrf.mxu0
  %v2890 = vadd.f32 0.0, %v2889
  %v2891 = vpop.f32.mrf.mxu0
  %v2892 = vadd.f32 0.0, %v2891
  %2893 = vdwg.mxu0
  %v2894 = vadd.f32 %v2756, %v2866
  %v2895 = vadd.f32 %v2757, %v2868
  %v2896 = vadd.f32 %v2758, %v2872
  %v2897 = vadd.f32 %v2759, %v2874
  %v2898 = vadd.f32 %v2760, %v2878
  %v2899 = vadd.f32 %v2761, %v2880
  %v2900 = vadd.f32 %v2762, %v2884
  %v2901 = vadd.f32 %v2763, %v2886
  %v2902 = vadd.f32 %v2764, %v2890
  %v2903 = vadd.f32 %v2765, %v2892
  %v2904 = vld [vmem:[#allocation2 + $0x60] sm:$0xff]
  %s2905 = scalar_lea.vmem %s3, 704
  %v2906 = vld [vmem:[%s2905] sm:$0xff]
  %v2907 = vld [vmem:[%s2905 + $0x8] sm:$0xff]
  %v2908 = vld [vmem:[%s2905 + $0x10] sm:$0xff]
  %v2909 = vld [vmem:[%s2905 + $0x18] sm:$0xff]
  %v2910 = vld [vmem:[%s2905 + $0x20] sm:$0xff]
  %v2911 = vld [vmem:[%s2905 + $0x28] sm:$0xff]
  %v2912 = vld [vmem:[%s2905 + $0x30] sm:$0xff]
  %v2913 = vld [vmem:[%s2905 + $0x38] sm:$0xff]
  %v2914 = vld [vmem:[%s2905 + $0x40] sm:$0xff]
  %v2915 = vld [vmem:[%s2905 + $0x48] sm:$0xff]
  %v2916 = vld [vmem:[%s2905 + $0x50] sm:$0xff]
  %v2917 = vld [vmem:[%s2905 + $0x58] sm:$0xff]
  %v2918 = vld [vmem:[%s2905 + $0x60] sm:$0xff]
  %v2919 = vld [vmem:[%s2905 + $0x68] sm:$0xff]
  %v2920 = vld [vmem:[%s2905 + $0x70] sm:$0xff]
  %v2921 = vld [vmem:[%s2905 + $0x78] sm:$0xff]
  %v2922 = vld [vmem:[%s2905 + $0x80] sm:$0xff]
  %v2923 = vld [vmem:[%s2905 + $0x88] sm:$0xff]
  %v2924 = vld [vmem:[%s2905 + $0x90] sm:$0xff]
  %v2925 = vld [vmem:[%s2905 + $0x98] sm:$0xff]
  %v2926 = vld [vmem:[%s2905 + $0xa0] sm:$0xf]
  %v2927 = vld [vmem:[%s2905 + $0xa8] sm:$0xf]
  %v2929 = vsel %vm1160, %v2904, 0
  %v2932 = vsel %vm2410, %v2926, 0
  %v2935 = vsel %vm2410, %v2927, 0
  %2937 = vmatprep.subr.mxu0 0.0
  %2938 = vmatpush1.msra.mxu0 0.0
  %2939 = vmatprep.subr.mxu0 0.0
  %2940 = vmatpush1.msra.mxu0 0.0
  %2941 = vmatprep.subr.mxu0 0.0
  %2942 = vmatpush1.msra.mxu0 0.0
  %2943 = vmatprep.subr.mxu0 0.0
  %2944 = vmatpush1.msra.mxu0 0.0
  %2945 = vmatprep.subr.mxu0 0.0
  %2946 = vmatpush1.msra.mxu0 0.0
  %2947 = vmatprep.subr.mxu0 %v2935
  %2948 = vmatpush1.msra.mxu0 %v2932
  %2949 = vmatprep.subr.mxu0 %v2925
  %2950 = vmatpush1.msra.mxu0 %v2924
  %2951 = vmatprep.subr.mxu0 %v2923
  %2952 = vmatpush1.msra.mxu0 %v2922
  %2953 = vmatprep.subr.mxu0 %v2921
  %2954 = vmatpush1.msra.mxu0 %v2920
  %2955 = vmatprep.subr.mxu0 %v2919
  %2956 = vmatpush1.msra.mxu0 %v2918
  %2957 = vmatprep.subr.mxu0 %v2917
  %2958 = vmatpush1.msra.mxu0 %v2916
  %2959 = vmatprep.subr.mxu0 %v2915
  %2960 = vmatpush1.msra.mxu0 %v2914
  %2961 = vmatprep.subr.mxu0 %v2913
  %2962 = vmatpush1.msra.mxu0 %v2912
  %2963 = vmatprep.subr.mxu0 %v2911
  %2964 = vmatpush1.msra.mxu0 %v2910
  %2965 = vmatprep.subr.mxu0 %v2909
  %2966 = vmatpush1.msra.mxu0 %v2908
  %2967 = vmatprep.subr.mxu0 %v2907
  %2968 = vmatpush1.msra.mxu0 %v2906
  %2969 = vmatprep.subr.mxu0 0.0
  %2970 = vmatpush2.msra.mxu0 0.0
  %2971 = vmatprep.subr.mxu0 0.0
  %2972 = vmatpush2.msra.mxu0 0.0
  %2973 = vmatprep.subr.mxu0 0.0
  %2974 = vmatpush2.msra.mxu0 0.0
  %2975 = vmatprep.subr.mxu0 0.0
  %2976 = vmatpush2.msra.mxu0 0.0
  %2977 = vmatprep.subr.mxu0 0.0
  %2978 = vmatpush2.msra.mxu0 0.0
  %2979 = vmatprep.subr.mxu0 0.0
  %2980 = vmatpush2.msra.mxu0 0.0
  %2981 = vmatprep.subr.mxu0 0.0
  %2982 = vmatpush2.msra.mxu0 0.0
  %2983 = vmatprep.subr.mxu0 0.0
  %2984 = vmatpush2.msra.mxu0 0.0
  %2985 = vmatprep.subr.mxu0 0.0
  %2986 = vmatpush2.msra.mxu0 0.0
  %2987 = vmatprep.subr.mxu0 0.0
  %2988 = vmatpush2.msra.mxu0 0.0
  %2989 = vmatprep.subr.mxu0 0.0
  %2990 = vmatpush2.msra.mxu0 0.0
  %2991 = vmatprep.subr.mxu0 0.0
  %2992 = vmatpush2.msra.mxu0 0.0
  %2993 = vmatprep.subr.mxu0 0.0
  %2994 = vmatpush2.msra.mxu0 0.0
  %2995 = vmatprep.subr.mxu0 0.0
  %2996 = vmatpush2.msra.mxu0 0.0
  %2997 = vmatprep.subr.mxu0 0.0
  %2998 = vmatpush2.msra.mxu0 0.0
  %2999 = vmatprep.subr.mxu0 0.0
  %3000 = vmatpush2.msra.mxu0 0.0
  %3001 = vmatprep.mubr.f32.mxu0 0.0
  %3002 = vmatmul.mubr.f32.gmra.mxu0 %v2519
  %v3003 = vpop.f32.mrf.mxu0
  %v3004 = vadd.f32 0.0, %v3003
  %v3005 = vpop.f32.mrf.mxu0
  %v3006 = vadd.f32 0.0, %v3005
  %3007 = vmatprep.mubr.f32.mxu0 0.0
  %3008 = vmatmul.mubr.f32.gmra.mxu0 %v2522
  %v3009 = vpop.f32.mrf.mxu0
  %v3010 = vadd.f32 0.0, %v3009
  %v3011 = vpop.f32.mrf.mxu0
  %v3012 = vadd.f32 0.0, %v3011
  %3013 = vmatprep.mubr.f32.mxu0 0.0
  %3014 = vmatmul.mubr.f32.gmra.mxu0 %v2525
  %v3015 = vpop.f32.mrf.mxu0
  %v3016 = vadd.f32 0.0, %v3015
  %v3017 = vpop.f32.mrf.mxu0
  %v3018 = vadd.f32 0.0, %v3017
  %3019 = vmatprep.mubr.f32.mxu0 0.0
  %3020 = vmatmul.mubr.f32.gmra.mxu0 %v2653
  %v3021 = vpop.f32.mrf.mxu0
  %v3022 = vadd.f32 0.0, %v3021
  %v3023 = vpop.f32.mrf.mxu0
  %v3024 = vadd.f32 0.0, %v3023
  %3025 = vmatprep.mubr.f32.mxu0 0.0
  %3026 = vmatmul.mubr.f32.gmra.mxu0 %v2929
  %v3027 = vpop.f32.mrf.mxu0
  %v3028 = vadd.f32 0.0, %v3027
  %v3029 = vpop.f32.mrf.mxu0
  %v3030 = vadd.f32 0.0, %v3029
  %3031 = vdwg.mxu0
  %v3032 = vadd.f32 %v2894, %v3004
  %v3033 = vadd.f32 %v2895, %v3006
  %v3034 = vadd.f32 %v2896, %v3010
  %v3035 = vadd.f32 %v2897, %v3012
  %v3036 = vadd.f32 %v2898, %v3016
  %v3037 = vadd.f32 %v2899, %v3018
  %v3038 = vadd.f32 %v2900, %v3022
  %v3039 = vadd.f32 %v2901, %v3024
  %v3040 = vadd.f32 %v2902, %v3028
  %v3041 = vadd.f32 %v2903, %v3030
  %v3042 = vmax.f32 %v3032, %v3033
  %v3043 = vmax.f32 %v3034, %v3035
  %v3044 = vmax.f32 %v3036, %v3037
  %v3045 = vmax.f32 %v3038, %v3039
  %v3046 = vmax.f32 %v3040, %v3041
  %3047 = vmatprep.subr.mxu0 0.0
  %3048 = vmatpush1.msra.mxu0 0.0
  %3049 = vmatprep.subr.mxu0 0.0
  %3050 = vmatpush1.msra.mxu0 0.0
  %3051 = vmatprep.subr.mxu0 0.0
  %3052 = vmatpush1.msra.mxu0 0.0
  %3053 = vmatprep.subr.mxu0 0.0
  %3054 = vmatpush1.msra.mxu0 0.0
  %3055 = vmatprep.subr.mxu0 0.0
  %3056 = vmatpush1.msra.mxu0 0.0
  %3057 = vmatprep.subr.mxu0 %v2415
  %3058 = vmatpush1.msra.mxu0 %v2412
  %3059 = vmatprep.subr.mxu0 %v2392
  %3060 = vmatpush1.msra.mxu0 %v2391
  %3061 = vmatprep.subr.mxu0 %v2390
  %3062 = vmatpush1.msra.mxu0 %v2389
  %3063 = vmatprep.subr.mxu0 %v2388
  %3064 = vmatpush1.msra.mxu0 %v2387
  %3065 = vmatprep.subr.mxu0 %v2386
  %3066 = vmatpush1.msra.mxu0 %v2385
  %3067 = vmatprep.subr.mxu0 %v2384
  %3068 = vmatpush1.msra.mxu0 %v2383
  %3069 = vmatprep.subr.mxu0 %v2382
  %3070 = vmatpush1.msra.mxu0 %v2381
  %3071 = vmatprep.subr.mxu0 %v2380
  %3072 = vmatpush1.msra.mxu0 %v2379
  %3073 = vmatprep.subr.mxu0 %v2378
  %3074 = vmatpush1.msra.mxu0 %v2377
  %3075 = vmatprep.subr.mxu0 %v2376
  %3076 = vmatpush1.msra.mxu0 %v2375
  %3077 = vmatprep.subr.mxu0 %v2374
  %3078 = vmatpush1.msra.mxu0 %v2373
  %3079 = vmatprep.subr.mxu0 0.0
  %3080 = vmatpush2.msra.mxu0 0.0
  %3081 = vmatprep.subr.mxu0 0.0
  %3082 = vmatpush2.msra.mxu0 0.0
  %3083 = vmatprep.subr.mxu0 0.0
  %3084 = vmatpush2.msra.mxu0 0.0
  %3085 = vmatprep.subr.mxu0 0.0
  %3086 = vmatpush2.msra.mxu0 0.0
  %3087 = vmatprep.subr.mxu0 0.0
  %3088 = vmatpush2.msra.mxu0 0.0
  %3089 = vmatprep.subr.mxu0 0.0
  %3090 = vmatpush2.msra.mxu0 0.0
  %3091 = vmatprep.subr.mxu0 0.0
  %3092 = vmatpush2.msra.mxu0 0.0
  %3093 = vmatprep.subr.mxu0 0.0
  %3094 = vmatpush2.msra.mxu0 0.0
  %3095 = vmatprep.subr.mxu0 0.0
  %3096 = vmatpush2.msra.mxu0 0.0
  %3097 = vmatprep.subr.mxu0 0.0
  %3098 = vmatpush2.msra.mxu0 0.0
  %3099 = vmatprep.subr.mxu0 0.0
  %3100 = vmatpush2.msra.mxu0 0.0
  %3101 = vmatprep.subr.mxu0 0.0
  %3102 = vmatpush2.msra.mxu0 0.0
  %3103 = vmatprep.subr.mxu0 0.0
  %3104 = vmatpush2.msra.mxu0 0.0
  %3105 = vmatprep.subr.mxu0 0.0
  %3106 = vmatpush2.msra.mxu0 0.0
  %3107 = vmatprep.subr.mxu0 0.0
  %3108 = vmatpush2.msra.mxu0 0.0
  %3109 = vmatprep.subr.mxu0 0.0
  %3110 = vmatpush2.msra.mxu0 0.0
  %3111 = vmatprep.mubr.f32.mxu0 0.0
  %3112 = vmatmul.mubr.f32.gmra.mxu0 %v2516
  %v3113 = vpop.f32.mrf.mxu0
  %v3114 = vadd.f32 0.0, %v3113
  %v3115 = vpop.f32.mrf.mxu0
  %v3116 = vadd.f32 0.0, %v3115
  %3117 = vmatprep.mubr.f32.mxu0 0.0
  %3118 = vmatmul.mubr.f32.gmra.mxu0 %v2519
  %v3119 = vpop.f32.mrf.mxu0
  %v3120 = vadd.f32 0.0, %v3119
  %v3121 = vpop.f32.mrf.mxu0
  %v3122 = vadd.f32 0.0, %v3121
  %3123 = vmatprep.mubr.f32.mxu0 0.0
  %3124 = vmatmul.mubr.f32.gmra.mxu0 %v2522
  %v3125 = vpop.f32.mrf.mxu0
  %v3126 = vadd.f32 0.0, %v3125
  %v3127 = vpop.f32.mrf.mxu0
  %v3128 = vadd.f32 0.0, %v3127
  %3129 = vmatprep.mubr.f32.mxu0 0.0
  %3130 = vmatmul.mubr.f32.gmra.mxu0 %v2525
  %v3131 = vpop.f32.mrf.mxu0
  %v3132 = vadd.f32 0.0, %v3131
  %v3133 = vpop.f32.mrf.mxu0
  %v3134 = vadd.f32 0.0, %v3133
  %3135 = vmatprep.mubr.f32.mxu0 0.0
  %3136 = vmatmul.mubr.f32.gmra.mxu0 %v2653
  %v3137 = vpop.f32.mrf.mxu0
  %v3138 = vadd.f32 0.0, %v3137
  %v3139 = vpop.f32.mrf.mxu0
  %v3140 = vadd.f32 0.0, %v3139
  %3141 = vdwg.mxu0
  %3142 = vmatprep.subr.mxu0 0.0
  %3143 = vmatpush1.msra.mxu0 0.0
  %3144 = vmatprep.subr.mxu0 0.0
  %3145 = vmatpush1.msra.mxu0 0.0
  %3146 = vmatprep.subr.mxu0 0.0
  %3147 = vmatpush1.msra.mxu0 0.0
  %3148 = vmatprep.subr.mxu0 0.0
  %3149 = vmatpush1.msra.mxu0 0.0
  %3150 = vmatprep.subr.mxu0 0.0
  %3151 = vmatpush1.msra.mxu0 0.0
  %3152 = vmatprep.subr.mxu0 %v2531
  %3153 = vmatpush1.msra.mxu0 %v2528
  %3154 = vmatprep.subr.mxu0 %v2364
  %3155 = vmatpush1.msra.mxu0 %v2363
  %3156 = vmatprep.subr.mxu0 %v2362
  %3157 = vmatpush1.msra.mxu0 %v2361
  %3158 = vmatprep.subr.mxu0 %v2360
  %3159 = vmatpush1.msra.mxu0 %v2359
  %3160 = vmatprep.subr.mxu0 %v2358
  %3161 = vmatpush1.msra.mxu0 %v2357
  %3162 = vmatprep.subr.mxu0 %v2356
  %3163 = vmatpush1.msra.mxu0 %v2355
  %3164 = vmatprep.subr.mxu0 %v2354
  %3165 = vmatpush1.msra.mxu0 %v2353
  %3166 = vmatprep.subr.mxu0 %v2352
  %3167 = vmatpush1.msra.mxu0 %v2351
  %3168 = vmatprep.subr.mxu0 %v2350
  %3169 = vmatpush1.msra.mxu0 %v2349
  %3170 = vmatprep.subr.mxu0 %v2348
  %3171 = vmatpush1.msra.mxu0 %v2347
  %3172 = vmatprep.subr.mxu0 %v2346
  %3173 = vmatpush1.msra.mxu0 %v2345
  %3174 = vmatprep.subr.mxu0 0.0
  %3175 = vmatpush2.msra.mxu0 0.0
  %3176 = vmatprep.subr.mxu0 0.0
  %3177 = vmatpush2.msra.mxu0 0.0
  %3178 = vmatprep.subr.mxu0 0.0
  %3179 = vmatpush2.msra.mxu0 0.0
  %3180 = vmatprep.subr.mxu0 0.0
  %3181 = vmatpush2.msra.mxu0 0.0
  %3182 = vmatprep.subr.mxu0 0.0
  %3183 = vmatpush2.msra.mxu0 0.0
  %3184 = vmatprep.subr.mxu0 0.0
  %3185 = vmatpush2.msra.mxu0 0.0
  %3186 = vmatprep.subr.mxu0 0.0
  %3187 = vmatpush2.msra.mxu0 0.0
  %3188 = vmatprep.subr.mxu0 0.0
  %3189 = vmatpush2.msra.mxu0 0.0
  %3190 = vmatprep.subr.mxu0 0.0
  %3191 = vmatpush2.msra.mxu0 0.0
  %3192 = vmatprep.subr.mxu0 0.0
  %3193 = vmatpush2.msra.mxu0 0.0
  %3194 = vmatprep.subr.mxu0 0.0
  %3195 = vmatpush2.msra.mxu0 0.0
  %3196 = vmatprep.subr.mxu0 0.0
  %3197 = vmatpush2.msra.mxu0 0.0
  %3198 = vmatprep.subr.mxu0 0.0
  %3199 = vmatpush2.msra.mxu0 0.0
  %3200 = vmatprep.subr.mxu0 0.0
  %3201 = vmatpush2.msra.mxu0 0.0
  %3202 = vmatprep.subr.mxu0 0.0
  %3203 = vmatpush2.msra.mxu0 0.0
  %3204 = vmatprep.subr.mxu0 0.0
  %3205 = vmatpush2.msra.mxu0 0.0
  %3206 = vmatprep.mubr.f32.mxu0 0.0
  %3207 = vmatmul.mubr.f32.gmra.mxu0 %v2396
  %v3208 = vpop.f32.mrf.mxu0
  %v3209 = vadd.f32 %v3114, %v3208
  %v3210 = vpop.f32.mrf.mxu0
  %v3211 = vadd.f32 %v3116, %v3210
  %3212 = vmatprep.mubr.f32.mxu0 0.0
  %3213 = vmatmul.mubr.f32.gmra.mxu0 %v2399
  %v3214 = vpop.f32.mrf.mxu0
  %v3215 = vadd.f32 %v3120, %v3214
  %v3216 = vpop.f32.mrf.mxu0
  %v3217 = vadd.f32 %v3122, %v3216
  %3218 = vmatprep.mubr.f32.mxu0 0.0
  %3219 = vmatmul.mubr.f32.gmra.mxu0 %v2402
  %v3220 = vpop.f32.mrf.mxu0
  %v3221 = vadd.f32 %v3126, %v3220
  %v3222 = vpop.f32.mrf.mxu0
  %v3223 = vadd.f32 %v3128, %v3222
  %3224 = vmatprep.mubr.f32.mxu0 0.0
  %3225 = vmatmul.mubr.f32.gmra.mxu0 %v2405
  %v3226 = vpop.f32.mrf.mxu0
  %v3227 = vadd.f32 %v3132, %v3226
  %v3228 = vpop.f32.mrf.mxu0
  %v3229 = vadd.f32 %v3134, %v3228
  %3230 = vmatprep.mubr.f32.mxu0 0.0
  %3231 = vmatmul.mubr.f32.gmra.mxu0 %v2408
  %v3232 = vpop.f32.mrf.mxu0
  %v3233 = vadd.f32 %v3138, %v3232
  %v3234 = vpop.f32.mrf.mxu0
  %v3235 = vadd.f32 %v3140, %v3234
  %3236 = vdwg.mxu0
  %3237 = vmatprep.subr.mxu0 0.0
  %3238 = vmatpush1.msra.mxu0 0.0
  %3239 = vmatprep.subr.mxu0 0.0
  %3240 = vmatpush1.msra.mxu0 0.0
  %3241 = vmatprep.subr.mxu0 0.0
  %3242 = vmatpush1.msra.mxu0 0.0
  %3243 = vmatprep.subr.mxu0 0.0
  %3244 = vmatpush1.msra.mxu0 0.0
  %3245 = vmatprep.subr.mxu0 0.0
  %3246 = vmatpush1.msra.mxu0 0.0
  %3247 = vmatprep.subr.mxu0 %v2659
  %3248 = vmatpush1.msra.mxu0 %v2656
  %3249 = vmatprep.subr.mxu0 %v2649
  %3250 = vmatpush1.msra.mxu0 %v2648
  %3251 = vmatprep.subr.mxu0 %v2647
  %3252 = vmatpush1.msra.mxu0 %v2646
  %3253 = vmatprep.subr.mxu0 %v2645
  %3254 = vmatpush1.msra.mxu0 %v2644
  %3255 = vmatprep.subr.mxu0 %v2643
  %3256 = vmatpush1.msra.mxu0 %v2642
  %3257 = vmatprep.subr.mxu0 %v2641
  %3258 = vmatpush1.msra.mxu0 %v2640
  %3259 = vmatprep.subr.mxu0 %v2639
  %3260 = vmatpush1.msra.mxu0 %v2638
  %3261 = vmatprep.subr.mxu0 %v2637
  %3262 = vmatpush1.msra.mxu0 %v2636
  %3263 = vmatprep.subr.mxu0 %v2635
  %3264 = vmatpush1.msra.mxu0 %v2634
  %3265 = vmatprep.subr.mxu0 %v2633
  %3266 = vmatpush1.msra.mxu0 %v2632
  %3267 = vmatprep.subr.mxu0 %v2631
  %3268 = vmatpush1.msra.mxu0 %v2630
  %3269 = vmatprep.subr.mxu0 0.0
  %3270 = vmatpush2.msra.mxu0 0.0
  %3271 = vmatprep.subr.mxu0 0.0
  %3272 = vmatpush2.msra.mxu0 0.0
  %3273 = vmatprep.subr.mxu0 0.0
  %3274 = vmatpush2.msra.mxu0 0.0
  %3275 = vmatprep.subr.mxu0 0.0
  %3276 = vmatpush2.msra.mxu0 0.0
  %3277 = vmatprep.subr.mxu0 0.0
  %3278 = vmatpush2.msra.mxu0 0.0
  %3279 = vmatprep.subr.mxu0 0.0
  %3280 = vmatpush2.msra.mxu0 0.0
  %3281 = vmatprep.subr.mxu0 0.0
  %3282 = vmatpush2.msra.mxu0 0.0
  %3283 = vmatprep.subr.mxu0 0.0
  %3284 = vmatpush2.msra.mxu0 0.0
  %3285 = vmatprep.subr.mxu0 0.0
  %3286 = vmatpush2.msra.mxu0 0.0
  %3287 = vmatprep.subr.mxu0 0.0
  %3288 = vmatpush2.msra.mxu0 0.0
  %3289 = vmatprep.subr.mxu0 0.0
  %3290 = vmatpush2.msra.mxu0 0.0
  %3291 = vmatprep.subr.mxu0 0.0
  %3292 = vmatpush2.msra.mxu0 0.0
  %3293 = vmatprep.subr.mxu0 0.0
  %3294 = vmatpush2.msra.mxu0 0.0
  %3295 = vmatprep.subr.mxu0 0.0
  %3296 = vmatpush2.msra.mxu0 0.0
  %3297 = vmatprep.subr.mxu0 0.0
  %3298 = vmatpush2.msra.mxu0 0.0
  %3299 = vmatprep.subr.mxu0 0.0
  %3300 = vmatpush2.msra.mxu0 0.0
  %3301 = vmatprep.mubr.f32.mxu0 0.0
  %3302 = vmatmul.mubr.f32.gmra.mxu0 %v2399
  %v3303 = vpop.f32.mrf.mxu0
  %v3304 = vadd.f32 0.0, %v3303
  %v3305 = vpop.f32.mrf.mxu0
  %v3306 = vadd.f32 0.0, %v3305
  %3307 = vmatprep.mubr.f32.mxu0 0.0
  %3308 = vmatmul.mubr.f32.gmra.mxu0 %v2402
  %v3309 = vpop.f32.mrf.mxu0
  %v3310 = vadd.f32 0.0, %v3309
  %v3311 = vpop.f32.mrf.mxu0
  %v3312 = vadd.f32 0.0, %v3311
  %3313 = vmatprep.mubr.f32.mxu0 0.0
  %3314 = vmatmul.mubr.f32.gmra.mxu0 %v2405
  %v3315 = vpop.f32.mrf.mxu0
  %v3316 = vadd.f32 0.0, %v3315
  %v3317 = vpop.f32.mrf.mxu0
  %v3318 = vadd.f32 0.0, %v3317
  %3319 = vmatprep.mubr.f32.mxu0 0.0
  %3320 = vmatmul.mubr.f32.gmra.mxu0 %v2408
  %v3321 = vpop.f32.mrf.mxu0
  %v3322 = vadd.f32 0.0, %v3321
  %v3323 = vpop.f32.mrf.mxu0
  %v3324 = vadd.f32 0.0, %v3323
  %3325 = vmatprep.mubr.f32.mxu0 0.0
  %3326 = vmatmul.mubr.f32.gmra.mxu0 %v2791
  %v3327 = vpop.f32.mrf.mxu0
  %v3328 = vadd.f32 0.0, %v3327
  %v3329 = vpop.f32.mrf.mxu0
  %v3330 = vadd.f32 0.0, %v3329
  %3331 = vdwg.mxu0
  %v3332 = vadd.f32 %v3209, %v3304
  %v3333 = vadd.f32 %v3211, %v3306
  %v3334 = vadd.f32 %v3215, %v3310
  %v3335 = vadd.f32 %v3217, %v3312
  %v3336 = vadd.f32 %v3221, %v3316
  %v3337 = vadd.f32 %v3223, %v3318
  %v3338 = vadd.f32 %v3227, %v3322
  %v3339 = vadd.f32 %v3229, %v3324
  %v3340 = vadd.f32 %v3233, %v3328
  %v3341 = vadd.f32 %v3235, %v3330
  %3342 = vmatprep.subr.mxu0 0.0
  %3343 = vmatpush1.msra.mxu0 0.0
  %3344 = vmatprep.subr.mxu0 0.0
  %3345 = vmatpush1.msra.mxu0 0.0
  %3346 = vmatprep.subr.mxu0 0.0
  %3347 = vmatpush1.msra.mxu0 0.0
  %3348 = vmatprep.subr.mxu0 0.0
  %3349 = vmatpush1.msra.mxu0 0.0
  %3350 = vmatprep.subr.mxu0 0.0
  %3351 = vmatpush1.msra.mxu0 0.0
  %3352 = vmatprep.subr.mxu0 %v2797
  %3353 = vmatpush1.msra.mxu0 %v2794
  %3354 = vmatprep.subr.mxu0 %v2787
  %3355 = vmatpush1.msra.mxu0 %v2786
  %3356 = vmatprep.subr.mxu0 %v2785
  %3357 = vmatpush1.msra.mxu0 %v2784
  %3358 = vmatprep.subr.mxu0 %v2783
  %3359 = vmatpush1.msra.mxu0 %v2782
  %3360 = vmatprep.subr.mxu0 %v2781
  %3361 = vmatpush1.msra.mxu0 %v2780
  %3362 = vmatprep.subr.mxu0 %v2779
  %3363 = vmatpush1.msra.mxu0 %v2778
  %3364 = vmatprep.subr.mxu0 %v2777
  %3365 = vmatpush1.msra.mxu0 %v2776
  %3366 = vmatprep.subr.mxu0 %v2775
  %3367 = vmatpush1.msra.mxu0 %v2774
  %3368 = vmatprep.subr.mxu0 %v2773
  %3369 = vmatpush1.msra.mxu0 %v2772
  %3370 = vmatprep.subr.mxu0 %v2771
  %3371 = vmatpush1.msra.mxu0 %v2770
  %3372 = vmatprep.subr.mxu0 %v2769
  %3373 = vmatpush1.msra.mxu0 %v2768
  %3374 = vmatprep.subr.mxu0 0.0
  %3375 = vmatpush2.msra.mxu0 0.0
  %3376 = vmatprep.subr.mxu0 0.0
  %3377 = vmatpush2.msra.mxu0 0.0
  %3378 = vmatprep.subr.mxu0 0.0
  %3379 = vmatpush2.msra.mxu0 0.0
  %3380 = vmatprep.subr.mxu0 0.0
  %3381 = vmatpush2.msra.mxu0 0.0
  %3382 = vmatprep.subr.mxu0 0.0
  %3383 = vmatpush2.msra.mxu0 0.0
  %3384 = vmatprep.subr.mxu0 0.0
  %3385 = vmatpush2.msra.mxu0 0.0
  %3386 = vmatprep.subr.mxu0 0.0
  %3387 = vmatpush2.msra.mxu0 0.0
  %3388 = vmatprep.subr.mxu0 0.0
  %3389 = vmatpush2.msra.mxu0 0.0
  %3390 = vmatprep.subr.mxu0 0.0
  %3391 = vmatpush2.msra.mxu0 0.0
  %3392 = vmatprep.subr.mxu0 0.0
  %3393 = vmatpush2.msra.mxu0 0.0
  %3394 = vmatprep.subr.mxu0 0.0
  %3395 = vmatpush2.msra.mxu0 0.0
  %3396 = vmatprep.subr.mxu0 0.0
  %3397 = vmatpush2.msra.mxu0 0.0
  %3398 = vmatprep.subr.mxu0 0.0
  %3399 = vmatpush2.msra.mxu0 0.0
  %3400 = vmatprep.subr.mxu0 0.0
  %3401 = vmatpush2.msra.mxu0 0.0
  %3402 = vmatprep.subr.mxu0 0.0
  %3403 = vmatpush2.msra.mxu0 0.0
  %3404 = vmatprep.subr.mxu0 0.0
  %3405 = vmatpush2.msra.mxu0 0.0
  %3406 = vmatprep.mubr.f32.mxu0 0.0
  %3407 = vmatmul.mubr.f32.gmra.mxu0 %v2519
  %v3408 = vpop.f32.mrf.mxu0
  %v3409 = vadd.f32 0.0, %v3408
  %v3410 = vpop.f32.mrf.mxu0
  %v3411 = vadd.f32 0.0, %v3410
  %3412 = vmatprep.mubr.f32.mxu0 0.0
  %3413 = vmatmul.mubr.f32.gmra.mxu0 %v2522
  %v3414 = vpop.f32.mrf.mxu0
  %v3415 = vadd.f32 0.0, %v3414
  %v3416 = vpop.f32.mrf.mxu0
  %v3417 = vadd.f32 0.0, %v3416
  %3418 = vmatprep.mubr.f32.mxu0 0.0
  %3419 = vmatmul.mubr.f32.gmra.mxu0 %v2525
  %v3420 = vpop.f32.mrf.mxu0
  %v3421 = vadd.f32 0.0, %v3420
  %v3422 = vpop.f32.mrf.mxu0
  %v3423 = vadd.f32 0.0, %v3422
  %3424 = vmatprep.mubr.f32.mxu0 0.0
  %3425 = vmatmul.mubr.f32.gmra.mxu0 %v2653
  %v3426 = vpop.f32.mrf.mxu0
  %v3427 = vadd.f32 0.0, %v3426
  %v3428 = vpop.f32.mrf.mxu0
  %v3429 = vadd.f32 0.0, %v3428
  %3430 = vmatprep.mubr.f32.mxu0 0.0
  %3431 = vmatmul.mubr.f32.gmra.mxu0 %v2929
  %v3432 = vpop.f32.mrf.mxu0
  %v3433 = vadd.f32 0.0, %v3432
  %v3434 = vpop.f32.mrf.mxu0
  %v3435 = vadd.f32 0.0, %v3434
  %3436 = vdwg.mxu0
  %v3437 = vadd.f32 %v3332, %v3409
  %v3438 = vadd.f32 %v3333, %v3411
  %v3439 = vadd.f32 %v3334, %v3415
  %v3440 = vadd.f32 %v3335, %v3417
  %v3441 = vadd.f32 %v3336, %v3421
  %v3442 = vadd.f32 %v3337, %v3423
  %v3443 = vadd.f32 %v3338, %v3427
  %v3444 = vadd.f32 %v3339, %v3429
  %v3445 = vadd.f32 %v3340, %v3433
  %v3446 = vadd.f32 %v3341, %v3435
  %v3447 = vld [vmem:[#allocation2 + $0x68] sm:$0xff]
  %v3449 = vsel %vm1160, %v3447, 0
  %3451 = vmatprep.subr.mxu0 0.0
  %3452 = vmatpush1.msra.mxu0 0.0
  %3453 = vmatprep.subr.mxu0 0.0
  %3454 = vmatpush1.msra.mxu0 0.0
  %3455 = vmatprep.subr.mxu0 0.0
  %3456 = vmatpush1.msra.mxu0 0.0
  %3457 = vmatprep.subr.mxu0 0.0
  %3458 = vmatpush1.msra.mxu0 0.0
  %3459 = vmatprep.subr.mxu0 0.0
  %3460 = vmatpush1.msra.mxu0 0.0
  %3461 = vmatprep.subr.mxu0 %v2935
  %3462 = vmatpush1.msra.mxu0 %v2932
  %3463 = vmatprep.subr.mxu0 %v2925
  %3464 = vmatpush1.msra.mxu0 %v2924
  %3465 = vmatprep.subr.mxu0 %v2923
  %3466 = vmatpush1.msra.mxu0 %v2922
  %3467 = vmatprep.subr.mxu0 %v2921
  %3468 = vmatpush1.msra.mxu0 %v2920
  %3469 = vmatprep.subr.mxu0 %v2919
  %3470 = vmatpush1.msra.mxu0 %v2918
  %3471 = vmatprep.subr.mxu0 %v2917
  %3472 = vmatpush1.msra.mxu0 %v2916
  %3473 = vmatprep.subr.mxu0 %v2915
  %3474 = vmatpush1.msra.mxu0 %v2914
  %3475 = vmatprep.subr.mxu0 %v2913
  %3476 = vmatpush1.msra.mxu0 %v2912
  %3477 = vmatprep.subr.mxu0 %v2911
  %3478 = vmatpush1.msra.mxu0 %v2910
  %3479 = vmatprep.subr.mxu0 %v2909
  %3480 = vmatpush1.msra.mxu0 %v2908
  %3481 = vmatprep.subr.mxu0 %v2907
  %3482 = vmatpush1.msra.mxu0 %v2906
  %3483 = vmatprep.subr.mxu0 0.0
  %3484 = vmatpush2.msra.mxu0 0.0
  %3485 = vmatprep.subr.mxu0 0.0
  %3486 = vmatpush2.msra.mxu0 0.0
  %3487 = vmatprep.subr.mxu0 0.0
  %3488 = vmatpush2.msra.mxu0 0.0
  %3489 = vmatprep.subr.mxu0 0.0
  %3490 = vmatpush2.msra.mxu0 0.0
  %3491 = vmatprep.subr.mxu0 0.0
  %3492 = vmatpush2.msra.mxu0 0.0
  %3493 = vmatprep.subr.mxu0 0.0
  %3494 = vmatpush2.msra.mxu0 0.0
  %3495 = vmatprep.subr.mxu0 0.0
  %3496 = vmatpush2.msra.mxu0 0.0
  %3497 = vmatprep.subr.mxu0 0.0
  %3498 = vmatpush2.msra.mxu0 0.0
  %3499 = vmatprep.subr.mxu0 0.0
  %3500 = vmatpush2.msra.mxu0 0.0
  %3501 = vmatprep.subr.mxu0 0.0
  %3502 = vmatpush2.msra.mxu0 0.0
  %3503 = vmatprep.subr.mxu0 0.0
  %3504 = vmatpush2.msra.mxu0 0.0
  %3505 = vmatprep.subr.mxu0 0.0
  %3506 = vmatpush2.msra.mxu0 0.0
  %3507 = vmatprep.subr.mxu0 0.0
  %3508 = vmatpush2.msra.mxu0 0.0
  %3509 = vmatprep.subr.mxu0 0.0
  %3510 = vmatpush2.msra.mxu0 0.0
  %3511 = vmatprep.subr.mxu0 0.0
  %3512 = vmatpush2.msra.mxu0 0.0
  %3513 = vmatprep.subr.mxu0 0.0
  %3514 = vmatpush2.msra.mxu0 0.0
  %3515 = vmatprep.mubr.f32.mxu0 0.0
  %3516 = vmatmul.mubr.f32.gmra.mxu0 %v2402
  %v3517 = vpop.f32.mrf.mxu0
  %v3518 = vadd.f32 0.0, %v3517
  %v3519 = vpop.f32.mrf.mxu0
  %v3520 = vadd.f32 0.0, %v3519
  %3521 = vmatprep.mubr.f32.mxu0 0.0
  %3522 = vmatmul.mubr.f32.gmra.mxu0 %v2405
  %v3523 = vpop.f32.mrf.mxu0
  %v3524 = vadd.f32 0.0, %v3523
  %v3525 = vpop.f32.mrf.mxu0
  %v3526 = vadd.f32 0.0, %v3525
  %3527 = vmatprep.mubr.f32.mxu0 0.0
  %3528 = vmatmul.mubr.f32.gmra.mxu0 %v2408
  %v3529 = vpop.f32.mrf.mxu0
  %v3530 = vadd.f32 0.0, %v3529
  %v3531 = vpop.f32.mrf.mxu0
  %v3532 = vadd.f32 0.0, %v3531
  %3533 = vmatprep.mubr.f32.mxu0 0.0
  %3534 = vmatmul.mubr.f32.gmra.mxu0 %v2791
  %v3535 = vpop.f32.mrf.mxu0
  %v3536 = vadd.f32 0.0, %v3535
  %v3537 = vpop.f32.mrf.mxu0
  %v3538 = vadd.f32 0.0, %v3537
  %3539 = vmatprep.mubr.f32.mxu0 0.0
  %3540 = vmatmul.mubr.f32.gmra.mxu0 %v3449
  %v3541 = vpop.f32.mrf.mxu0
  %v3542 = vadd.f32 0.0, %v3541
  %v3543 = vpop.f32.mrf.mxu0
  %v3544 = vadd.f32 0.0, %v3543
  %3545 = vdwg.mxu0
  %v3546 = vadd.f32 %v3437, %v3518
  %v3547 = vadd.f32 %v3438, %v3520
  %v3548 = vadd.f32 %v3439, %v3524
  %v3549 = vadd.f32 %v3440, %v3526
  %v3550 = vadd.f32 %v3441, %v3530
  %v3551 = vadd.f32 %v3442, %v3532
  %v3552 = vadd.f32 %v3443, %v3536
  %v3553 = vadd.f32 %v3444, %v3538
  %v3554 = vadd.f32 %v3445, %v3542
  %v3555 = vadd.f32 %v3446, %v3544
  %v3556 = vmax.f32 %v3546, %v3547
  %v3557 = vmax.f32 %v3548, %v3549
  %v3558 = vmax.f32 %v3550, %v3551
  %v3559 = vmax.f32 %v3552, %v3553
  %v3560 = vmax.f32 %v3554, %v3555
  %v3561 = vmax.f32 %v3042, %v3556
  %v3562 = vmax.f32 %v3043, %v3557
  %v3563 = vmax.f32 %v3044, %v3558
  %v3564 = vmax.f32 %v3045, %v3559
  %v3565 = vmax.f32 %v3046, %v3560
  %v3566 = vld [vmem:[%s4] sm:$0x1]
  %v3568 = vlaneseq
  %v3569 = vshrl.u32 %v3568, 7
  %v3570 = vsub.s32 0, %v3569
  %v3571 = vrot.slane %v3566, %v3570
  %v3573 = vadd.f32 %v3561, %v3571
  %v3574 = vadd.f32 %v3562, %v3571
  %v3575 = vadd.f32 %v3563, %v3571
  %v3576 = vadd.f32 %v3564, %v3571
  %v3577 = vadd.f32 %v3565, %v3571
  %v3578 = vmax.f32 %v3573, 0.0
  %v3579 = vmax.f32 %v3574, 0.0
  %v3580 = vmax.f32 %v3575, 0.0
  %v3581 = vmax.f32 %v3576, 0.0
  %v3582 = vmax.f32 %v3577, 0.0
  %v3583 = vld [vmem:[%s5] sm:$0xff]
  %v3584 = vld [vmem:[%s5 + $0x8] sm:$0xff]
  %v3585 = vld [vmem:[%s5 + $0x10] sm:$0xff]
  %v3586 = vld [vmem:[%s5 + $0x18] sm:$0xff]
  %v3587 = vld [vmem:[%s5 + $0x20] sm:$0xff]
  %v3588 = vld [vmem:[%s5 + $0x28] sm:$0xff]
  %v3589 = vld [vmem:[%s5 + $0x30] sm:$0xff]
  %v3590 = vld [vmem:[%s5 + $0x38] sm:$0xff]
  %v3591 = vld [vmem:[%s5 + $0x40] sm:$0xff]
  %v3592 = vld [vmem:[%s5 + $0x48] sm:$0xff]
  %s3593 = scalar_lea.vmem %s5, 80
  %v3594 = vld [vmem:[%s3593] sm:$0xff]
  %v3595 = vld [vmem:[%s3593 + $0x8] sm:$0xff]
  %v3596 = vld [vmem:[%s3593 + $0x10] sm:$0xff]
  %v3597 = vld [vmem:[%s3593 + $0x18] sm:$0xff]
  %v3598 = vld [vmem:[%s3593 + $0x20] sm:$0xff]
  %v3599 = vld [vmem:[%s3593 + $0x28] sm:$0xff]
  %v3600 = vld [vmem:[%s3593 + $0x30] sm:$0xff]
  %v3601 = vld [vmem:[%s3593 + $0x38] sm:$0xff]
  %v3602 = vld [vmem:[%s3593 + $0x40] sm:$0xff]
  %v3603 = vld [vmem:[%s3593 + $0x48] sm:$0xff]
  %vm3604 = vcmask 654336
  %v3606 = vsel %vm3604, %v3579, 0
  %3608 = vmatprep.subr.mxu0 0.0
  %3609 = vmatpush1.msra.mxu0 0.0
  %3610 = vmatprep.subr.mxu0 0.0
  %3611 = vmatpush1.msra.mxu0 0.0
  %3612 = vmatprep.subr.mxu0 0.0
  %3613 = vmatpush1.msra.mxu0 0.0
  %3614 = vmatprep.subr.mxu0 0.0
  %3615 = vmatpush1.msra.mxu0 0.0
  %3616 = vmatprep.subr.mxu0 0.0
  %3617 = vmatpush1.msra.mxu0 0.0
  %3618 = vmatprep.subr.mxu0 0.0
  %3619 = vmatpush1.msra.mxu0 0.0
  %3620 = vmatprep.subr.mxu0 0.0
  %3621 = vmatpush1.msra.mxu0 %v3603
  %3622 = vmatprep.subr.mxu0 0.0
  %3623 = vmatpush1.msra.mxu0 %v3602
  %3624 = vmatprep.subr.mxu0 0.0
  %3625 = vmatpush1.msra.mxu0 %v3601
  %3626 = vmatprep.subr.mxu0 0.0
  %3627 = vmatpush1.msra.mxu0 %v3600
  %3628 = vmatprep.subr.mxu0 0.0
  %3629 = vmatpush1.msra.mxu0 %v3599
  %3630 = vmatprep.subr.mxu0 0.0
  %3631 = vmatpush1.msra.mxu0 %v3598
  %3632 = vmatprep.subr.mxu0 0.0
  %3633 = vmatpush1.msra.mxu0 %v3597
  %3634 = vmatprep.subr.mxu0 0.0
  %3635 = vmatpush1.msra.mxu0 %v3596
  %3636 = vmatprep.subr.mxu0 0.0
  %3637 = vmatpush1.msra.mxu0 %v3595
  %3638 = vmatprep.subr.mxu0 0.0
  %3639 = vmatpush1.msra.mxu0 %v3594
  %3640 = vmatprep.subr.mxu0 0.0
  %3641 = vmatpush2.msra.mxu0 0.0
  %3642 = vmatprep.subr.mxu0 0.0
  %3643 = vmatpush2.msra.mxu0 0.0
  %3644 = vmatprep.subr.mxu0 0.0
  %3645 = vmatpush2.msra.mxu0 0.0
  %3646 = vmatprep.subr.mxu0 0.0
  %3647 = vmatpush2.msra.mxu0 0.0
  %3648 = vmatprep.subr.mxu0 0.0
  %3649 = vmatpush2.msra.mxu0 0.0
  %3650 = vmatprep.subr.mxu0 0.0
  %3651 = vmatpush2.msra.mxu0 0.0
  %3652 = vmatprep.subr.mxu0 0.0
  %3653 = vmatpush2.msra.mxu0 0.0
  %3654 = vmatprep.subr.mxu0 0.0
  %3655 = vmatpush2.msra.mxu0 0.0
  %3656 = vmatprep.subr.mxu0 0.0
  %3657 = vmatpush2.msra.mxu0 0.0
  %3658 = vmatprep.subr.mxu0 0.0
  %3659 = vmatpush2.msra.mxu0 0.0
  %3660 = vmatprep.subr.mxu0 0.0
  %3661 = vmatpush2.msra.mxu0 0.0
  %3662 = vmatprep.subr.mxu0 0.0
  %3663 = vmatpush2.msra.mxu0 0.0
  %3664 = vmatprep.subr.mxu0 0.0
  %3665 = vmatpush2.msra.mxu0 0.0
  %3666 = vmatprep.subr.mxu0 0.0
  %3667 = vmatpush2.msra.mxu0 0.0
  %3668 = vmatprep.subr.mxu0 0.0
  %3669 = vmatpush2.msra.mxu0 0.0
  %3670 = vmatprep.subr.mxu0 0.0
  %3671 = vmatpush2.msra.mxu0 0.0
  %3672 = vmatprep.mubr.f32.mxu0 0.0
  %3673 = vmatmul.mubr.f32.gmra.mxu0 %v3606
  %v3674 = vpop.f32.mrf.mxu0
  %v3675 = vadd.f32 0.0, %v3674
  %v3676 = vpop.f32.mrf.mxu0
  %3677 = vdwg.mxu0
  %v3679 = vsel %vm3604, %v3578, 0
  %3681 = vmatprep.subr.mxu0 0.0
  %3682 = vmatpush1.msra.mxu0 0.0
  %3683 = vmatprep.subr.mxu0 0.0
  %3684 = vmatpush1.msra.mxu0 0.0
  %3685 = vmatprep.subr.mxu0 0.0
  %3686 = vmatpush1.msra.mxu0 0.0
  %3687 = vmatprep.subr.mxu0 0.0
  %3688 = vmatpush1.msra.mxu0 0.0
  %3689 = vmatprep.subr.mxu0 0.0
  %3690 = vmatpush1.msra.mxu0 0.0
  %3691 = vmatprep.subr.mxu0 0.0
  %3692 = vmatpush1.msra.mxu0 0.0
  %3693 = vmatprep.subr.mxu0 0.0
  %3694 = vmatpush1.msra.mxu0 %v3592
  %3695 = vmatprep.subr.mxu0 0.0
  %3696 = vmatpush1.msra.mxu0 %v3591
  %3697 = vmatprep.subr.mxu0 0.0
  %3698 = vmatpush1.msra.mxu0 %v3590
  %3699 = vmatprep.subr.mxu0 0.0
  %3700 = vmatpush1.msra.mxu0 %v3589
  %3701 = vmatprep.subr.mxu0 0.0
  %3702 = vmatpush1.msra.mxu0 %v3588
  %3703 = vmatprep.subr.mxu0 0.0
  %3704 = vmatpush1.msra.mxu0 %v3587
  %3705 = vmatprep.subr.mxu0 0.0
  %3706 = vmatpush1.msra.mxu0 %v3586
  %3707 = vmatprep.subr.mxu0 0.0
  %3708 = vmatpush1.msra.mxu0 %v3585
  %3709 = vmatprep.subr.mxu0 0.0
  %3710 = vmatpush1.msra.mxu0 %v3584
  %3711 = vmatprep.subr.mxu0 0.0
  %3712 = vmatpush1.msra.mxu0 %v3583
  %3713 = vmatprep.subr.mxu0 0.0
  %3714 = vmatpush2.msra.mxu0 0.0
  %3715 = vmatprep.subr.mxu0 0.0
  %3716 = vmatpush2.msra.mxu0 0.0
  %3717 = vmatprep.subr.mxu0 0.0
  %3718 = vmatpush2.msra.mxu0 0.0
  %3719 = vmatprep.subr.mxu0 0.0
  %3720 = vmatpush2.msra.mxu0 0.0
  %3721 = vmatprep.subr.mxu0 0.0
  %3722 = vmatpush2.msra.mxu0 0.0
  %3723 = vmatprep.subr.mxu0 0.0
  %3724 = vmatpush2.msra.mxu0 0.0
  %3725 = vmatprep.subr.mxu0 0.0
  %3726 = vmatpush2.msra.mxu0 0.0
  %3727 = vmatprep.subr.mxu0 0.0
  %3728 = vmatpush2.msra.mxu0 0.0
  %3729 = vmatprep.subr.mxu0 0.0
  %3730 = vmatpush2.msra.mxu0 0.0
  %3731 = vmatprep.subr.mxu0 0.0
  %3732 = vmatpush2.msra.mxu0 0.0
  %3733 = vmatprep.subr.mxu0 0.0
  %3734 = vmatpush2.msra.mxu0 0.0
  %3735 = vmatprep.subr.mxu0 0.0
  %3736 = vmatpush2.msra.mxu0 0.0
  %3737 = vmatprep.subr.mxu0 0.0
  %3738 = vmatpush2.msra.mxu0 0.0
  %3739 = vmatprep.subr.mxu0 0.0
  %3740 = vmatpush2.msra.mxu0 0.0
  %3741 = vmatprep.subr.mxu0 0.0
  %3742 = vmatpush2.msra.mxu0 0.0
  %3743 = vmatprep.subr.mxu0 0.0
  %3744 = vmatpush2.msra.mxu0 0.0
  %3745 = vmatprep.mubr.f32.mxu0 0.0
  %3746 = vmatmul.mubr.f32.gmra.mxu0 %v3679
  %v3747 = vpop.f32.mrf.mxu0
  %v3748 = vadd.f32 %v3675, %v3747
  %v3749 = vpop.f32.mrf.mxu0
  %3750 = vdwg.mxu0
  %s3751 = scalar_lea.vmem %s5, 160
  %v3752 = vld [vmem:[%s3751] sm:$0xff]
  %v3753 = vld [vmem:[%s3751 + $0x8] sm:$0xff]
  %v3754 = vld [vmem:[%s3751 + $0x10] sm:$0xff]
  %v3755 = vld [vmem:[%s3751 + $0x18] sm:$0xff]
  %v3756 = vld [vmem:[%s3751 + $0x20] sm:$0xff]
  %v3757 = vld [vmem:[%s3751 + $0x28] sm:$0xff]
  %v3758 = vld [vmem:[%s3751 + $0x30] sm:$0xff]
  %v3759 = vld [vmem:[%s3751 + $0x38] sm:$0xff]
  %v3760 = vld [vmem:[%s3751 + $0x40] sm:$0xff]
  %v3761 = vld [vmem:[%s3751 + $0x48] sm:$0xff]
  %v3763 = vsel %vm3604, %v3580, 0
  %3765 = vmatprep.subr.mxu0 0.0
  %3766 = vmatpush1.msra.mxu0 0.0
  %3767 = vmatprep.subr.mxu0 0.0
  %3768 = vmatpush1.msra.mxu0 0.0
  %3769 = vmatprep.subr.mxu0 0.0
  %3770 = vmatpush1.msra.mxu0 0.0
  %3771 = vmatprep.subr.mxu0 0.0
  %3772 = vmatpush1.msra.mxu0 0.0
  %3773 = vmatprep.subr.mxu0 0.0
  %3774 = vmatpush1.msra.mxu0 0.0
  %3775 = vmatprep.subr.mxu0 0.0
  %3776 = vmatpush1.msra.mxu0 0.0
  %3777 = vmatprep.subr.mxu0 0.0
  %3778 = vmatpush1.msra.mxu0 %v3761
  %3779 = vmatprep.subr.mxu0 0.0
  %3780 = vmatpush1.msra.mxu0 %v3760
  %3781 = vmatprep.subr.mxu0 0.0
  %3782 = vmatpush1.msra.mxu0 %v3759
  %3783 = vmatprep.subr.mxu0 0.0
  %3784 = vmatpush1.msra.mxu0 %v3758
  %3785 = vmatprep.subr.mxu0 0.0
  %3786 = vmatpush1.msra.mxu0 %v3757
  %3787 = vmatprep.subr.mxu0 0.0
  %3788 = vmatpush1.msra.mxu0 %v3756
  %3789 = vmatprep.subr.mxu0 0.0
  %3790 = vmatpush1.msra.mxu0 %v3755
  %3791 = vmatprep.subr.mxu0 0.0
  %3792 = vmatpush1.msra.mxu0 %v3754
  %3793 = vmatprep.subr.mxu0 0.0
  %3794 = vmatpush1.msra.mxu0 %v3753
  %3795 = vmatprep.subr.mxu0 0.0
  %3796 = vmatpush1.msra.mxu0 %v3752
  %3797 = vmatprep.subr.mxu0 0.0
  %3798 = vmatpush2.msra.mxu0 0.0
  %3799 = vmatprep.subr.mxu0 0.0
  %3800 = vmatpush2.msra.mxu0 0.0
  %3801 = vmatprep.subr.mxu0 0.0
  %3802 = vmatpush2.msra.mxu0 0.0
  %3803 = vmatprep.subr.mxu0 0.0
  %3804 = vmatpush2.msra.mxu0 0.0
  %3805 = vmatprep.subr.mxu0 0.0
  %3806 = vmatpush2.msra.mxu0 0.0
  %3807 = vmatprep.subr.mxu0 0.0
  %3808 = vmatpush2.msra.mxu0 0.0
  %3809 = vmatprep.subr.mxu0 0.0
  %3810 = vmatpush2.msra.mxu0 0.0
  %3811 = vmatprep.subr.mxu0 0.0
  %3812 = vmatpush2.msra.mxu0 0.0
  %3813 = vmatprep.subr.mxu0 0.0
  %3814 = vmatpush2.msra.mxu0 0.0
  %3815 = vmatprep.subr.mxu0 0.0
  %3816 = vmatpush2.msra.mxu0 0.0
  %3817 = vmatprep.subr.mxu0 0.0
  %3818 = vmatpush2.msra.mxu0 0.0
  %3819 = vmatprep.subr.mxu0 0.0
  %3820 = vmatpush2.msra.mxu0 0.0
  %3821 = vmatprep.subr.mxu0 0.0
  %3822 = vmatpush2.msra.mxu0 0.0
  %3823 = vmatprep.subr.mxu0 0.0
  %3824 = vmatpush2.msra.mxu0 0.0
  %3825 = vmatprep.subr.mxu0 0.0
  %3826 = vmatpush2.msra.mxu0 0.0
  %3827 = vmatprep.subr.mxu0 0.0
  %3828 = vmatpush2.msra.mxu0 0.0
  %3829 = vmatprep.mubr.f32.mxu0 0.0
  %3830 = vmatmul.mubr.f32.gmra.mxu0 %v3763
  %v3831 = vpop.f32.mrf.mxu0
  %v3832 = vadd.f32 0.0, %v3831
  %v3833 = vpop.f32.mrf.mxu0
  %3834 = vdwg.mxu0
  %v3835 = vadd.f32 %v3748, %v3832
  %s3836 = scalar_lea.vmem %s5, 240
  %v3837 = vld [vmem:[%s3836] sm:$0xff]
  %v3838 = vld [vmem:[%s3836 + $0x8] sm:$0xff]
  %v3839 = vld [vmem:[%s3836 + $0x10] sm:$0xff]
  %v3840 = vld [vmem:[%s3836 + $0x18] sm:$0xff]
  %v3841 = vld [vmem:[%s3836 + $0x20] sm:$0xff]
  %v3842 = vld [vmem:[%s3836 + $0x28] sm:$0xff]
  %v3843 = vld [vmem:[%s3836 + $0x30] sm:$0xff]
  %v3844 = vld [vmem:[%s3836 + $0x38] sm:$0xff]
  %v3845 = vld [vmem:[%s3836 + $0x40] sm:$0xff]
  %v3846 = vld [vmem:[%s3836 + $0x48] sm:$0xff]
  %v3848 = vsel %vm3604, %v3581, 0
  %3850 = vmatprep.subr.mxu0 0.0
  %3851 = vmatpush1.msra.mxu0 0.0
  %3852 = vmatprep.subr.mxu0 0.0
  %3853 = vmatpush1.msra.mxu0 0.0
  %3854 = vmatprep.subr.mxu0 0.0
  %3855 = vmatpush1.msra.mxu0 0.0
  %3856 = vmatprep.subr.mxu0 0.0
  %3857 = vmatpush1.msra.mxu0 0.0
  %3858 = vmatprep.subr.mxu0 0.0
  %3859 = vmatpush1.msra.mxu0 0.0
  %3860 = vmatprep.subr.mxu0 0.0
  %3861 = vmatpush1.msra.mxu0 0.0
  %3862 = vmatprep.subr.mxu0 0.0
  %3863 = vmatpush1.msra.mxu0 %v3846
  %3864 = vmatprep.subr.mxu0 0.0
  %3865 = vmatpush1.msra.mxu0 %v3845
  %3866 = vmatprep.subr.mxu0 0.0
  %3867 = vmatpush1.msra.mxu0 %v3844
  %3868 = vmatprep.subr.mxu0 0.0
  %3869 = vmatpush1.msra.mxu0 %v3843
  %3870 = vmatprep.subr.mxu0 0.0
  %3871 = vmatpush1.msra.mxu0 %v3842
  %3872 = vmatprep.subr.mxu0 0.0
  %3873 = vmatpush1.msra.mxu0 %v3841
  %3874 = vmatprep.subr.mxu0 0.0
  %3875 = vmatpush1.msra.mxu0 %v3840
  %3876 = vmatprep.subr.mxu0 0.0
  %3877 = vmatpush1.msra.mxu0 %v3839
  %3878 = vmatprep.subr.mxu0 0.0
  %3879 = vmatpush1.msra.mxu0 %v3838
  %3880 = vmatprep.subr.mxu0 0.0
  %3881 = vmatpush1.msra.mxu0 %v3837
  %3882 = vmatprep.subr.mxu0 0.0
  %3883 = vmatpush2.msra.mxu0 0.0
  %3884 = vmatprep.subr.mxu0 0.0
  %3885 = vmatpush2.msra.mxu0 0.0
  %3886 = vmatprep.subr.mxu0 0.0
  %3887 = vmatpush2.msra.mxu0 0.0
  %3888 = vmatprep.subr.mxu0 0.0
  %3889 = vmatpush2.msra.mxu0 0.0
  %3890 = vmatprep.subr.mxu0 0.0
  %3891 = vmatpush2.msra.mxu0 0.0
  %3892 = vmatprep.subr.mxu0 0.0
  %3893 = vmatpush2.msra.mxu0 0.0
  %3894 = vmatprep.subr.mxu0 0.0
  %3895 = vmatpush2.msra.mxu0 0.0
  %3896 = vmatprep.subr.mxu0 0.0
  %3897 = vmatpush2.msra.mxu0 0.0
  %3898 = vmatprep.subr.mxu0 0.0
  %3899 = vmatpush2.msra.mxu0 0.0
  %3900 = vmatprep.subr.mxu0 0.0
  %3901 = vmatpush2.msra.mxu0 0.0
  %3902 = vmatprep.subr.mxu0 0.0
  %3903 = vmatpush2.msra.mxu0 0.0
  %3904 = vmatprep.subr.mxu0 0.0
  %3905 = vmatpush2.msra.mxu0 0.0
  %3906 = vmatprep.subr.mxu0 0.0
  %3907 = vmatpush2.msra.mxu0 0.0
  %3908 = vmatprep.subr.mxu0 0.0
  %3909 = vmatpush2.msra.mxu0 0.0
  %3910 = vmatprep.subr.mxu0 0.0
  %3911 = vmatpush2.msra.mxu0 0.0
  %3912 = vmatprep.subr.mxu0 0.0
  %3913 = vmatpush2.msra.mxu0 0.0
  %3914 = vmatprep.mubr.f32.mxu0 0.0
  %3915 = vmatmul.mubr.f32.gmra.mxu0 %v3848
  %v3916 = vpop.f32.mrf.mxu0
  %v3917 = vadd.f32 0.0, %v3916
  %v3918 = vpop.f32.mrf.mxu0
  %3919 = vdwg.mxu0
  %v3920 = vadd.f32 %v3835, %v3917
  %s3921 = scalar_lea.vmem %s5, 320
  %v3922 = vld [vmem:[%s3921] sm:$0xff]
  %v3923 = vld [vmem:[%s3921 + $0x8] sm:$0xff]
  %v3924 = vld [vmem:[%s3921 + $0x10] sm:$0xff]
  %v3925 = vld [vmem:[%s3921 + $0x18] sm:$0xff]
  %v3926 = vld [vmem:[%s3921 + $0x20] sm:$0xff]
  %v3927 = vld [vmem:[%s3921 + $0x28] sm:$0xff]
  %v3928 = vld [vmem:[%s3921 + $0x30] sm:$0xff]
  %v3929 = vld [vmem:[%s3921 + $0x38] sm:$0xff]
  %v3930 = vld [vmem:[%s3921 + $0x40] sm:$0xff]
  %v3931 = vld [vmem:[%s3921 + $0x48] sm:$0xff]
  %v3933 = vsel %vm3604, %v3582, 0
  %3935 = vmatprep.subr.mxu0 0.0
  %3936 = vmatpush1.msra.mxu0 0.0
  %3937 = vmatprep.subr.mxu0 0.0
  %3938 = vmatpush1.msra.mxu0 0.0
  %3939 = vmatprep.subr.mxu0 0.0
  %3940 = vmatpush1.msra.mxu0 0.0
  %3941 = vmatprep.subr.mxu0 0.0
  %3942 = vmatpush1.msra.mxu0 0.0
  %3943 = vmatprep.subr.mxu0 0.0
  %3944 = vmatpush1.msra.mxu0 0.0
  %3945 = vmatprep.subr.mxu0 0.0
  %3946 = vmatpush1.msra.mxu0 0.0
  %3947 = vmatprep.subr.mxu0 0.0
  %3948 = vmatpush1.msra.mxu0 %v3931
  %3949 = vmatprep.subr.mxu0 0.0
  %3950 = vmatpush1.msra.mxu0 %v3930
  %3951 = vmatprep.subr.mxu0 0.0
  %3952 = vmatpush1.msra.mxu0 %v3929
  %3953 = vmatprep.subr.mxu0 0.0
  %3954 = vmatpush1.msra.mxu0 %v3928
  %3955 = vmatprep.subr.mxu0 0.0
  %3956 = vmatpush1.msra.mxu0 %v3927
  %3957 = vmatprep.subr.mxu0 0.0
  %3958 = vmatpush1.msra.mxu0 %v3926
  %3959 = vmatprep.subr.mxu0 0.0
  %3960 = vmatpush1.msra.mxu0 %v3925
  %3961 = vmatprep.subr.mxu0 0.0
  %3962 = vmatpush1.msra.mxu0 %v3924
  %3963 = vmatprep.subr.mxu0 0.0
  %3964 = vmatpush1.msra.mxu0 %v3923
  %3965 = vmatprep.subr.mxu0 0.0
  %3966 = vmatpush1.msra.mxu0 %v3922
  %3967 = vmatprep.subr.mxu0 0.0
  %3968 = vmatpush2.msra.mxu0 0.0
  %3969 = vmatprep.subr.mxu0 0.0
  %3970 = vmatpush2.msra.mxu0 0.0
  %3971 = vmatprep.subr.mxu0 0.0
  %3972 = vmatpush2.msra.mxu0 0.0
  %3973 = vmatprep.subr.mxu0 0.0
  %3974 = vmatpush2.msra.mxu0 0.0
  %3975 = vmatprep.subr.mxu0 0.0
  %3976 = vmatpush2.msra.mxu0 0.0
  %3977 = vmatprep.subr.mxu0 0.0
  %3978 = vmatpush2.msra.mxu0 0.0
  %3979 = vmatprep.subr.mxu0 0.0
  %3980 = vmatpush2.msra.mxu0 0.0
  %3981 = vmatprep.subr.mxu0 0.0
  %3982 = vmatpush2.msra.mxu0 0.0
  %3983 = vmatprep.subr.mxu0 0.0
  %3984 = vmatpush2.msra.mxu0 0.0
  %3985 = vmatprep.subr.mxu0 0.0
  %3986 = vmatpush2.msra.mxu0 0.0
  %3987 = vmatprep.subr.mxu0 0.0
  %3988 = vmatpush2.msra.mxu0 0.0
  %3989 = vmatprep.subr.mxu0 0.0
  %3990 = vmatpush2.msra.mxu0 0.0
  %3991 = vmatprep.subr.mxu0 0.0
  %3992 = vmatpush2.msra.mxu0 0.0
  %3993 = vmatprep.subr.mxu0 0.0
  %3994 = vmatpush2.msra.mxu0 0.0
  %3995 = vmatprep.subr.mxu0 0.0
  %3996 = vmatpush2.msra.mxu0 0.0
  %3997 = vmatprep.subr.mxu0 0.0
  %3998 = vmatpush2.msra.mxu0 0.0
  %3999 = vmatprep.mubr.f32.mxu0 0.0
  %4000 = vmatmul.mubr.f32.gmra.mxu0 %v3933
  %v4001 = vpop.f32.mrf.mxu0
  %v4002 = vadd.f32 0.0, %v4001
  %v4003 = vpop.f32.mrf.mxu0
  %4004 = vdwg.mxu0
  %v4005 = vadd.f32 %v3920, %v4002
  %v4006 = vld [vmem:[%s6] sm:$0x1]
  %v4008 = vlaneseq
  %v4009 = vshrl.u32 %v4008, 7
  %v4010 = vsub.s32 0, %v4009
  %v4011 = vrot.slane %v4006, %v4010
  %v4013 = vadd.f32 %v4005, %v4011
  %v4014 = vmax.f32 %v4013, 0.0
  %v4015 = vld [vmem:[%s7] sm:$0xff]
  %v4016 = vld [vmem:[%s7 + $0x8] sm:$0xff]
  %v4017 = vld [vmem:[%s7 + $0x10] sm:$0xff]
  %v4018 = vld [vmem:[%s7 + $0x18] sm:$0xff]
  %v4019 = vld [vmem:[%s7 + $0x20] sm:$0xff]
  %v4020 = vld [vmem:[%s7 + $0x28] sm:$0xff]
  %v4021 = vld [vmem:[%s7 + $0x30] sm:$0xff]
  %v4022 = vld [vmem:[%s7 + $0x38] sm:$0xff]
  %v4023 = vld [vmem:[%s7 + $0x40] sm:$0xff]
  %v4024 = vld [vmem:[%s7 + $0x48] sm:$0xff]
  %v4025 = vld [vmem:[%s7 + $0x50] sm:$0xff]
  %v4026 = vld [vmem:[%s7 + $0x58] sm:$0xff]
  %v4027 = vld [vmem:[%s7 + $0x60] sm:$0xff]
  %v4028 = vld [vmem:[%s7 + $0x68] sm:$0xff]
  %v4029 = vld [vmem:[%s7 + $0x70] sm:$0xff]
  %v4030 = vld [vmem:[%s8] sm:$0x1]
  %v4032 = vlaneseq
  %v4033 = vshrl.u32 %v4032, 7
  %v4034 = vsub.s32 0, %v4033
  %v4035 = vrot.slane %v4030, %v4034
  %vm4037 = vcmask 982016
  %v4039 = vsel %vm4037, %v4014, 0
  %4041 = vmatprep.subr.mxu0 0.0
  %4042 = vmatpush1.msra.mxu0 0.0
  %4043 = vmatprep.subr.mxu0 0.0
  %4044 = vmatpush1.msra.mxu0 %v4029
  %4045 = vmatprep.subr.mxu0 0.0
  %4046 = vmatpush1.msra.mxu0 %v4028
  %4047 = vmatprep.subr.mxu0 0.0
  %4048 = vmatpush1.msra.mxu0 %v4027
  %4049 = vmatprep.subr.mxu0 0.0
  %4050 = vmatpush1.msra.mxu0 %v4026
  %4051 = vmatprep.subr.mxu0 0.0
  %4052 = vmatpush1.msra.mxu0 %v4025
  %4053 = vmatprep.subr.mxu0 0.0
  %4054 = vmatpush1.msra.mxu0 %v4024
  %4055 = vmatprep.subr.mxu0 0.0
  %4056 = vmatpush1.msra.mxu0 %v4023
  %4057 = vmatprep.subr.mxu0 0.0
  %4058 = vmatpush1.msra.mxu0 %v4022
  %4059 = vmatprep.subr.mxu0 0.0
  %4060 = vmatpush1.msra.mxu0 %v4021
  %4061 = vmatprep.subr.mxu0 0.0
  %4062 = vmatpush1.msra.mxu0 %v4020
  %4063 = vmatprep.subr.mxu0 0.0
  %4064 = vmatpush1.msra.mxu0 %v4019
  %4065 = vmatprep.subr.mxu0 0.0
  %4066 = vmatpush1.msra.mxu0 %v4018
  %4067 = vmatprep.subr.mxu0 0.0
  %4068 = vmatpush1.msra.mxu0 %v4017
  %4069 = vmatprep.subr.mxu0 0.0
  %4070 = vmatpush1.msra.mxu0 %v4016
  %4071 = vmatprep.subr.mxu0 0.0
  %4072 = vmatpush1.msra.mxu0 %v4015
  %4073 = vmatprep.subr.mxu0 0.0
  %4074 = vmatpush2.msra.mxu0 0.0
  %4075 = vmatprep.subr.mxu0 0.0
  %4076 = vmatpush2.msra.mxu0 0.0
  %4077 = vmatprep.subr.mxu0 0.0
  %4078 = vmatpush2.msra.mxu0 0.0
  %4079 = vmatprep.subr.mxu0 0.0
  %4080 = vmatpush2.msra.mxu0 0.0
  %4081 = vmatprep.subr.mxu0 0.0
  %4082 = vmatpush2.msra.mxu0 0.0
  %4083 = vmatprep.subr.mxu0 0.0
  %4084 = vmatpush2.msra.mxu0 0.0
  %4085 = vmatprep.subr.mxu0 0.0
  %4086 = vmatpush2.msra.mxu0 0.0
  %4087 = vmatprep.subr.mxu0 0.0
  %4088 = vmatpush2.msra.mxu0 0.0
  %4089 = vmatprep.subr.mxu0 0.0
  %4090 = vmatpush2.msra.mxu0 0.0
  %4091 = vmatprep.subr.mxu0 0.0
  %4092 = vmatpush2.msra.mxu0 0.0
  %4093 = vmatprep.subr.mxu0 0.0
  %4094 = vmatpush2.msra.mxu0 0.0
  %4095 = vmatprep.subr.mxu0 0.0
  %4096 = vmatpush2.msra.mxu0 0.0
  %4097 = vmatprep.subr.mxu0 0.0
  %4098 = vmatpush2.msra.mxu0 0.0
  %4099 = vmatprep.subr.mxu0 0.0
  %4100 = vmatpush2.msra.mxu0 0.0
  %4101 = vmatprep.subr.mxu0 0.0
  %4102 = vmatpush2.msra.mxu0 0.0
  %4103 = vmatprep.subr.mxu0 0.0
  %4104 = vmatpush2.msra.mxu0 0.0
  %4105 = vmatprep.mubr.f32.mxu0 0.0
  %4106 = vmatmul.mubr.f32.gmra.mxu0 %v4039
  %v4107 = vpop.f32.mrf.mxu0
  %v4108 = vadd.f32 %v4035, %v4107
  %v4109 = vpop.f32.mrf.mxu0
  %4110 = vdwg.mxu0
  %v4111 = vmax.f32 %v4108, 0.0
  %v4112 = vld [vmem:[%s9] sm:$0xff]
  %v4113 = vld [vmem:[%s9 + $0x8] sm:$0xff]
  %v4114 = vld [vmem:[%s9 + $0x10] sm:$0xff]
  %v4115 = vld [vmem:[%s9 + $0x18] sm:$0xff]
  %v4116 = vld [vmem:[%s9 + $0x20] sm:$0xff]
  %v4117 = vld [vmem:[%s9 + $0x28] sm:$0xff]
  %v4118 = vld [vmem:[%s9 + $0x30] sm:$0xff]
  %v4119 = vld [vmem:[%s9 + $0x38] sm:$0xff]
  %v4120 = vld [vmem:[%s9 + $0x40] sm:$0xff]
  %v4121 = vld [vmem:[%s9 + $0x48] sm:$0xff]
  %v4122 = vld [vmem:[%s9 + $0x50] sm:$0xf]
  %v4123 = vld [vmem:[%s10] sm:$0x1]
  %v4125 = vlaneseq
  %v4126 = vshrl.u32 %v4125, 7
  %v4127 = vsub.s32 0, %v4126
  %v4128 = vrot.slane %v4123, %v4127
  %v4131 = vsel %vm1160, %v4111, 0
  %v4134 = vsel %vm2410, %v4122, 0
  %4136 = vmatprep.subr.mxu0 0.0
  %4137 = vmatpush1.msra.mxu0 0.0
  %4138 = vmatprep.subr.mxu0 0.0
  %4139 = vmatpush1.msra.mxu0 0.0
  %4140 = vmatprep.subr.mxu0 0.0
  %4141 = vmatpush1.msra.mxu0 0.0
  %4142 = vmatprep.subr.mxu0 0.0
  %4143 = vmatpush1.msra.mxu0 0.0
  %4144 = vmatprep.subr.mxu0 0.0
  %4145 = vmatpush1.msra.mxu0 0.0
  %4146 = vmatprep.subr.mxu0 0.0
  %4147 = vmatpush1.msra.mxu0 %v4134
  %4148 = vmatprep.subr.mxu0 0.0
  %4149 = vmatpush1.msra.mxu0 %v4121
  %4150 = vmatprep.subr.mxu0 0.0
  %4151 = vmatpush1.msra.mxu0 %v4120
  %4152 = vmatprep.subr.mxu0 0.0
  %4153 = vmatpush1.msra.mxu0 %v4119
  %4154 = vmatprep.subr.mxu0 0.0
  %4155 = vmatpush1.msra.mxu0 %v4118
  %4156 = vmatprep.subr.mxu0 0.0
  %4157 = vmatpush1.msra.mxu0 %v4117
  %4158 = vmatprep.subr.mxu0 0.0
  %4159 = vmatpush1.msra.mxu0 %v4116
  %4160 = vmatprep.subr.mxu0 0.0
  %4161 = vmatpush1.msra.mxu0 %v4115
  %4162 = vmatprep.subr.mxu0 0.0
  %4163 = vmatpush1.msra.mxu0 %v4114
  %4164 = vmatprep.subr.mxu0 0.0
  %4165 = vmatpush1.msra.mxu0 %v4113
  %4166 = vmatprep.subr.mxu0 0.0
  %4167 = vmatpush1.msra.mxu0 %v4112
  %4168 = vmatprep.subr.mxu0 0.0
  %4169 = vmatpush2.msra.mxu0 0.0
  %4170 = vmatprep.subr.mxu0 0.0
  %4171 = vmatpush2.msra.mxu0 0.0
  %4172 = vmatprep.subr.mxu0 0.0
  %4173 = vmatpush2.msra.mxu0 0.0
  %4174 = vmatprep.subr.mxu0 0.0
  %4175 = vmatpush2.msra.mxu0 0.0
  %4176 = vmatprep.subr.mxu0 0.0
  %4177 = vmatpush2.msra.mxu0 0.0
  %4178 = vmatprep.subr.mxu0 0.0
  %4179 = vmatpush2.msra.mxu0 0.0
  %4180 = vmatprep.subr.mxu0 0.0
  %4181 = vmatpush2.msra.mxu0 0.0
  %4182 = vmatprep.subr.mxu0 0.0
  %4183 = vmatpush2.msra.mxu0 0.0
  %4184 = vmatprep.subr.mxu0 0.0
  %4185 = vmatpush2.msra.mxu0 0.0
  %4186 = vmatprep.subr.mxu0 0.0
  %4187 = vmatpush2.msra.mxu0 0.0
  %4188 = vmatprep.subr.mxu0 0.0
  %4189 = vmatpush2.msra.mxu0 0.0
  %4190 = vmatprep.subr.mxu0 0.0
  %4191 = vmatpush2.msra.mxu0 0.0
  %4192 = vmatprep.subr.mxu0 0.0
  %4193 = vmatpush2.msra.mxu0 0.0
  %4194 = vmatprep.subr.mxu0 0.0
  %4195 = vmatpush2.msra.mxu0 0.0
  %4196 = vmatprep.subr.mxu0 0.0
  %4197 = vmatpush2.msra.mxu0 0.0
  %4198 = vmatprep.subr.mxu0 0.0
  %4199 = vmatpush2.msra.mxu0 0.0
  %4200 = vmatprep.mubr.f32.mxu0 0.0
  %4201 = vmatmul.mubr.f32.gmra.mxu0 %v4131
  %v4202 = vpop.f32.mrf.mxu0
  %v4203 = vadd.f32 %v4128, %v4202
  %v4204 = vpop.f32.mrf.mxu0
  %4205 = vdwg.mxu0
  %vm4206 = vcmask 80896
  %4207 = vst.msk [vmem:[%s11] sm:$0xff] %vm4206, %v4203
  // Predicated region
  $region46: #{net_forward.1} parent=0 // pred_check
    _
  $region47: #{net_forward.1} parent=0 // pred_check_branch
    %4209 = sbr.rel (0) target = $region49
  $region48: #{net_forward.1} parent=0 // pred_region
    _
  $region49: #{net_forward.1} parent=0 // pred_fallthru
    _
  // Predicated region
  $region50: #{net_forward.1} parent=0 // pred_check
    _
  $region51: #{net_forward.1} parent=0 // pred_check_branch
    %4211 = sbr.rel (0) target = $region53
  $region52: #{net_forward.1} parent=0 // pred_region
    _
  $region53: #{net_forward.1} parent=0 // pred_fallthru
    _

</llo_original>
